<compile_context>
chip_gen: v5e
topology: v5e:2x2
jax: 0.10.0
libtpu: 0.0.40
codegen_flags: <defaults>
</compile_context>

<pallas_src>
import jax
import jax.numpy as jnp
from jax import lax
from jax.experimental import pallas as pl
from jax.experimental.pallas import tpu as pltpu


# ----------------------------------------------------------------------------
# Model constants
# ----------------------------------------------------------------------------
HIDDEN = 64          # real LSTM hidden size (PyTorch: hidden_size=64)
GATE_PAD = 128       # each gate padded to one full 128-lane block
NUM_GATES = 4        # i, f, g, o (PyTorch order)
NUM_LAYERS = 3
OUT_DIM = 7
OUT_PAD = 128        # lane-dense head output width (sliced to 7 outside kernel)
B_BLK = 8            # batch block = 8 sublanes

CONV_OUT_CH = 8      # stand-in FlowNetC output channels
CONV_K = 3
CONV_STRIDE = 2
CONV_PAD = 1


def _round_up(n, m):
    return ((n + m - 1) // m) * m


# ----------------------------------------------------------------------------
# LSTM cell gate math (shared by kernel and pure-JAX reference)
# ----------------------------------------------------------------------------
def _lstm_cell(gates, c_prev):
    """gates: (B, 4*GATE_PAD) f32 pre-activations, c_prev: (B, GATE_PAD) f32."""
    i = jax.nn.sigmoid(gates[:, 0 * GATE_PAD:1 * GATE_PAD])
    f = jax.nn.sigmoid(gates[:, 1 * GATE_PAD:2 * GATE_PAD])
    g = jnp.tanh(gates[:, 2 * GATE_PAD:3 * GATE_PAD])
    o = jax.nn.sigmoid(gates[:, 3 * GATE_PAD:4 * GATE_PAD])
    # Padded lanes stay exactly 0: pad weight/bias columns are 0 -> g_pad == 0,
    # c_pad starts at 0 and stays 0, h_pad = o_pad * tanh(0) = 0.  (Even if they
    # drifted, the pad *rows* of every downstream weight are 0, so they cannot
    # corrupt real outputs.)
    c_new = f * c_prev + i * g
    h_new = o * jnp.tanh(c_new)
    return h_new, c_new


# ----------------------------------------------------------------------------
# Fused Pallas kernel: whole recurrence (all T steps, 3 layers) + Linear head
# ----------------------------------------------------------------------------
def lstm_head_kernel(gx_ref, w_hh0_ref,
                     w1_ref, b1_ref, w2_ref, b2_ref,
                     lin_w_ref, lin_b_ref,
                     out_ref):
    """Single invocation per batch block.

    gx_ref:   (T, B_BLK, 512) f32   precomputed x_t @ W_ih0 + b0 (hoisted)
    w_hh0:    (128, 512)      bf16  layer-0 recurrent weight
    w1, w2:   (256, 512)      bf16  fused [W_ih ; W_hh] for layers 1, 2
    b1, b2:   (1, 512)        f32
    lin_w:    (128, 128)      bf16  head weight (real 64x7 block, rest zero)
    lin_b:    (1, 128)        f32
    out_ref:  (B_BLK, 128)    f32   lane-dense head output slab
    """
    t_steps, b, _ = gx_ref.shape

    def step(t, carry):
        h0, c0, h1, c1, h2, c2 = carry
        # Layer 0: input projection was hoisted; only h-dependent dot per step.
        g0 = gx_ref[t] + jnp.dot(h0.astype(jnp.bfloat16), w_hh0_ref[...],
                                 preferred_element_type=jnp.float32)
        h0, c0 = _lstm_cell(g0, c0)
        # Layer 1: [input | recurrent] concat -> one K=256 dot (fills MXU depth).
        x1 = jnp.concatenate([h0, h1], axis=1).astype(jnp.bfloat16)
        g1 = (jnp.dot(x1, w1_ref[...], preferred_element_type=jnp.float32)
              + b1_ref[...])
        h1, c1 = _lstm_cell(g1, c1)
        # Layer 2.
        x2 = jnp.concatenate([h1, h2], axis=1).astype(jnp.bfloat16)
        g2 = (jnp.dot(x2, w2_ref[...], preferred_element_type=jnp.float32)
              + b2_ref[...])
        h2, c2 = _lstm_cell(g2, c2)
        return (h0, c0, h1, c1, h2, c2)

    z = jnp.zeros((b, GATE_PAD), jnp.float32)
    _, _, _, _, h2, _ = lax.fori_loop(0, t_steps, step,
                                      (z, z, z, z, z, z), unroll=True)

    # Linear head on the last timestep's top-layer hidden state.
    out_ref[...] = (jnp.dot(h2.astype(jnp.bfloat16), lin_w_ref[...],
                            preferred_element_type=jnp.float32)
                    + lin_b_ref[...])


def _const_spec(shape):
    """Full-array block, constant index_map -> stays VMEM-resident across grid."""
    n = len(shape)
    return pl.BlockSpec(shape, lambda blk, _n=n: (0,) * _n)


def _lstm_head(gx, params):
    """gx: (T, B_pad, 4*GATE_PAD) f32 -> (B_pad, OUT_PAD) f32."""
    t_steps, b_pad, g_cols = gx.shape
    nb = b_pad // B_BLK

    in_specs = [pl.BlockSpec((t_steps, B_BLK, g_cols), lambda blk: (0, blk, 0)),
                _const_spec(params["w_hh0"].shape),
                _const_spec(params["w1"].shape),
                _const_spec(params["b1"].shape),
                _const_spec(params["w2"].shape),
                _const_spec(params["b2"].shape),
                _const_spec(params["lin_w"].shape),
                _const_spec(params["lin_b"].shape)]

    grid_spec = pltpu.PrefetchScalarGridSpec(
        num_scalar_prefetch=0,
        grid=(nb,),                                   # independent batch blocks
        in_specs=in_specs,
        out_specs=pl.BlockSpec((B_BLK, OUT_PAD), lambda blk: (blk, 0)),
    )

    return pl.pallas_call(
        lstm_head_kernel,
        out_shape=jax.ShapeDtypeStruct((b_pad, OUT_PAD), jnp.float32),
        grid_spec=grid_spec,
        # Batch blocks are independent -> "parallel" (lets v7x split the two
        # TensorCores for realistic batch sizes; time stays inside the kernel).
        compiler_params=pltpu.CompilerParams(
            dimension_semantics=("parallel",)),
    )(gx, params["w_hh0"], params["w1"], params["b1"],
      params["w2"], params["b2"], params["lin_w"], params["lin_b"])


# ----------------------------------------------------------------------------
# Parameter init (PyTorch-style uniform +-1/sqrt(hidden)), pre-padded / packed
# ----------------------------------------------------------------------------
def _pad_gate_weight(w, rows_pad):
    """(d, 4*HIDDEN) -> (rows_pad, 4*GATE_PAD); each gate in its own 128 lanes."""
    d = w.shape[0]
    out = jnp.zeros((rows_pad, NUM_GATES * GATE_PAD), jnp.float32)
    for k in range(NUM_GATES):
        out = out.at[:d, k * GATE_PAD:k * GATE_PAD + HIDDEN].set(
            w[:, k * HIDDEN:(k + 1) * HIDDEN])
    return out


def _pad_gate_bias(b):
    out = jnp.zeros((1, NUM_GATES * GATE_PAD), jnp.float32)
    for k in range(NUM_GATES):
        out = out.at[:, k * GATE_PAD:k * GATE_PAD + HIDDEN].set(
            b[:, k * HIDDEN:(k + 1) * HIDDEN])
    return out


def init_params(key, in_ch, feat_dim):
    params = {}
    ks = list(jax.random.split(key, 2 + 4 * NUM_LAYERS + 2))

    def uni(k, shape, fan_in):
        bound = 1.0 / jnp.sqrt(jnp.float32(fan_in))
        return jax.random.uniform(k, shape, jnp.float32, -bound, bound)

    # FlowNetC stand-in conv (OIHW), consumed directly by lax.conv.
    fan = in_ch * CONV_K * CONV_K
    params["conv_w"] = uni(ks[0], (CONV_OUT_CH, in_ch, CONV_K, CONV_K), fan)
    params["conv_b"] = uni(ks[1], (CONV_OUT_CH,), fan)

    # Raw per-layer LSTM params (PyTorch layout), then pack once at init.
    raw, ki, d_in = [], 2, feat_dim
    for _ in range(NUM_LAYERS):
        w_ih = uni(ks[ki + 0], (d_in, 4 * HIDDEN), HIDDEN)
        w_hh = uni(ks[ki + 1], (HIDDEN, 4 * HIDDEN), HIDDEN)
        b_ih = uni(ks[ki + 2], (1, 4 * HIDDEN), HIDDEN)
        b_hh = uni(ks[ki + 3], (1, 4 * HIDDEN), HIDDEN)
        raw.append((w_ih, w_hh, b_ih + b_hh))
        d_in = HIDDEN
        ki += 4

    d_in_pad = _round_up(feat_dim, 128)
    # Layer 0: input projection hoisted out of the kernel -> keep W_ih0 separate
    # (bf16); only W_hh0 is on the per-step path inside the kernel.
    params["w_ih0"] = _pad_gate_weight(raw[0][0], d_in_pad).astype(jnp.bfloat16)
    params["b0"] = _pad_gate_bias(raw[0][2])
    params["w_hh0"] = _pad_gate_weight(raw[0][1], GATE_PAD).astype(jnp.bfloat16)
    # Layers 1/2: fuse [W_ih ; W_hh] -> K = 256 per-step dot.
    for l in (1, 2):
        w_ih, w_hh, b = raw[l]
        w_fused = jnp.concatenate(
            [_pad_gate_weight(w_ih, GATE_PAD), _pad_gate_weight(w_hh, GATE_PAD)],
            axis=0)                                   # (256, 512)
        params[f"w{l}"] = w_fused.astype(jnp.bfloat16)
        params[f"b{l}"] = _pad_gate_bias(b)

    # Linear head 64 -> 7, padded lane-dense.
    lin_w = uni(ks[ki + 0], (HIDDEN, OUT_DIM), HIDDEN)
    lin_b = uni(ks[ki + 1], (1, OUT_DIM), HIDDEN)
    params["lin_w"] = (jnp.zeros((GATE_PAD, OUT_PAD), jnp.float32)
                       .at[:HIDDEN, :OUT_DIM].set(lin_w)).astype(jnp.bfloat16)
    params["lin_b"] = (jnp.zeros((1, OUT_PAD), jnp.float32)
                       .at[:, :OUT_DIM].set(lin_b))
    return params


# ----------------------------------------------------------------------------
# Forward pass
# ----------------------------------------------------------------------------
def _conv_features(x, params):
    """FlowNetC stand-in: x (B,T,C,H,W) -> (T, B_pad, D_pad) per-step features."""
    b, t, c, h, w = x.shape
    c_in = x.reshape(b, t * c, h, w)                   # c_in = x.view(B, T*C, H, W)
    c_out = lax.conv_general_dilated(
        c_in, params["conv_w"],
        window_strides=(CONV_STRIDE, CONV_STRIDE),
        padding=((CONV_PAD, CONV_PAD), (CONV_PAD, CONV_PAD)),
        dimension_numbers=("NCHW", "OIHW", "NCHW"))
    c_out = c_out + params["conv_b"].reshape(1, CONV_OUT_CH, 1, 1)
    r_in = c_out.reshape(b, t, -1)                     # r_in = c_out.view(B, T, -1)
    d = r_in.shape[-1]                                 # requires (CH*OH*OW) % T == 0
    d_pad = _round_up(d, 128)
    b_pad = _round_up(b, B_BLK)
    r_in = jnp.transpose(r_in, (1, 0, 2))              # (T, B, D): contiguous step slabs
    r_in = jnp.pad(r_in, ((0, 0), (0, b_pad - b), (0, d_pad - d)))
    return r_in                                        # (T, B_pad, D_pad)


def _input_projection(r_in, params):
    """Hoisted layer-0 projection: (T, B_pad, D_pad) -> (T, B_pad, 4*GATE_PAD)."""
    t_steps, b_pad, d = r_in.shape
    x2d = r_in.reshape(t_steps * b_pad, d).astype(jnp.bfloat16)
    gx = (jnp.dot(x2d, params["w_ih0"], preferred_element_type=jnp.float32)
          + params["b0"])
    return gx.reshape(t_steps, b_pad, NUM_GATES * GATE_PAD)


@jax.jit
def vinet_forward(x, params):
    """x: (B, T, C, H, W) float32 -> (B, 7) float32."""
    b = x.shape[0]
    r_in = _conv_features(x, params)
    gx = _input_projection(r_in, params)
    out_pad = _lstm_head(gx, params)                   # (B_pad, OUT_PAD)
    return out_pad[:b, :OUT_DIM]


@jax.jit
def vinet_forward_ref(x, params):
    """Pure-JAX mirror (same packed bf16 params & math) for validation."""
    b = x.shape[0]
    r_in = _conv_features(x, params)
    gx = _input_projection(r_in, params)
    t_steps, b_pad, _ = gx.shape
    z = jnp.zeros((b_pad, GATE_PAD), jnp.float32)
    h0 = c0 = h1 = c1 = h2 = c2 = z
    for t in range(t_steps):
        g0 = gx[t] + jnp.dot(h0.astype(jnp.bfloat16), params["w_hh0"],
                             preferred_element_type=jnp.float32)
        h0, c0 = _lstm_cell(g0, c0)
        x1 = jnp.concatenate([h0, h1], axis=1).astype(jnp.bfloat16)
        g1 = (jnp.dot(x1, params["w1"], preferred_element_type=jnp.float32)
              + params["b1"])
        h1, c1 = _lstm_cell(g1, c1)
        x2 = jnp.concatenate([h1, h2], axis=1).astype(jnp.bfloat16)
        g2 = (jnp.dot(x2, params["w2"], preferred_element_type=jnp.float32)
              + params["b2"])
        h2, c2 = _lstm_cell(g2, c2)
    out = (jnp.dot(h2.astype(jnp.bfloat16), params["lin_w"],
                   preferred_element_type=jnp.float32) + params["lin_b"])
    return out[:b, :OUT_DIM]


# ----------------------------------------------------------------------------
# Demo
# ----------------------------------------------------------------------------
if __name__ == "__main__":
    key = jax.random.PRNGKey(0)
    kx, kp = jax.random.split(key)

    # Small shapes consistent with the module's (B, T, C, H, W) input.
    B, T, C, H, W = 2, 4, 3, 16, 16
    x = jax.random.normal(kx, (B, T, C, H, W), dtype=jnp.float32)

    # Derived per-timestep feature dim of the conv stand-in.
    OH = (H + 2 * CONV_PAD - CONV_K) // CONV_STRIDE + 1
    OW = (W + 2 * CONV_PAD - CONV_K) // CONV_STRIDE + 1
    assert (CONV_OUT_CH * OH * OW) % T == 0
    feat_dim = (CONV_OUT_CH * OH * OW) // T            # 8*8*8 / 4 = 128

    params = init_params(kp, in_ch=T * C, feat_dim=feat_dim)

    out = jax.block_until_ready(vinet_forward(x, params))
    assert out.shape == (B, OUT_DIM) and out.dtype == jnp.float32
    assert bool(jnp.all(jnp.isfinite(out)))

    ref = jax.block_until_ready(vinet_forward_ref(x, params))
    assert bool(jnp.allclose(out, ref, atol=2e-2, rtol=2e-2)), (out, ref)

    print("KERNEL_OK")
</pallas_src>

<mosaic_0001>
module attributes {stable_mosaic.version = 11 : i64} {
  func.func @lstm_head_kernel(%arg0: i32, %arg1: memref<4x8x512xf32, #tpu.memory_space<vmem>>, %arg2: memref<128x512xbf16, #tpu.memory_space<vmem>>, %arg3: memref<256x512xbf16, #tpu.memory_space<vmem>>, %arg4: memref<1x512xf32, #tpu.memory_space<vmem>>, %arg5: memref<256x512xbf16, #tpu.memory_space<vmem>>, %arg6: memref<1x512xf32, #tpu.memory_space<vmem>>, %arg7: memref<128x128xbf16, #tpu.memory_space<vmem>>, %arg8: memref<1x128xf32, #tpu.memory_space<vmem>>, %arg9: memref<8x128xf32, #tpu.memory_space<vmem>>) attributes {dimension_semantics = [#tpu.dimension_semantics<parallel>], iteration_bounds = array<i64: 1>, scalar_prefetch = 0 : i64, scratch_operands = 0 : i64, tpu.core_type = #tpu.core_type<tc>, window_params = [{transform_indices = @transform_0, window_bounds = array<i64: 4, 8, 512>}, {pipeline_mode = #tpu.pipeline_mode<synchronous>, transform_indices = @transform_1, window_bounds = array<i64: 128, 512>}, {pipeline_mode = #tpu.pipeline_mode<synchronous>, transform_indices = @transform_2, window_bounds = array<i64: 256, 512>}, {pipeline_mode = #tpu.pipeline_mode<synchronous>, transform_indices = @transform_3, window_bounds = array<i64: 1, 512>}, {pipeline_mode = #tpu.pipeline_mode<synchronous>, transform_indices = @transform_4, window_bounds = array<i64: 256, 512>}, {pipeline_mode = #tpu.pipeline_mode<synchronous>, transform_indices = @transform_5, window_bounds = array<i64: 1, 512>}, {pipeline_mode = #tpu.pipeline_mode<synchronous>, transform_indices = @transform_6, window_bounds = array<i64: 128, 128>}, {pipeline_mode = #tpu.pipeline_mode<synchronous>, transform_indices = @transform_7, window_bounds = array<i64: 1, 128>}, {transform_indices = @transform_8, window_bounds = array<i64: 8, 128>}]} {
    %cst = arith.constant 0.000000e+00 : f32
    %0 = vector.broadcast %cst : f32 to vector<8x128xf32>
    %c0_i32 = arith.constant 0 : i32
    %1 = arith.index_cast %c0_i32 : i32 to index
    %c0 = arith.constant 0 : index
    %c0_0 = arith.constant 0 : index
    %2 = vector.load %arg1[%1, %c0, %c0_0] : memref<4x8x512xf32, #tpu.memory_space<vmem>>, vector<1x8x512xf32>
    %3 = vector.shape_cast %2 : vector<1x8x512xf32> to vector<8x512xf32>
    %4 = arith.truncf %0 : vector<8x128xf32> to vector<8x128xbf16>
    %c0_1 = arith.constant 0 : index
    %c0_2 = arith.constant 0 : index
    %5 = vector.load %arg2[%c0_1, %c0_2] : memref<128x512xbf16, #tpu.memory_space<vmem>>, vector<128x512xbf16>
    %cst_3 = arith.constant dense<0.000000e+00> : vector<8x512xf32>
    %6 = tpu.matmul %4, %5, %cst_3 {dimension_numbers = #tpu.dot_dimension_numbers<[1], [0], [0], [1], [0, 0, 1, 1], [], []>} : vector<8x128xbf16>, vector<128x512xbf16>, vector<8x512xf32> -> vector<8x512xf32>
    %7 = arith.addf %3, %6 : vector<8x512xf32>
    %8 = vector.extract_strided_slice %7 {offsets = [0, 0], sizes = [8, 128], strides = [1, 1]} : vector<8x512xf32> to vector<8x128xf32>
    %9 = arith.negf %8 : vector<8x128xf32>
    %10 = math.exp %9 : vector<8x128xf32>
    %cst_4 = arith.constant 1.000000e+00 : f32
    %11 = vector.broadcast %cst_4 : f32 to vector<8x128xf32>
    %12 = arith.addf %11, %10 : vector<8x128xf32>
    %13 = arith.divf %11, %12 : vector<8x128xf32>
    %14 = vector.extract_strided_slice %7 {offsets = [0, 128], sizes = [8, 128], strides = [1, 1]} : vector<8x512xf32> to vector<8x128xf32>
    %15 = arith.negf %14 : vector<8x128xf32>
    %16 = math.exp %15 : vector<8x128xf32>
    %cst_5 = arith.constant 1.000000e+00 : f32
    %17 = vector.broadcast %cst_5 : f32 to vector<8x128xf32>
    %18 = arith.addf %17, %16 : vector<8x128xf32>
    %19 = arith.divf %17, %18 : vector<8x128xf32>
    %20 = vector.extract_strided_slice %7 {offsets = [0, 256], sizes = [8, 128], strides = [1, 1]} : vector<8x512xf32> to vector<8x128xf32>
    %21 = math.tanh %20 : vector<8x128xf32>
    %22 = vector.extract_strided_slice %7 {offsets = [0, 384], sizes = [8, 128], strides = [1, 1]} : vector<8x512xf32> to vector<8x128xf32>
    %23 = arith.negf %22 : vector<8x128xf32>
    %24 = math.exp %23 : vector<8x128xf32>
    %cst_6 = arith.constant 1.000000e+00 : f32
    %25 = vector.broadcast %cst_6 : f32 to vector<8x128xf32>
    %26 = arith.addf %25, %24 : vector<8x128xf32>
    %27 = arith.divf %25, %26 : vector<8x128xf32>
    %28 = arith.mulf %19, %0 : vector<8x128xf32>
    %29 = arith.mulf %13, %21 : vector<8x128xf32>
    %30 = arith.addf %28, %29 : vector<8x128xf32>
    %31 = math.tanh %30 : vector<8x128xf32>
    %32 = arith.mulf %27, %31 : vector<8x128xf32>
    %33 = tpu.concatenate %32, %0 in 1 : vector<8x128xf32>, vector<8x128xf32> -> vector<8x256xf32>
    %34 = arith.truncf %33 : vector<8x256xf32> to vector<8x256xbf16>
    %c0_7 = arith.constant 0 : index
    %c0_8 = arith.constant 0 : index
    %35 = vector.load %arg3[%c0_7, %c0_8] : memref<256x512xbf16, #tpu.memory_space<vmem>>, vector<256x512xbf16>
    %cst_9 = arith.constant dense<0.000000e+00> : vector<8x512xf32>
    %36 = tpu.matmul %34, %35, %cst_9 {dimension_numbers = #tpu.dot_dimension_numbers<[1], [0], [0], [1], [0, 0, 1, 1], [], []>} : vector<8x256xbf16>, vector<256x512xbf16>, vector<8x512xf32> -> vector<8x512xf32>
    %c0_10 = arith.constant 0 : index
    %c0_11 = arith.constant 0 : index
    %37 = vector.load %arg4[%c0_10, %c0_11] : memref<1x512xf32, #tpu.memory_space<vmem>>, vector<1x512xf32>
    %38 = vector.broadcast %37 : vector<1x512xf32> to vector<8x512xf32>
    %39 = arith.addf %36, %38 : vector<8x512xf32>
    %40 = vector.extract_strided_slice %39 {offsets = [0, 0], sizes = [8, 128], strides = [1, 1]} : vector<8x512xf32> to vector<8x128xf32>
    %41 = arith.negf %40 : vector<8x128xf32>
    %42 = math.exp %41 : vector<8x128xf32>
    %cst_12 = arith.constant 1.000000e+00 : f32
    %43 = vector.broadcast %cst_12 : f32 to vector<8x128xf32>
    %44 = arith.addf %43, %42 : vector<8x128xf32>
    %45 = arith.divf %43, %44 : vector<8x128xf32>
    %46 = vector.extract_strided_slice %39 {offsets = [0, 128], sizes = [8, 128], strides = [1, 1]} : vector<8x512xf32> to vector<8x128xf32>
    %47 = arith.negf %46 : vector<8x128xf32>
    %48 = math.exp %47 : vector<8x128xf32>
    %cst_13 = arith.constant 1.000000e+00 : f32
    %49 = vector.broadcast %cst_13 : f32 to vector<8x128xf32>
    %50 = arith.addf %49, %48 : vector<8x128xf32>
    %51 = arith.divf %49, %50 : vector<8x128xf32>
    %52 = vector.extract_strided_slice %39 {offsets = [0, 256], sizes = [8, 128], strides = [1, 1]} : vector<8x512xf32> to vector<8x128xf32>
    %53 = math.tanh %52 : vector<8x128xf32>
    %54 = vector.extract_strided_slice %39 {offsets = [0, 384], sizes = [8, 128], strides = [1, 1]} : vector<8x512xf32> to vector<8x128xf32>
    %55 = arith.negf %54 : vector<8x128xf32>
    %56 = math.exp %55 : vector<8x128xf32>
    %cst_14 = arith.constant 1.000000e+00 : f32
    %57 = vector.broadcast %cst_14 : f32 to vector<8x128xf32>
    %58 = arith.addf %57, %56 : vector<8x128xf32>
    %59 = arith.divf %57, %58 : vector<8x128xf32>
    %60 = arith.mulf %51, %0 : vector<8x128xf32>
    %61 = arith.mulf %45, %53 : vector<8x128xf32>
    %62 = arith.addf %60, %61 : vector<8x128xf32>
    %63 = math.tanh %62 : vector<8x128xf32>
    %64 = arith.mulf %59, %63 : vector<8x128xf32>
    %65 = tpu.concatenate %64, %0 in 1 : vector<8x128xf32>, vector<8x128xf32> -> vector<8x256xf32>
    %66 = arith.truncf %65 : vector<8x256xf32> to vector<8x256xbf16>
    %c0_15 = arith.constant 0 : index
    %c0_16 = arith.constant 0 : index
    %67 = vector.load %arg5[%c0_15, %c0_16] : memref<256x512xbf16, #tpu.memory_space<vmem>>, vector<256x512xbf16>
    %cst_17 = arith.constant dense<0.000000e+00> : vector<8x512xf32>
    %68 = tpu.matmul %66, %67, %cst_17 {dimension_numbers = #tpu.dot_dimension_numbers<[1], [0], [0], [1], [0, 0, 1, 1], [], []>} : vector<8x256xbf16>, vector<256x512xbf16>, vector<8x512xf32> -> vector<8x512xf32>
    %c0_18 = arith.constant 0 : index
    %c0_19 = arith.constant 0 : index
    %69 = vector.load %arg6[%c0_18, %c0_19] : memref<1x512xf32, #tpu.memory_space<vmem>>, vector<1x512xf32>
    %70 = vector.broadcast %69 : vector<1x512xf32> to vector<8x512xf32>
    %71 = arith.addf %68, %70 : vector<8x512xf32>
    %72 = vector.extract_strided_slice %71 {offsets = [0, 0], sizes = [8, 128], strides = [1, 1]} : vector<8x512xf32> to vector<8x128xf32>
    %73 = arith.negf %72 : vector<8x128xf32>
    %74 = math.exp %73 : vector<8x128xf32>
    %cst_20 = arith.constant 1.000000e+00 : f32
    %75 = vector.broadcast %cst_20 : f32 to vector<8x128xf32>
    %76 = arith.addf %75, %74 : vector<8x128xf32>
    %77 = arith.divf %75, %76 : vector<8x128xf32>
    %78 = vector.extract_strided_slice %71 {offsets = [0, 128], sizes = [8, 128], strides = [1, 1]} : vector<8x512xf32> to vector<8x128xf32>
    %79 = arith.negf %78 : vector<8x128xf32>
    %80 = math.exp %79 : vector<8x128xf32>
    %cst_21 = arith.constant 1.000000e+00 : f32
    %81 = vector.broadcast %cst_21 : f32 to vector<8x128xf32>
    %82 = arith.addf %81, %80 : vector<8x128xf32>
    %83 = arith.divf %81, %82 : vector<8x128xf32>
    %84 = vector.extract_strided_slice %71 {offsets = [0, 256], sizes = [8, 128], strides = [1, 1]} : vector<8x512xf32> to vector<8x128xf32>
    %85 = math.tanh %84 : vector<8x128xf32>
    %86 = vector.extract_strided_slice %71 {offsets = [0, 384], sizes = [8, 128], strides = [1, 1]} : vector<8x512xf32> to vector<8x128xf32>
    %87 = arith.negf %86 : vector<8x128xf32>
    %88 = math.exp %87 : vector<8x128xf32>
    %cst_22 = arith.constant 1.000000e+00 : f32
    %89 = vector.broadcast %cst_22 : f32 to vector<8x128xf32>
    %90 = arith.addf %89, %88 : vector<8x128xf32>
    %91 = arith.divf %89, %90 : vector<8x128xf32>
    %92 = arith.mulf %83, %0 : vector<8x128xf32>
    %93 = arith.mulf %77, %85 : vector<8x128xf32>
    %94 = arith.addf %92, %93 : vector<8x128xf32>
    %95 = math.tanh %94 : vector<8x128xf32>
    %96 = arith.mulf %91, %95 : vector<8x128xf32>
    %c1_i32 = arith.constant 1 : i32
    %97 = arith.index_cast %c1_i32 : i32 to index
    %c0_23 = arith.constant 0 : index
    %c0_24 = arith.constant 0 : index
    %98 = vector.load %arg1[%97, %c0_23, %c0_24] : memref<4x8x512xf32, #tpu.memory_space<vmem>>, vector<1x8x512xf32>
    %99 = vector.shape_cast %98 : vector<1x8x512xf32> to vector<8x512xf32>
    %100 = arith.truncf %32 : vector<8x128xf32> to vector<8x128xbf16>
    %c0_25 = arith.constant 0 : index
    %c0_26 = arith.constant 0 : index
    %101 = vector.load %arg2[%c0_25, %c0_26] : memref<128x512xbf16, #tpu.memory_space<vmem>>, vector<128x512xbf16>
    %cst_27 = arith.constant dense<0.000000e+00> : vector<8x512xf32>
    %102 = tpu.matmul %100, %101, %cst_27 {dimension_numbers = #tpu.dot_dimension_numbers<[1], [0], [0], [1], [0, 0, 1, 1], [], []>} : vector<8x128xbf16>, vector<128x512xbf16>, vector<8x512xf32> -> vector<8x512xf32>
    %103 = arith.addf %99, %102 : vector<8x512xf32>
    %104 = vector.extract_strided_slice %103 {offsets = [0, 0], sizes = [8, 128], strides = [1, 1]} : vector<8x512xf32> to vector<8x128xf32>
    %105 = arith.negf %104 : vector<8x128xf32>
    %106 = math.exp %105 : vector<8x128xf32>
    %cst_28 = arith.constant 1.000000e+00 : f32
    %107 = vector.broadcast %cst_28 : f32 to vector<8x128xf32>
    %108 = arith.addf %107, %106 : vector<8x128xf32>
    %109 = arith.divf %107, %108 : vector<8x128xf32>
    %110 = vector.extract_strided_slice %103 {offsets = [0, 128], sizes = [8, 128], strides = [1, 1]} : vector<8x512xf32> to vector<8x128xf32>
    %111 = arith.negf %110 : vector<8x128xf32>
    %112 = math.exp %111 : vector<8x128xf32>
    %cst_29 = arith.constant 1.000000e+00 : f32
    %113 = vector.broadcast %cst_29 : f32 to vector<8x128xf32>
    %114 = arith.addf %113, %112 : vector<8x128xf32>
    %115 = arith.divf %113, %114 : vector<8x128xf32>
    %116 = vector.extract_strided_slice %103 {offsets = [0, 256], sizes = [8, 128], strides = [1, 1]} : vector<8x512xf32> to vector<8x128xf32>
    %117 = math.tanh %116 : vector<8x128xf32>
    %118 = vector.extract_strided_slice %103 {offsets = [0, 384], sizes = [8, 128], strides = [1, 1]} : vector<8x512xf32> to vector<8x128xf32>
    %119 = arith.negf %118 : vector<8x128xf32>
    %120 = math.exp %119 : vector<8x128xf32>
    %cst_30 = arith.constant 1.000000e+00 : f32
    %121 = vector.broadcast %cst_30 : f32 to vector<8x128xf32>
    %122 = arith.addf %121, %120 : vector<8x128xf32>
    %123 = arith.divf %121, %122 : vector<8x128xf32>
    %124 = arith.mulf %115, %30 : vector<8x128xf32>
    %125 = arith.mulf %109, %117 : vector<8x128xf32>
    %126 = arith.addf %124, %125 : vector<8x128xf32>
    %127 = math.tanh %126 : vector<8x128xf32>
    %128 = arith.mulf %123, %127 : vector<8x128xf32>
    %129 = tpu.concatenate %128, %64 in 1 : vector<8x128xf32>, vector<8x128xf32> -> vector<8x256xf32>
    %130 = arith.truncf %129 : vector<8x256xf32> to vector<8x256xbf16>
    %c0_31 = arith.constant 0 : index
    %c0_32 = arith.constant 0 : index
    %131 = vector.load %arg3[%c0_31, %c0_32] : memref<256x512xbf16, #tpu.memory_space<vmem>>, vector<256x512xbf16>
    %cst_33 = arith.constant dense<0.000000e+00> : vector<8x512xf32>
    %132 = tpu.matmul %130, %131, %cst_33 {dimension_numbers = #tpu.dot_dimension_numbers<[1], [0], [0], [1], [0, 0, 1, 1], [], []>} : vector<8x256xbf16>, vector<256x512xbf16>, vector<8x512xf32> -> vector<8x512xf32>
    %c0_34 = arith.constant 0 : index
    %c0_35 = arith.constant 0 : index
    %133 = vector.load %arg4[%c0_34, %c0_35] : memref<1x512xf32, #tpu.memory_space<vmem>>, vector<1x512xf32>
    %134 = vector.broadcast %133 : vector<1x512xf32> to vector<8x512xf32>
    %135 = arith.addf %132, %134 : vector<8x512xf32>
    %136 = vector.extract_strided_slice %135 {offsets = [0, 0], sizes = [8, 128], strides = [1, 1]} : vector<8x512xf32> to vector<8x128xf32>
    %137 = arith.negf %136 : vector<8x128xf32>
    %138 = math.exp %137 : vector<8x128xf32>
    %cst_36 = arith.constant 1.000000e+00 : f32
    %139 = vector.broadcast %cst_36 : f32 to vector<8x128xf32>
    %140 = arith.addf %139, %138 : vector<8x128xf32>
    %141 = arith.divf %139, %140 : vector<8x128xf32>
    %142 = vector.extract_strided_slice %135 {offsets = [0, 128], sizes = [8, 128], strides = [1, 1]} : vector<8x512xf32> to vector<8x128xf32>
    %143 = arith.negf %142 : vector<8x128xf32>
    %144 = math.exp %143 : vector<8x128xf32>
    %cst_37 = arith.constant 1.000000e+00 : f32
    %145 = vector.broadcast %cst_37 : f32 to vector<8x128xf32>
    %146 = arith.addf %145, %144 : vector<8x128xf32>
    %147 = arith.divf %145, %146 : vector<8x128xf32>
    %148 = vector.extract_strided_slice %135 {offsets = [0, 256], sizes = [8, 128], strides = [1, 1]} : vector<8x512xf32> to vector<8x128xf32>
    %149 = math.tanh %148 : vector<8x128xf32>
    %150 = vector.extract_strided_slice %135 {offsets = [0, 384], sizes = [8, 128], strides = [1, 1]} : vector<8x512xf32> to vector<8x128xf32>
    %151 = arith.negf %150 : vector<8x128xf32>
    %152 = math.exp %151 : vector<8x128xf32>
    %cst_38 = arith.constant 1.000000e+00 : f32
    %153 = vector.broadcast %cst_38 : f32 to vector<8x128xf32>
    %154 = arith.addf %153, %152 : vector<8x128xf32>
    %155 = arith.divf %153, %154 : vector<8x128xf32>
    %156 = arith.mulf %147, %62 : vector<8x128xf32>
    %157 = arith.mulf %141, %149 : vector<8x128xf32>
    %158 = arith.addf %156, %157 : vector<8x128xf32>
    %159 = math.tanh %158 : vector<8x128xf32>
    %160 = arith.mulf %155, %159 : vector<8x128xf32>
    %161 = tpu.concatenate %160, %96 in 1 : vector<8x128xf32>, vector<8x128xf32> -> vector<8x256xf32>
    %162 = arith.truncf %161 : vector<8x256xf32> to vector<8x256xbf16>
    %c0_39 = arith.constant 0 : index
    %c0_40 = arith.constant 0 : index
    %163 = vector.load %arg5[%c0_39, %c0_40] : memref<256x512xbf16, #tpu.memory_space<vmem>>, vector<256x512xbf16>
    %cst_41 = arith.constant dense<0.000000e+00> : vector<8x512xf32>
    %164 = tpu.matmul %162, %163, %cst_41 {dimension_numbers = #tpu.dot_dimension_numbers<[1], [0], [0], [1], [0, 0, 1, 1], [], []>} : vector<8x256xbf16>, vector<256x512xbf16>, vector<8x512xf32> -> vector<8x512xf32>
    %c0_42 = arith.constant 0 : index
    %c0_43 = arith.constant 0 : index
    %165 = vector.load %arg6[%c0_42, %c0_43] : memref<1x512xf32, #tpu.memory_space<vmem>>, vector<1x512xf32>
    %166 = vector.broadcast %165 : vector<1x512xf32> to vector<8x512xf32>
    %167 = arith.addf %164, %166 : vector<8x512xf32>
    %168 = vector.extract_strided_slice %167 {offsets = [0, 0], sizes = [8, 128], strides = [1, 1]} : vector<8x512xf32> to vector<8x128xf32>
    %169 = arith.negf %168 : vector<8x128xf32>
    %170 = math.exp %169 : vector<8x128xf32>
    %cst_44 = arith.constant 1.000000e+00 : f32
    %171 = vector.broadcast %cst_44 : f32 to vector<8x128xf32>
    %172 = arith.addf %171, %170 : vector<8x128xf32>
    %173 = arith.divf %171, %172 : vector<8x128xf32>
    %174 = vector.extract_strided_slice %167 {offsets = [0, 128], sizes = [8, 128], strides = [1, 1]} : vector<8x512xf32> to vector<8x128xf32>
    %175 = arith.negf %174 : vector<8x128xf32>
    %176 = math.exp %175 : vector<8x128xf32>
    %cst_45 = arith.constant 1.000000e+00 : f32
    %177 = vector.broadcast %cst_45 : f32 to vector<8x128xf32>
    %178 = arith.addf %177, %176 : vector<8x128xf32>
    %179 = arith.divf %177, %178 : vector<8x128xf32>
    %180 = vector.extract_strided_slice %167 {offsets = [0, 256], sizes = [8, 128], strides = [1, 1]} : vector<8x512xf32> to vector<8x128xf32>
    %181 = math.tanh %180 : vector<8x128xf32>
    %182 = vector.extract_strided_slice %167 {offsets = [0, 384], sizes = [8, 128], strides = [1, 1]} : vector<8x512xf32> to vector<8x128xf32>
    %183 = arith.negf %182 : vector<8x128xf32>
    %184 = math.exp %183 : vector<8x128xf32>
    %cst_46 = arith.constant 1.000000e+00 : f32
    %185 = vector.broadcast %cst_46 : f32 to vector<8x128xf32>
    %186 = arith.addf %185, %184 : vector<8x128xf32>
    %187 = arith.divf %185, %186 : vector<8x128xf32>
    %188 = arith.mulf %179, %94 : vector<8x128xf32>
    %189 = arith.mulf %173, %181 : vector<8x128xf32>
    %190 = arith.addf %188, %189 : vector<8x128xf32>
    %191 = math.tanh %190 : vector<8x128xf32>
    %192 = arith.mulf %187, %191 : vector<8x128xf32>
    %c2_i32 = arith.constant 2 : i32
    %193 = arith.index_cast %c2_i32 : i32 to index
    %c0_47 = arith.constant 0 : index
    %c0_48 = arith.constant 0 : index
    %194 = vector.load %arg1[%193, %c0_47, %c0_48] : memref<4x8x512xf32, #tpu.memory_space<vmem>>, vector<1x8x512xf32>
    %195 = vector.shape_cast %194 : vector<1x8x512xf32> to vector<8x512xf32>
    %196 = arith.truncf %128 : vector<8x128xf32> to vector<8x128xbf16>
    %c0_49 = arith.constant 0 : index
    %c0_50 = arith.constant 0 : index
    %197 = vector.load %arg2[%c0_49, %c0_50] : memref<128x512xbf16, #tpu.memory_space<vmem>>, vector<128x512xbf16>
    %cst_51 = arith.constant dense<0.000000e+00> : vector<8x512xf32>
    %198 = tpu.matmul %196, %197, %cst_51 {dimension_numbers = #tpu.dot_dimension_numbers<[1], [0], [0], [1], [0, 0, 1, 1], [], []>} : vector<8x128xbf16>, vector<128x512xbf16>, vector<8x512xf32> -> vector<8x512xf32>
    %199 = arith.addf %195, %198 : vector<8x512xf32>
    %200 = vector.extract_strided_slice %199 {offsets = [0, 0], sizes = [8, 128], strides = [1, 1]} : vector<8x512xf32> to vector<8x128xf32>
    %201 = arith.negf %200 : vector<8x128xf32>
    %202 = math.exp %201 : vector<8x128xf32>
    %cst_52 = arith.constant 1.000000e+00 : f32
    %203 = vector.broadcast %cst_52 : f32 to vector<8x128xf32>
    %204 = arith.addf %203, %202 : vector<8x128xf32>
    %205 = arith.divf %203, %204 : vector<8x128xf32>
    %206 = vector.extract_strided_slice %199 {offsets = [0, 128], sizes = [8, 128], strides = [1, 1]} : vector<8x512xf32> to vector<8x128xf32>
    %207 = arith.negf %206 : vector<8x128xf32>
    %208 = math.exp %207 : vector<8x128xf32>
    %cst_53 = arith.constant 1.000000e+00 : f32
    %209 = vector.broadcast %cst_53 : f32 to vector<8x128xf32>
    %210 = arith.addf %209, %208 : vector<8x128xf32>
    %211 = arith.divf %209, %210 : vector<8x128xf32>
    %212 = vector.extract_strided_slice %199 {offsets = [0, 256], sizes = [8, 128], strides = [1, 1]} : vector<8x512xf32> to vector<8x128xf32>
    %213 = math.tanh %212 : vector<8x128xf32>
    %214 = vector.extract_strided_slice %199 {offsets = [0, 384], sizes = [8, 128], strides = [1, 1]} : vector<8x512xf32> to vector<8x128xf32>
    %215 = arith.negf %214 : vector<8x128xf32>
    %216 = math.exp %215 : vector<8x128xf32>
    %cst_54 = arith.constant 1.000000e+00 : f32
    %217 = vector.broadcast %cst_54 : f32 to vector<8x128xf32>
    %218 = arith.addf %217, %216 : vector<8x128xf32>
    %219 = arith.divf %217, %218 : vector<8x128xf32>
    %220 = arith.mulf %211, %126 : vector<8x128xf32>
    %221 = arith.mulf %205, %213 : vector<8x128xf32>
    %222 = arith.addf %220, %221 : vector<8x128xf32>
    %223 = math.tanh %222 : vector<8x128xf32>
    %224 = arith.mulf %219, %223 : vector<8x128xf32>
    %225 = tpu.concatenate %224, %160 in 1 : vector<8x128xf32>, vector<8x128xf32> -> vector<8x256xf32>
    %226 = arith.truncf %225 : vector<8x256xf32> to vector<8x256xbf16>
    %c0_55 = arith.constant 0 : index
    %c0_56 = arith.constant 0 : index
    %227 = vector.load %arg3[%c0_55, %c0_56] : memref<256x512xbf16, #tpu.memory_space<vmem>>, vector<256x512xbf16>
    %cst_57 = arith.constant dense<0.000000e+00> : vector<8x512xf32>
    %228 = tpu.matmul %226, %227, %cst_57 {dimension_numbers = #tpu.dot_dimension_numbers<[1], [0], [0], [1], [0, 0, 1, 1], [], []>} : vector<8x256xbf16>, vector<256x512xbf16>, vector<8x512xf32> -> vector<8x512xf32>
    %c0_58 = arith.constant 0 : index
    %c0_59 = arith.constant 0 : index
    %229 = vector.load %arg4[%c0_58, %c0_59] : memref<1x512xf32, #tpu.memory_space<vmem>>, vector<1x512xf32>
    %230 = vector.broadcast %229 : vector<1x512xf32> to vector<8x512xf32>
    %231 = arith.addf %228, %230 : vector<8x512xf32>
    %232 = vector.extract_strided_slice %231 {offsets = [0, 0], sizes = [8, 128], strides = [1, 1]} : vector<8x512xf32> to vector<8x128xf32>
    %233 = arith.negf %232 : vector<8x128xf32>
    %234 = math.exp %233 : vector<8x128xf32>
    %cst_60 = arith.constant 1.000000e+00 : f32
    %235 = vector.broadcast %cst_60 : f32 to vector<8x128xf32>
    %236 = arith.addf %235, %234 : vector<8x128xf32>
    %237 = arith.divf %235, %236 : vector<8x128xf32>
    %238 = vector.extract_strided_slice %231 {offsets = [0, 128], sizes = [8, 128], strides = [1, 1]} : vector<8x512xf32> to vector<8x128xf32>
    %239 = arith.negf %238 : vector<8x128xf32>
    %240 = math.exp %239 : vector<8x128xf32>
    %cst_61 = arith.constant 1.000000e+00 : f32
    %241 = vector.broadcast %cst_61 : f32 to vector<8x128xf32>
    %242 = arith.addf %241, %240 : vector<8x128xf32>
    %243 = arith.divf %241, %242 : vector<8x128xf32>
    %244 = vector.extract_strided_slice %231 {offsets = [0, 256], sizes = [8, 128], strides = [1, 1]} : vector<8x512xf32> to vector<8x128xf32>
    %245 = math.tanh %244 : vector<8x128xf32>
    %246 = vector.extract_strided_slice %231 {offsets = [0, 384], sizes = [8, 128], strides = [1, 1]} : vector<8x512xf32> to vector<8x128xf32>
    %247 = arith.negf %246 : vector<8x128xf32>
    %248 = math.exp %247 : vector<8x128xf32>
    %cst_62 = arith.constant 1.000000e+00 : f32
    %249 = vector.broadcast %cst_62 : f32 to vector<8x128xf32>
    %250 = arith.addf %249, %248 : vector<8x128xf32>
    %251 = arith.divf %249, %250 : vector<8x128xf32>
    %252 = arith.mulf %243, %158 : vector<8x128xf32>
    %253 = arith.mulf %237, %245 : vector<8x128xf32>
    %254 = arith.addf %252, %253 : vector<8x128xf32>
    %255 = math.tanh %254 : vector<8x128xf32>
    %256 = arith.mulf %251, %255 : vector<8x128xf32>
    %257 = tpu.concatenate %256, %192 in 1 : vector<8x128xf32>, vector<8x128xf32> -> vector<8x256xf32>
    %258 = arith.truncf %257 : vector<8x256xf32> to vector<8x256xbf16>
    %c0_63 = arith.constant 0 : index
    %c0_64 = arith.constant 0 : index
    %259 = vector.load %arg5[%c0_63, %c0_64] : memref<256x512xbf16, #tpu.memory_space<vmem>>, vector<256x512xbf16>
    %cst_65 = arith.constant dense<0.000000e+00> : vector<8x512xf32>
    %260 = tpu.matmul %258, %259, %cst_65 {dimension_numbers = #tpu.dot_dimension_numbers<[1], [0], [0], [1], [0, 0, 1, 1], [], []>} : vector<8x256xbf16>, vector<256x512xbf16>, vector<8x512xf32> -> vector<8x512xf32>
    %c0_66 = arith.constant 0 : index
    %c0_67 = arith.constant 0 : index
    %261 = vector.load %arg6[%c0_66, %c0_67] : memref<1x512xf32, #tpu.memory_space<vmem>>, vector<1x512xf32>
    %262 = vector.broadcast %261 : vector<1x512xf32> to vector<8x512xf32>
    %263 = arith.addf %260, %262 : vector<8x512xf32>
    %264 = vector.extract_strided_slice %263 {offsets = [0, 0], sizes = [8, 128], strides = [1, 1]} : vector<8x512xf32> to vector<8x128xf32>
    %265 = arith.negf %264 : vector<8x128xf32>
    %266 = math.exp %265 : vector<8x128xf32>
    %cst_68 = arith.constant 1.000000e+00 : f32
    %267 = vector.broadcast %cst_68 : f32 to vector<8x128xf32>
    %268 = arith.addf %267, %266 : vector<8x128xf32>
    %269 = arith.divf %267, %268 : vector<8x128xf32>
    %270 = vector.extract_strided_slice %263 {offsets = [0, 128], sizes = [8, 128], strides = [1, 1]} : vector<8x512xf32> to vector<8x128xf32>
    %271 = arith.negf %270 : vector<8x128xf32>
    %272 = math.exp %271 : vector<8x128xf32>
    %cst_69 = arith.constant 1.000000e+00 : f32
    %273 = vector.broadcast %cst_69 : f32 to vector<8x128xf32>
    %274 = arith.addf %273, %272 : vector<8x128xf32>
    %275 = arith.divf %273, %274 : vector<8x128xf32>
    %276 = vector.extract_strided_slice %263 {offsets = [0, 256], sizes = [8, 128], strides = [1, 1]} : vector<8x512xf32> to vector<8x128xf32>
    %277 = math.tanh %276 : vector<8x128xf32>
    %278 = vector.extract_strided_slice %263 {offsets = [0, 384], sizes = [8, 128], strides = [1, 1]} : vector<8x512xf32> to vector<8x128xf32>
    %279 = arith.negf %278 : vector<8x128xf32>
    %280 = math.exp %279 : vector<8x128xf32>
    %cst_70 = arith.constant 1.000000e+00 : f32
    %281 = vector.broadcast %cst_70 : f32 to vector<8x128xf32>
    %282 = arith.addf %281, %280 : vector<8x128xf32>
    %283 = arith.divf %281, %282 : vector<8x128xf32>
    %284 = arith.mulf %275, %190 : vector<8x128xf32>
    %285 = arith.mulf %269, %277 : vector<8x128xf32>
    %286 = arith.addf %284, %285 : vector<8x128xf32>
    %287 = math.tanh %286 : vector<8x128xf32>
    %288 = arith.mulf %283, %287 : vector<8x128xf32>
    %c3_i32 = arith.constant 3 : i32
    %289 = arith.index_cast %c3_i32 : i32 to index
    %c0_71 = arith.constant 0 : index
    %c0_72 = arith.constant 0 : index
    %290 = vector.load %arg1[%289, %c0_71, %c0_72] : memref<4x8x512xf32, #tpu.memory_space<vmem>>, vector<1x8x512xf32>
    %291 = vector.shape_cast %290 : vector<1x8x512xf32> to vector<8x512xf32>
    %292 = arith.truncf %224 : vector<8x128xf32> to vector<8x128xbf16>
    %c0_73 = arith.constant 0 : index
    %c0_74 = arith.constant 0 : index
    %293 = vector.load %arg2[%c0_73, %c0_74] : memref<128x512xbf16, #tpu.memory_space<vmem>>, vector<128x512xbf16>
    %cst_75 = arith.constant dense<0.000000e+00> : vector<8x512xf32>
    %294 = tpu.matmul %292, %293, %cst_75 {dimension_numbers = #tpu.dot_dimension_numbers<[1], [0], [0], [1], [0, 0, 1, 1], [], []>} : vector<8x128xbf16>, vector<128x512xbf16>, vector<8x512xf32> -> vector<8x512xf32>
    %295 = arith.addf %291, %294 : vector<8x512xf32>
    %296 = vector.extract_strided_slice %295 {offsets = [0, 0], sizes = [8, 128], strides = [1, 1]} : vector<8x512xf32> to vector<8x128xf32>
    %297 = arith.negf %296 : vector<8x128xf32>
    %298 = math.exp %297 : vector<8x128xf32>
    %cst_76 = arith.constant 1.000000e+00 : f32
    %299 = vector.broadcast %cst_76 : f32 to vector<8x128xf32>
    %300 = arith.addf %299, %298 : vector<8x128xf32>
    %301 = arith.divf %299, %300 : vector<8x128xf32>
    %302 = vector.extract_strided_slice %295 {offsets = [0, 128], sizes = [8, 128], strides = [1, 1]} : vector<8x512xf32> to vector<8x128xf32>
    %303 = arith.negf %302 : vector<8x128xf32>
    %304 = math.exp %303 : vector<8x128xf32>
    %cst_77 = arith.constant 1.000000e+00 : f32
    %305 = vector.broadcast %cst_77 : f32 to vector<8x128xf32>
    %306 = arith.addf %305, %304 : vector<8x128xf32>
    %307 = arith.divf %305, %306 : vector<8x128xf32>
    %308 = vector.extract_strided_slice %295 {offsets = [0, 256], sizes = [8, 128], strides = [1, 1]} : vector<8x512xf32> to vector<8x128xf32>
    %309 = math.tanh %308 : vector<8x128xf32>
    %310 = vector.extract_strided_slice %295 {offsets = [0, 384], sizes = [8, 128], strides = [1, 1]} : vector<8x512xf32> to vector<8x128xf32>
    %311 = arith.negf %310 : vector<8x128xf32>
    %312 = math.exp %311 : vector<8x128xf32>
    %cst_78 = arith.constant 1.000000e+00 : f32
    %313 = vector.broadcast %cst_78 : f32 to vector<8x128xf32>
    %314 = arith.addf %313, %312 : vector<8x128xf32>
    %315 = arith.divf %313, %314 : vector<8x128xf32>
    %316 = arith.mulf %307, %222 : vector<8x128xf32>
    %317 = arith.mulf %301, %309 : vector<8x128xf32>
    %318 = arith.addf %316, %317 : vector<8x128xf32>
    %319 = math.tanh %318 : vector<8x128xf32>
    %320 = arith.mulf %315, %319 : vector<8x128xf32>
    %321 = tpu.concatenate %320, %256 in 1 : vector<8x128xf32>, vector<8x128xf32> -> vector<8x256xf32>
    %322 = arith.truncf %321 : vector<8x256xf32> to vector<8x256xbf16>
    %c0_79 = arith.constant 0 : index
    %c0_80 = arith.constant 0 : index
    %323 = vector.load %arg3[%c0_79, %c0_80] : memref<256x512xbf16, #tpu.memory_space<vmem>>, vector<256x512xbf16>
    %cst_81 = arith.constant dense<0.000000e+00> : vector<8x512xf32>
    %324 = tpu.matmul %322, %323, %cst_81 {dimension_numbers = #tpu.dot_dimension_numbers<[1], [0], [0], [1], [0, 0, 1, 1], [], []>} : vector<8x256xbf16>, vector<256x512xbf16>, vector<8x512xf32> -> vector<8x512xf32>
    %c0_82 = arith.constant 0 : index
    %c0_83 = arith.constant 0 : index
    %325 = vector.load %arg4[%c0_82, %c0_83] : memref<1x512xf32, #tpu.memory_space<vmem>>, vector<1x512xf32>
    %326 = vector.broadcast %325 : vector<1x512xf32> to vector<8x512xf32>
    %327 = arith.addf %324, %326 : vector<8x512xf32>
    %328 = vector.extract_strided_slice %327 {offsets = [0, 0], sizes = [8, 128], strides = [1, 1]} : vector<8x512xf32> to vector<8x128xf32>
    %329 = arith.negf %328 : vector<8x128xf32>
    %330 = math.exp %329 : vector<8x128xf32>
    %cst_84 = arith.constant 1.000000e+00 : f32
    %331 = vector.broadcast %cst_84 : f32 to vector<8x128xf32>
    %332 = arith.addf %331, %330 : vector<8x128xf32>
    %333 = arith.divf %331, %332 : vector<8x128xf32>
    %334 = vector.extract_strided_slice %327 {offsets = [0, 128], sizes = [8, 128], strides = [1, 1]} : vector<8x512xf32> to vector<8x128xf32>
    %335 = arith.negf %334 : vector<8x128xf32>
    %336 = math.exp %335 : vector<8x128xf32>
    %cst_85 = arith.constant 1.000000e+00 : f32
    %337 = vector.broadcast %cst_85 : f32 to vector<8x128xf32>
    %338 = arith.addf %337, %336 : vector<8x128xf32>
    %339 = arith.divf %337, %338 : vector<8x128xf32>
    %340 = vector.extract_strided_slice %327 {offsets = [0, 256], sizes = [8, 128], strides = [1, 1]} : vector<8x512xf32> to vector<8x128xf32>
    %341 = math.tanh %340 : vector<8x128xf32>
    %342 = vector.extract_strided_slice %327 {offsets = [0, 384], sizes = [8, 128], strides = [1, 1]} : vector<8x512xf32> to vector<8x128xf32>
    %343 = arith.negf %342 : vector<8x128xf32>
    %344 = math.exp %343 : vector<8x128xf32>
    %cst_86 = arith.constant 1.000000e+00 : f32
    %345 = vector.broadcast %cst_86 : f32 to vector<8x128xf32>
    %346 = arith.addf %345, %344 : vector<8x128xf32>
    %347 = arith.divf %345, %346 : vector<8x128xf32>
    %348 = arith.mulf %339, %254 : vector<8x128xf32>
    %349 = arith.mulf %333, %341 : vector<8x128xf32>
    %350 = arith.addf %348, %349 : vector<8x128xf32>
    %351 = math.tanh %350 : vector<8x128xf32>
    %352 = arith.mulf %347, %351 : vector<8x128xf32>
    %353 = tpu.concatenate %352, %288 in 1 : vector<8x128xf32>, vector<8x128xf32> -> vector<8x256xf32>
    %354 = arith.truncf %353 : vector<8x256xf32> to vector<8x256xbf16>
    %c0_87 = arith.constant 0 : index
    %c0_88 = arith.constant 0 : index
    %355 = vector.load %arg5[%c0_87, %c0_88] : memref<256x512xbf16, #tpu.memory_space<vmem>>, vector<256x512xbf16>
    %cst_89 = arith.constant dense<0.000000e+00> : vector<8x512xf32>
    %356 = tpu.matmul %354, %355, %cst_89 {dimension_numbers = #tpu.dot_dimension_numbers<[1], [0], [0], [1], [0, 0, 1, 1], [], []>} : vector<8x256xbf16>, vector<256x512xbf16>, vector<8x512xf32> -> vector<8x512xf32>
    %c0_90 = arith.constant 0 : index
    %c0_91 = arith.constant 0 : index
    %357 = vector.load %arg6[%c0_90, %c0_91] : memref<1x512xf32, #tpu.memory_space<vmem>>, vector<1x512xf32>
    %358 = vector.broadcast %357 : vector<1x512xf32> to vector<8x512xf32>
    %359 = arith.addf %356, %358 : vector<8x512xf32>
    %360 = vector.extract_strided_slice %359 {offsets = [0, 0], sizes = [8, 128], strides = [1, 1]} : vector<8x512xf32> to vector<8x128xf32>
    %361 = arith.negf %360 : vector<8x128xf32>
    %362 = math.exp %361 : vector<8x128xf32>
    %cst_92 = arith.constant 1.000000e+00 : f32
    %363 = vector.broadcast %cst_92 : f32 to vector<8x128xf32>
    %364 = arith.addf %363, %362 : vector<8x128xf32>
    %365 = arith.divf %363, %364 : vector<8x128xf32>
    %366 = vector.extract_strided_slice %359 {offsets = [0, 128], sizes = [8, 128], strides = [1, 1]} : vector<8x512xf32> to vector<8x128xf32>
    %367 = arith.negf %366 : vector<8x128xf32>
    %368 = math.exp %367 : vector<8x128xf32>
    %cst_93 = arith.constant 1.000000e+00 : f32
    %369 = vector.broadcast %cst_93 : f32 to vector<8x128xf32>
    %370 = arith.addf %369, %368 : vector<8x128xf32>
    %371 = arith.divf %369, %370 : vector<8x128xf32>
    %372 = vector.extract_strided_slice %359 {offsets = [0, 256], sizes = [8, 128], strides = [1, 1]} : vector<8x512xf32> to vector<8x128xf32>
    %373 = math.tanh %372 : vector<8x128xf32>
    %374 = vector.extract_strided_slice %359 {offsets = [0, 384], sizes = [8, 128], strides = [1, 1]} : vector<8x512xf32> to vector<8x128xf32>
    %375 = arith.negf %374 : vector<8x128xf32>
    %376 = math.exp %375 : vector<8x128xf32>
    %cst_94 = arith.constant 1.000000e+00 : f32
    %377 = vector.broadcast %cst_94 : f32 to vector<8x128xf32>
    %378 = arith.addf %377, %376 : vector<8x128xf32>
    %379 = arith.divf %377, %378 : vector<8x128xf32>
    %380 = arith.mulf %371, %286 : vector<8x128xf32>
    %381 = arith.mulf %365, %373 : vector<8x128xf32>
    %382 = arith.addf %380, %381 : vector<8x128xf32>
    %383 = math.tanh %382 : vector<8x128xf32>
    %384 = arith.mulf %379, %383 : vector<8x128xf32>
    %c4_i32 = arith.constant 4 : i32
    %385 = arith.truncf %384 : vector<8x128xf32> to vector<8x128xbf16>
    %c0_95 = arith.constant 0 : index
    %c0_96 = arith.constant 0 : index
    %386 = vector.load %arg7[%c0_95, %c0_96] : memref<128x128xbf16, #tpu.memory_space<vmem>>, vector<128x128xbf16>
    %cst_97 = arith.constant dense<0.000000e+00> : vector<8x128xf32>
    %387 = tpu.matmul %385, %386, %cst_97 {dimension_numbers = #tpu.dot_dimension_numbers<[1], [0], [0], [1], [0, 0, 1, 1], [], []>} : vector<8x128xbf16>, vector<128x128xbf16>, vector<8x128xf32> -> vector<8x128xf32>
    %c0_98 = arith.constant 0 : index
    %c0_99 = arith.constant 0 : index
    %388 = vector.load %arg8[%c0_98, %c0_99] : memref<1x128xf32, #tpu.memory_space<vmem>>, vector<1x128xf32>
    %389 = vector.broadcast %388 : vector<1x128xf32> to vector<8x128xf32>
    %390 = arith.addf %387, %389 : vector<8x128xf32>
    %c0_100 = arith.constant 0 : index
    %c0_101 = arith.constant 0 : index
    %391 = vector.load %arg9[%c0_100, %c0_101] : memref<8x128xf32, #tpu.memory_space<vmem>>, vector<8x128xf32>
    tpu.vector_store %arg9[%c0_100, %c0_101], %390 {strides = array<i32>} : memref<8x128xf32, #tpu.memory_space<vmem>>, vector<8x128xf32>,
    return
  }
  func.func @transform_0(%arg0: i32) -> (i32, i32, i32) {
    %c0_i32 = arith.constant 0 : i32
    %c0_i32_0 = arith.constant 0 : i32
    %c0_i32_1 = arith.constant 0 : i32
    return %c0_i32, %arg0, %c0_i32_0 : i32, i32, i32
  }
  func.func @transform_1(%arg0: i32) -> (i32, i32) {
    %c0_i32 = arith.constant 0 : i32
    %c0_i32_0 = arith.constant 0 : i32
    %c0_i32_1 = arith.constant 0 : i32
    return %c0_i32, %c0_i32_0 : i32, i32
  }
  func.func @transform_2(%arg0: i32) -> (i32, i32) {
    %c0_i32 = arith.constant 0 : i32
    %c0_i32_0 = arith.constant 0 : i32
    %c0_i32_1 = arith.constant 0 : i32
    return %c0_i32, %c0_i32_0 : i32, i32
  }
  func.func @transform_3(%arg0: i32) -> (i32, i32) {
    %c0_i32 = arith.constant 0 : i32
    %c0_i32_0 = arith.constant 0 : i32
    %c0_i32_1 = arith.constant 0 : i32
    return %c0_i32, %c0_i32_0 : i32, i32
  }
  func.func @transform_4(%arg0: i32) -> (i32, i32) {
    %c0_i32 = arith.constant 0 : i32
    %c0_i32_0 = arith.constant 0 : i32
    %c0_i32_1 = arith.constant 0 : i32
    return %c0_i32, %c0_i32_0 : i32, i32
  }
  func.func @transform_5(%arg0: i32) -> (i32, i32) {
    %c0_i32 = arith.constant 0 : i32
    %c0_i32_0 = arith.constant 0 : i32
    %c0_i32_1 = arith.constant 0 : i32
    return %c0_i32, %c0_i32_0 : i32, i32
  }
  func.func @transform_6(%arg0: i32) -> (i32, i32) {
    %c0_i32 = arith.constant 0 : i32
    %c0_i32_0 = arith.constant 0 : i32
    %c0_i32_1 = arith.constant 0 : i32
    return %c0_i32, %c0_i32_0 : i32, i32
  }
  func.func @transform_7(%arg0: i32) -> (i32, i32) {
    %c0_i32 = arith.constant 0 : i32
    %c0_i32_0 = arith.constant 0 : i32
    %c0_i32_1 = arith.constant 0 : i32
    return %c0_i32, %c0_i32_0 : i32, i32
  }
  func.func @transform_8(%arg0: i32) -> (i32, i32) {
    %c0_i32 = arith.constant 0 : i32
    %c0_i32_0 = arith.constant 0 : i32
    return %arg0, %c0_i32 : i32, i32
  }
}

</mosaic_0001>

<llo_original>
// kernel: vinet_forward.1
$region0: #{vinet_forward.1}
  #allocation0 [shape = 'u32[]', space=smem, size = 0x4, offset = 0x4, fixed_abs, tag = 'smem constant byte address 0x4 - core index']
  #allocation1 [shape = 'u32[72,128]{1,0:T(1,128)}', space=vmem, size = 0x9000, scoped, tag = 'internal scratch']
  %s0 = inlined_call_operand.vmem [shape: f32[4,8,512], index: 0, kind: input, shape index: {}]
  %s1 = inlined_call_operand.vmem [shape: bf16[128,512], index: 1, kind: input, shape index: {}]
  %s2 = inlined_call_operand.vmem [shape: bf16[256,512], index: 2, kind: input, shape index: {}]
  %s3 = inlined_call_operand.vmem [shape: f32[1,512], index: 3, kind: input, shape index: {}]
  %s4 = inlined_call_operand.vmem [shape: bf16[256,512], index: 4, kind: input, shape index: {}]
  %s5 = inlined_call_operand.vmem [shape: f32[1,512], index: 5, kind: input, shape index: {}]
  %s6 = inlined_call_operand.vmem [shape: bf16[128,128], index: 6, kind: input, shape index: {}]
  %s7 = inlined_call_operand.vmem [shape: f32[1,128], index: 7, kind: input, shape index: {}]
  %s8 = inlined_call_operand.vmem [shape: f32[8,128], index: 8, kind: output, shape index: {}]
  %s9 = sld [smem:[#allocation0]]
  $region42: #{vinet_forward.1} parent=0
    _
  %s11 = ssub.s32 1, %s9
  %s12 = scalar_select 0, %s11, %s9
  // Predicated region
  $region2: #{vinet_forward.1} parent=0 // pred_check
    _
  $region3: #{vinet_forward.1} parent=0 // pred_check_branch
    %14 = sbr.rel (0) target = $region5
  $region4: #{vinet_forward.1} parent=0 // pred_region
    _
  $region5: #{vinet_forward.1} parent=0 // pred_fallthru
    _
  // Predicated region
  $region6: #{vinet_forward.1} parent=0 // pred_check
    _
  $region7: #{vinet_forward.1} parent=0 // pred_check_branch
    %16 = sbr.rel (0) target = $region9
  $region8: #{vinet_forward.1} parent=0 // pred_region
    _
  $region9: #{vinet_forward.1} parent=0 // pred_fallthru
    _
  // Predicated region
  $region10: #{vinet_forward.1} parent=0 // pred_check
    _
  $region11: #{vinet_forward.1} parent=0 // pred_check_branch
    %18 = sbr.rel (0) target = $region13
  $region12: #{vinet_forward.1} parent=0 // pred_region
    _
  $region13: #{vinet_forward.1} parent=0 // pred_fallthru
    _
  // Predicated region
  $region14: #{vinet_forward.1} parent=0 // pred_check
    _
  $region15: #{vinet_forward.1} parent=0 // pred_check_branch
    %20 = sbr.rel (0) target = $region17
  $region16: #{vinet_forward.1} parent=0 // pred_region
    _
  $region17: #{vinet_forward.1} parent=0 // pred_fallthru
    _
  // Predicated region
  $region18: #{vinet_forward.1} parent=0 // pred_check
    _
  $region19: #{vinet_forward.1} parent=0 // pred_check_branch
    %22 = sbr.rel (0) target = $region21
  $region20: #{vinet_forward.1} parent=0 // pred_region
    _
  $region21: #{vinet_forward.1} parent=0 // pred_fallthru
    _
  // Predicated region
  $region22: #{vinet_forward.1} parent=0 // pred_check
    _
  $region23: #{vinet_forward.1} parent=0 // pred_check_branch
    %24 = sbr.rel (0) target = $region25
  $region24: #{vinet_forward.1} parent=0 // pred_region
    _
  $region25: #{vinet_forward.1} parent=0 // pred_fallthru
    _
  // Predicated region
  $region26: #{vinet_forward.1} parent=0 // pred_check
    _
  $region27: #{vinet_forward.1} parent=0 // pred_check_branch
    %26 = sbr.rel (0) target = $region29
  $region28: #{vinet_forward.1} parent=0 // pred_region
    _
  $region29: #{vinet_forward.1} parent=0 // pred_fallthru
    _
  // Predicated region
  $region30: #{vinet_forward.1} parent=0 // pred_check
    _
  $region31: #{vinet_forward.1} parent=0 // pred_check_branch
    %28 = sbr.rel (0) target = $region33
  $region32: #{vinet_forward.1} parent=0 // pred_region
    _
  $region33: #{vinet_forward.1} parent=0 // pred_fallthru
    _
  %v30 = vld [vmem:[%s0] sm:$0xff]
  %v31 = vld [vmem:[%s0 + $0x8] sm:$0xff]
  %v32 = vld [vmem:[%s0 + $0x10] sm:$0xff]
  %v33 = vld [vmem:[%s0 + $0x18] sm:$0xff]
  %v34 = vld [vmem:[%s1] sm:$0xff]
  %v35 = vld [vmem:[%s1 + $0x8] sm:$0xff]
  %v36 = vld [vmem:[%s1 + $0x10] sm:$0xff]
  %v37 = vld [vmem:[%s1 + $0x18] sm:$0xff]
  %v38 = vld [vmem:[%s1 + $0x20] sm:$0xff]
  %v39 = vld [vmem:[%s1 + $0x28] sm:$0xff]
  %v40 = vld [vmem:[%s1 + $0x30] sm:$0xff]
  %v41 = vld [vmem:[%s1 + $0x38] sm:$0xff]
  %v42 = vld [vmem:[%s1 + $0x40] sm:$0xff]
  %v43 = vld [vmem:[%s1 + $0x48] sm:$0xff]
  %v44 = vld [vmem:[%s1 + $0x50] sm:$0xff]
  %v45 = vld [vmem:[%s1 + $0x58] sm:$0xff]
  %v46 = vld [vmem:[%s1 + $0x60] sm:$0xff]
  %v47 = vld [vmem:[%s1 + $0x68] sm:$0xff]
  %v48 = vld [vmem:[%s1 + $0x70] sm:$0xff]
  %v49 = vld [vmem:[%s1 + $0x78] sm:$0xff]
  %v50 = vld [vmem:[%s1 + $0x80] sm:$0xff]
  %v51 = vld [vmem:[%s1 + $0x88] sm:$0xff]
  %v52 = vld [vmem:[%s1 + $0x90] sm:$0xff]
  %v53 = vld [vmem:[%s1 + $0x98] sm:$0xff]
  %v54 = vld [vmem:[%s1 + $0xa0] sm:$0xff]
  %v55 = vld [vmem:[%s1 + $0xa8] sm:$0xff]
  %v56 = vld [vmem:[%s1 + $0xb0] sm:$0xff]
  %v57 = vld [vmem:[%s1 + $0xb8] sm:$0xff]
  %v58 = vld [vmem:[%s1 + $0xc0] sm:$0xff]
  %v59 = vld [vmem:[%s1 + $0xc8] sm:$0xff]
  %v60 = vld [vmem:[%s1 + $0xd0] sm:$0xff]
  %v61 = vld [vmem:[%s1 + $0xd8] sm:$0xff]
  %v62 = vld [vmem:[%s1 + $0xe0] sm:$0xff]
  %v63 = vld [vmem:[%s1 + $0xe8] sm:$0xff]
  %v64 = vld [vmem:[%s1 + $0xf0] sm:$0xff]
  %v65 = vld [vmem:[%s1 + $0xf8] sm:$0xff]
  %v98 = vunpack.c.l.b16 %v34
  %v99 = vunpack.c.h.b16 %v34
  %v100 = vunpack.c.l.b16 %v35
  %v101 = vunpack.c.h.b16 %v35
  %v102 = vunpack.c.l.b16 %v36
  %v103 = vunpack.c.h.b16 %v36
  %v104 = vunpack.c.l.b16 %v37
  %v105 = vunpack.c.h.b16 %v37
  %v106 = vunpack.c.l.b16 %v38
  %v107 = vunpack.c.h.b16 %v38
  %v108 = vunpack.c.l.b16 %v39
  %v109 = vunpack.c.h.b16 %v39
  %v110 = vunpack.c.l.b16 %v40
  %v111 = vunpack.c.h.b16 %v40
  %v112 = vunpack.c.l.b16 %v41
  %v113 = vunpack.c.h.b16 %v41
  %v114 = vunpack.c.l.b16 %v42
  %v115 = vunpack.c.h.b16 %v42
  %v116 = vunpack.c.l.b16 %v43
  %v117 = vunpack.c.h.b16 %v43
  %v118 = vunpack.c.l.b16 %v44
  %v119 = vunpack.c.h.b16 %v44
  %v120 = vunpack.c.l.b16 %v45
  %v121 = vunpack.c.h.b16 %v45
  %v122 = vunpack.c.l.b16 %v46
  %v123 = vunpack.c.h.b16 %v46
  %v124 = vunpack.c.l.b16 %v47
  %v125 = vunpack.c.h.b16 %v47
  %v126 = vunpack.c.l.b16 %v48
  %v127 = vunpack.c.h.b16 %v48
  %v128 = vunpack.c.l.b16 %v49
  %v129 = vunpack.c.h.b16 %v49
  %v130 = vunpack.c.l.b16 %v50
  %v131 = vunpack.c.h.b16 %v50
  %v132 = vunpack.c.l.b16 %v51
  %v133 = vunpack.c.h.b16 %v51
  %v134 = vunpack.c.l.b16 %v52
  %v135 = vunpack.c.h.b16 %v52
  %v136 = vunpack.c.l.b16 %v53
  %v137 = vunpack.c.h.b16 %v53
  %v138 = vunpack.c.l.b16 %v54
  %v139 = vunpack.c.h.b16 %v54
  %v140 = vunpack.c.l.b16 %v55
  %v141 = vunpack.c.h.b16 %v55
  %v142 = vunpack.c.l.b16 %v56
  %v143 = vunpack.c.h.b16 %v56
  %v144 = vunpack.c.l.b16 %v57
  %v145 = vunpack.c.h.b16 %v57
  %v146 = vunpack.c.l.b16 %v58
  %v147 = vunpack.c.h.b16 %v58
  %v148 = vunpack.c.l.b16 %v59
  %v149 = vunpack.c.h.b16 %v59
  %v150 = vunpack.c.l.b16 %v60
  %v151 = vunpack.c.h.b16 %v60
  %v152 = vunpack.c.l.b16 %v61
  %v153 = vunpack.c.h.b16 %v61
  %v154 = vunpack.c.l.b16 %v62
  %v155 = vunpack.c.h.b16 %v62
  %v156 = vunpack.c.l.b16 %v63
  %v157 = vunpack.c.h.b16 %v63
  %v158 = vunpack.c.l.b16 %v64
  %v159 = vunpack.c.h.b16 %v64
  %v160 = vunpack.c.l.b16 %v65
  %v161 = vunpack.c.h.b16 %v65
  %v162 = vpack.c.b16 %v102, %v98
  %v163 = vpack.c.b16 %v103, %v99
  %v164 = vpack.c.b16 %v104, %v100
  %v165 = vpack.c.b16 %v105, %v101
  %v166 = vpack.c.b16 %v110, %v106
  %v167 = vpack.c.b16 %v111, %v107
  %v168 = vpack.c.b16 %v112, %v108
  %v169 = vpack.c.b16 %v113, %v109
  %v170 = vpack.c.b16 %v118, %v114
  %v171 = vpack.c.b16 %v119, %v115
  %v172 = vpack.c.b16 %v120, %v116
  %v173 = vpack.c.b16 %v121, %v117
  %v174 = vpack.c.b16 %v126, %v122
  %v175 = vpack.c.b16 %v127, %v123
  %v176 = vpack.c.b16 %v128, %v124
  %v177 = vpack.c.b16 %v129, %v125
  %v178 = vpack.c.b16 %v134, %v130
  %v179 = vpack.c.b16 %v135, %v131
  %v180 = vpack.c.b16 %v136, %v132
  %v181 = vpack.c.b16 %v137, %v133
  %v182 = vpack.c.b16 %v142, %v138
  %v183 = vpack.c.b16 %v143, %v139
  %v184 = vpack.c.b16 %v144, %v140
  %v185 = vpack.c.b16 %v145, %v141
  %v186 = vpack.c.b16 %v150, %v146
  %v187 = vpack.c.b16 %v151, %v147
  %v188 = vpack.c.b16 %v152, %v148
  %v189 = vpack.c.b16 %v153, %v149
  %v190 = vpack.c.b16 %v158, %v154
  %v191 = vpack.c.b16 %v159, %v155
  %v192 = vpack.c.b16 %v160, %v156
  %v193 = vpack.c.b16 %v161, %v157
  %226 = vmatpush.bf16.msra.mxu0 %v190
  %227 = vmatpush.bf16.msra.mxu0 %v186
  %228 = vmatpush.bf16.msra.mxu0 %v182
  %229 = vmatpush.bf16.msra.mxu0 %v178
  %230 = vmatpush.bf16.msra.mxu0 %v174
  %231 = vmatpush.bf16.msra.mxu0 %v170
  %232 = vmatpush.bf16.msra.mxu0 %v166
  %233 = vmatpush.bf16.msra.mxu0 %v162
  %234 = vmatmul.bf16.gmra.mxu0 0
  %v235 = vpop.f32.mrf.mxu0
  %v236 = vadd.f32 0.0, %v235
  %v237 = vpop.f32.mrf.mxu0
  %238 = vdwg.mxu0
  %239 = vmatpush.bf16.msra.mxu0 %v191
  %240 = vmatpush.bf16.msra.mxu0 %v187
  %241 = vmatpush.bf16.msra.mxu0 %v183
  %242 = vmatpush.bf16.msra.mxu0 %v179
  %243 = vmatpush.bf16.msra.mxu0 %v175
  %244 = vmatpush.bf16.msra.mxu0 %v171
  %245 = vmatpush.bf16.msra.mxu0 %v167
  %246 = vmatpush.bf16.msra.mxu0 %v163
  %247 = vmatmul.bf16.gmra.mxu0 0
  %v248 = vpop.f32.mrf.mxu0
  %v249 = vadd.f32 0.0, %v248
  %v250 = vpop.f32.mrf.mxu0
  %251 = vdwg.mxu0
  %252 = vmatpush.bf16.msra.mxu0 %v192
  %253 = vmatpush.bf16.msra.mxu0 %v188
  %254 = vmatpush.bf16.msra.mxu0 %v184
  %255 = vmatpush.bf16.msra.mxu0 %v180
  %256 = vmatpush.bf16.msra.mxu0 %v176
  %257 = vmatpush.bf16.msra.mxu0 %v172
  %258 = vmatpush.bf16.msra.mxu0 %v168
  %259 = vmatpush.bf16.msra.mxu0 %v164
  %260 = vmatmul.bf16.gmra.mxu0 0
  %v261 = vpop.f32.mrf.mxu0
  %v262 = vadd.f32 0.0, %v261
  %v263 = vpop.f32.mrf.mxu0
  %264 = vdwg.mxu0
  %265 = vmatpush.bf16.msra.mxu0 %v193
  %266 = vmatpush.bf16.msra.mxu0 %v189
  %267 = vmatpush.bf16.msra.mxu0 %v185
  %268 = vmatpush.bf16.msra.mxu0 %v181
  %269 = vmatpush.bf16.msra.mxu0 %v177
  %270 = vmatpush.bf16.msra.mxu0 %v173
  %271 = vmatpush.bf16.msra.mxu0 %v169
  %272 = vmatpush.bf16.msra.mxu0 %v165
  %273 = vmatmul.bf16.gmra.mxu0 0
  %v274 = vpop.f32.mrf.mxu0
  %v275 = vadd.f32 0.0, %v274
  %v276 = vpop.f32.mrf.mxu0
  %277 = vdwg.mxu0
  %v278 = vadd.f32 %v30, %v236
  %v279 = vadd.f32 %v31, %v249
  %v280 = vadd.f32 %v32, %v262
  %v281 = vadd.f32 %v33, %v275
  %v282 = vxor.u32 %v278, 2147483648
  %v283 = vmul.f32 %v282, 1.442695
  %v284 = vpow.pop %v283
  %v285 = vadd.f32 %v284, 1.0
  %v286 = vrcp.pop %v285
  %v287 = vmul.f32 %v285, %v286
  %v288 = vsub.f32 1.0, %v287
  %v289 = vmul.f32 %v286, %v288
  %v290 = vadd.f32 %v286, %v289
  %vm291 = vweird.f32 %v285
  %vm292 = vweird.f32 %v286
  %vm293 = vmor %vm291, %vm292
  %v294 = vsel %vm293, %v286, %v290
  %v295 = vand.u32 2147483647, %v285
  %vm296 = vcmp.eq.f32.partialorder %v295, 8.507059e+37
  %v297 = vand.u32 %v285, 2147483648
  %v298 = vor.u32 1.1754944e-38, %v297
  %v299 = vsel %vm296, %v298, %v294
  %v300 = vmul.f32 1.0, %v299
  %v301 = vxor.u32 %v279, 2147483648
  %v302 = vmul.f32 %v301, 1.442695
  %v303 = vpow.pop %v302
  %v304 = vadd.f32 %v303, 1.0
  %v305 = vrcp.pop %v304
  %v306 = vmul.f32 %v304, %v305
  %v307 = vsub.f32 1.0, %v306
  %v308 = vmul.f32 %v305, %v307
  %v309 = vadd.f32 %v305, %v308
  %vm310 = vweird.f32 %v304
  %vm311 = vweird.f32 %v305
  %vm312 = vmor %vm310, %vm311
  %v313 = vsel %vm312, %v305, %v309
  %v314 = vand.u32 2147483647, %v304
  %vm315 = vcmp.eq.f32.partialorder %v314, 8.507059e+37
  %v316 = vand.u32 %v304, 2147483648
  %v317 = vor.u32 1.1754944e-38, %v316
  %v318 = vsel %vm315, %v317, %v313
  %v319 = vmul.f32 1.0, %v318
  %v320 = vtanh.pop %v280
  %v321 = vxor.u32 %v281, 2147483648
  %v322 = vmul.f32 %v321, 1.442695
  %v323 = vpow.pop %v322
  %v324 = vadd.f32 %v323, 1.0
  %v325 = vrcp.pop %v324
  %v326 = vmul.f32 %v324, %v325
  %v327 = vsub.f32 1.0, %v326
  %v328 = vmul.f32 %v325, %v327
  %v329 = vadd.f32 %v325, %v328
  %vm330 = vweird.f32 %v324
  %vm331 = vweird.f32 %v325
  %vm332 = vmor %vm330, %vm331
  %v333 = vsel %vm332, %v325, %v329
  %v334 = vand.u32 2147483647, %v324
  %vm335 = vcmp.eq.f32.partialorder %v334, 8.507059e+37
  %v336 = vand.u32 %v324, 2147483648
  %v337 = vor.u32 1.1754944e-38, %v336
  %v338 = vsel %vm335, %v337, %v333
  %v339 = vmul.f32 1.0, %v338
  %v340 = vmul.f32 %v319, 0.0
  %v341 = vmul.f32 %v300, %v320
  %v342 = vadd.f32 %v340, %v341
  %v343 = vtanh.pop %v342
  %v344 = vmul.f32 %v339, %v343
  %v345 = vpack.c.bf16 %v344, %v344
  %v346 = vpack.c.bf16 0.0, 0.0
  %v347 = vld [vmem:[%s2] sm:$0xff]
  %v348 = vld [vmem:[%s2 + $0x8] sm:$0xff]
  %v349 = vld [vmem:[%s2 + $0x10] sm:$0xff]
  %v350 = vld [vmem:[%s2 + $0x18] sm:$0xff]
  %v351 = vld [vmem:[%s2 + $0x20] sm:$0xff]
  %v352 = vld [vmem:[%s2 + $0x28] sm:$0xff]
  %v353 = vld [vmem:[%s2 + $0x30] sm:$0xff]
  %v354 = vld [vmem:[%s2 + $0x38] sm:$0xff]
  %v355 = vld [vmem:[%s2 + $0x40] sm:$0xff]
  %v356 = vld [vmem:[%s2 + $0x48] sm:$0xff]
  %v357 = vld [vmem:[%s2 + $0x50] sm:$0xff]
  %v358 = vld [vmem:[%s2 + $0x58] sm:$0xff]
  %v359 = vld [vmem:[%s2 + $0x60] sm:$0xff]
  %v360 = vld [vmem:[%s2 + $0x68] sm:$0xff]
  %v361 = vld [vmem:[%s2 + $0x70] sm:$0xff]
  %v362 = vld [vmem:[%s2 + $0x78] sm:$0xff]
  %v363 = vld [vmem:[%s2 + $0x80] sm:$0xff]
  %v364 = vld [vmem:[%s2 + $0x88] sm:$0xff]
  %v365 = vld [vmem:[%s2 + $0x90] sm:$0xff]
  %v366 = vld [vmem:[%s2 + $0x98] sm:$0xff]
  %v367 = vld [vmem:[%s2 + $0xa0] sm:$0xff]
  %v368 = vld [vmem:[%s2 + $0xa8] sm:$0xff]
  %v369 = vld [vmem:[%s2 + $0xb0] sm:$0xff]
  %v370 = vld [vmem:[%s2 + $0xb8] sm:$0xff]
  %v371 = vld [vmem:[%s2 + $0xc0] sm:$0xff]
  %v372 = vld [vmem:[%s2 + $0xc8] sm:$0xff]
  %v373 = vld [vmem:[%s2 + $0xd0] sm:$0xff]
  %v374 = vld [vmem:[%s2 + $0xd8] sm:$0xff]
  %v375 = vld [vmem:[%s2 + $0xe0] sm:$0xff]
  %v376 = vld [vmem:[%s2 + $0xe8] sm:$0xff]
  %v377 = vld [vmem:[%s2 + $0xf0] sm:$0xff]
  %v378 = vld [vmem:[%s2 + $0xf8] sm:$0xff]
  %v379 = vld [vmem:[%s2 + $0x100] sm:$0xff]
  %v380 = vld [vmem:[%s2 + $0x108] sm:$0xff]
  %v381 = vld [vmem:[%s2 + $0x110] sm:$0xff]
  %v382 = vld [vmem:[%s2 + $0x118] sm:$0xff]
  %v383 = vld [vmem:[%s2 + $0x120] sm:$0xff]
  %v384 = vld [vmem:[%s2 + $0x128] sm:$0xff]
  %v385 = vld [vmem:[%s2 + $0x130] sm:$0xff]
  %v386 = vld [vmem:[%s2 + $0x138] sm:$0xff]
  %v387 = vld [vmem:[%s2 + $0x140] sm:$0xff]
  %v388 = vld [vmem:[%s2 + $0x148] sm:$0xff]
  %v389 = vld [vmem:[%s2 + $0x150] sm:$0xff]
  %v390 = vld [vmem:[%s2 + $0x158] sm:$0xff]
  %v391 = vld [vmem:[%s2 + $0x160] sm:$0xff]
  %v392 = vld [vmem:[%s2 + $0x168] sm:$0xff]
  %v393 = vld [vmem:[%s2 + $0x170] sm:$0xff]
  %v394 = vld [vmem:[%s2 + $0x178] sm:$0xff]
  %v395 = vld [vmem:[%s2 + $0x180] sm:$0xff]
  %v396 = vld [vmem:[%s2 + $0x188] sm:$0xff]
  %v397 = vld [vmem:[%s2 + $0x190] sm:$0xff]
  %v398 = vld [vmem:[%s2 + $0x198] sm:$0xff]
  %v399 = vld [vmem:[%s2 + $0x1a0] sm:$0xff]
  %v400 = vld [vmem:[%s2 + $0x1a8] sm:$0xff]
  %v401 = vld [vmem:[%s2 + $0x1b0] sm:$0xff]
  %v402 = vld [vmem:[%s2 + $0x1b8] sm:$0xff]
  %v403 = vld [vmem:[%s2 + $0x1c0] sm:$0xff]
  %v404 = vld [vmem:[%s2 + $0x1c8] sm:$0xff]
  %v405 = vld [vmem:[%s2 + $0x1d0] sm:$0xff]
  %v406 = vld [vmem:[%s2 + $0x1d8] sm:$0xff]
  %v407 = vld [vmem:[%s2 + $0x1e0] sm:$0xff]
  %v408 = vld [vmem:[%s2 + $0x1e8] sm:$0xff]
  %v409 = vld [vmem:[%s2 + $0x1f0] sm:$0xff]
  %v410 = vld [vmem:[%s2 + $0x1f8] sm:$0xff]
  %v411 = vld [vmem:[%s3] sm:$0xf]
  %v413 = vperm.slane %v411, 0
  %v414 = vperm.slane %v411, 1
  %v415 = vperm.slane %v411, 2
  %v416 = vperm.slane %v411, 3
  %v485 = vunpack.c.l.b16 %v347
  %v486 = vunpack.c.h.b16 %v347
  %v487 = vunpack.c.l.b16 %v348
  %v488 = vunpack.c.h.b16 %v348
  %v489 = vunpack.c.l.b16 %v349
  %v490 = vunpack.c.h.b16 %v349
  %v491 = vunpack.c.l.b16 %v350
  %v492 = vunpack.c.h.b16 %v350
  %v493 = vunpack.c.l.b16 %v351
  %v494 = vunpack.c.h.b16 %v351
  %v495 = vunpack.c.l.b16 %v352
  %v496 = vunpack.c.h.b16 %v352
  %v497 = vunpack.c.l.b16 %v353
  %v498 = vunpack.c.h.b16 %v353
  %v499 = vunpack.c.l.b16 %v354
  %v500 = vunpack.c.h.b16 %v354
  %v501 = vunpack.c.l.b16 %v355
  %v502 = vunpack.c.h.b16 %v355
  %v503 = vunpack.c.l.b16 %v356
  %v504 = vunpack.c.h.b16 %v356
  %v505 = vunpack.c.l.b16 %v357
  %v506 = vunpack.c.h.b16 %v357
  %v507 = vunpack.c.l.b16 %v358
  %v508 = vunpack.c.h.b16 %v358
  %v509 = vunpack.c.l.b16 %v359
  %v510 = vunpack.c.h.b16 %v359
  %v511 = vunpack.c.l.b16 %v360
  %v512 = vunpack.c.h.b16 %v360
  %v513 = vunpack.c.l.b16 %v361
  %v514 = vunpack.c.h.b16 %v361
  %v515 = vunpack.c.l.b16 %v362
  %v516 = vunpack.c.h.b16 %v362
  %v517 = vunpack.c.l.b16 %v363
  %v518 = vunpack.c.h.b16 %v363
  %v519 = vunpack.c.l.b16 %v364
  %v520 = vunpack.c.h.b16 %v364
  %v521 = vunpack.c.l.b16 %v365
  %v522 = vunpack.c.h.b16 %v365
  %v523 = vunpack.c.l.b16 %v366
  %v524 = vunpack.c.h.b16 %v366
  %v525 = vunpack.c.l.b16 %v367
  %v526 = vunpack.c.h.b16 %v367
  %v527 = vunpack.c.l.b16 %v368
  %v528 = vunpack.c.h.b16 %v368
  %v529 = vunpack.c.l.b16 %v369
  %v530 = vunpack.c.h.b16 %v369
  %v531 = vunpack.c.l.b16 %v370
  %v532 = vunpack.c.h.b16 %v370
  %v533 = vunpack.c.l.b16 %v371
  %v534 = vunpack.c.h.b16 %v371
  %v535 = vunpack.c.l.b16 %v372
  %v536 = vunpack.c.h.b16 %v372
  %v537 = vunpack.c.l.b16 %v373
  %v538 = vunpack.c.h.b16 %v373
  %v539 = vunpack.c.l.b16 %v374
  %v540 = vunpack.c.h.b16 %v374
  %v541 = vunpack.c.l.b16 %v375
  %v542 = vunpack.c.h.b16 %v375
  %v543 = vunpack.c.l.b16 %v376
  %v544 = vunpack.c.h.b16 %v376
  %v545 = vunpack.c.l.b16 %v377
  %v546 = vunpack.c.h.b16 %v377
  %v547 = vunpack.c.l.b16 %v378
  %v548 = vunpack.c.h.b16 %v378
  %v549 = vunpack.c.l.b16 %v379
  %v550 = vunpack.c.h.b16 %v379
  %v551 = vunpack.c.l.b16 %v380
  %v552 = vunpack.c.h.b16 %v380
  %v553 = vunpack.c.l.b16 %v381
  %v554 = vunpack.c.h.b16 %v381
  %v555 = vunpack.c.l.b16 %v382
  %v556 = vunpack.c.h.b16 %v382
  %v557 = vunpack.c.l.b16 %v383
  %v558 = vunpack.c.h.b16 %v383
  %v559 = vunpack.c.l.b16 %v384
  %v560 = vunpack.c.h.b16 %v384
  %v561 = vunpack.c.l.b16 %v385
  %v562 = vunpack.c.h.b16 %v385
  %v563 = vunpack.c.l.b16 %v386
  %v564 = vunpack.c.h.b16 %v386
  %v565 = vunpack.c.l.b16 %v387
  %v566 = vunpack.c.h.b16 %v387
  %v567 = vunpack.c.l.b16 %v388
  %v568 = vunpack.c.h.b16 %v388
  %v569 = vunpack.c.l.b16 %v389
  %v570 = vunpack.c.h.b16 %v389
  %v571 = vunpack.c.l.b16 %v390
  %v572 = vunpack.c.h.b16 %v390
  %v573 = vunpack.c.l.b16 %v391
  %v574 = vunpack.c.h.b16 %v391
  %v575 = vunpack.c.l.b16 %v392
  %v576 = vunpack.c.h.b16 %v392
  %v577 = vunpack.c.l.b16 %v393
  %v578 = vunpack.c.h.b16 %v393
  %v579 = vunpack.c.l.b16 %v394
  %v580 = vunpack.c.h.b16 %v394
  %v581 = vunpack.c.l.b16 %v395
  %v582 = vunpack.c.h.b16 %v395
  %v583 = vunpack.c.l.b16 %v396
  %v584 = vunpack.c.h.b16 %v396
  %v585 = vunpack.c.l.b16 %v397
  %v586 = vunpack.c.h.b16 %v397
  %v587 = vunpack.c.l.b16 %v398
  %v588 = vunpack.c.h.b16 %v398
  %v589 = vunpack.c.l.b16 %v399
  %v590 = vunpack.c.h.b16 %v399
  %v591 = vunpack.c.l.b16 %v400
  %v592 = vunpack.c.h.b16 %v400
  %v593 = vunpack.c.l.b16 %v401
  %v594 = vunpack.c.h.b16 %v401
  %v595 = vunpack.c.l.b16 %v402
  %v596 = vunpack.c.h.b16 %v402
  %v597 = vunpack.c.l.b16 %v403
  %v598 = vunpack.c.h.b16 %v403
  %v599 = vunpack.c.l.b16 %v404
  %v600 = vunpack.c.h.b16 %v404
  %v601 = vunpack.c.l.b16 %v405
  %v602 = vunpack.c.h.b16 %v405
  %v603 = vunpack.c.l.b16 %v406
  %v604 = vunpack.c.h.b16 %v406
  %v605 = vunpack.c.l.b16 %v407
  %v606 = vunpack.c.h.b16 %v407
  %v607 = vunpack.c.l.b16 %v408
  %v608 = vunpack.c.h.b16 %v408
  %v609 = vunpack.c.l.b16 %v409
  %v610 = vunpack.c.h.b16 %v409
  %v611 = vunpack.c.l.b16 %v410
  %v612 = vunpack.c.h.b16 %v410
  %v613 = vpack.c.b16 %v489, %v485
  %v614 = vpack.c.b16 %v490, %v486
  %v615 = vpack.c.b16 %v491, %v487
  %v616 = vpack.c.b16 %v492, %v488
  %v617 = vpack.c.b16 %v497, %v493
  %v618 = vpack.c.b16 %v498, %v494
  %v619 = vpack.c.b16 %v499, %v495
  %v620 = vpack.c.b16 %v500, %v496
  %v621 = vpack.c.b16 %v505, %v501
  %v622 = vpack.c.b16 %v506, %v502
  %v623 = vpack.c.b16 %v507, %v503
  %v624 = vpack.c.b16 %v508, %v504
  %v625 = vpack.c.b16 %v513, %v509
  %v626 = vpack.c.b16 %v514, %v510
  %v627 = vpack.c.b16 %v515, %v511
  %v628 = vpack.c.b16 %v516, %v512
  %v629 = vpack.c.b16 %v521, %v517
  %v630 = vpack.c.b16 %v522, %v518
  %v631 = vpack.c.b16 %v523, %v519
  %v632 = vpack.c.b16 %v524, %v520
  %v633 = vpack.c.b16 %v529, %v525
  %v634 = vpack.c.b16 %v530, %v526
  %v635 = vpack.c.b16 %v531, %v527
  %v636 = vpack.c.b16 %v532, %v528
  %v637 = vpack.c.b16 %v537, %v533
  %v638 = vpack.c.b16 %v538, %v534
  %v639 = vpack.c.b16 %v539, %v535
  %v640 = vpack.c.b16 %v540, %v536
  %v641 = vpack.c.b16 %v545, %v541
  %v642 = vpack.c.b16 %v546, %v542
  %v643 = vpack.c.b16 %v547, %v543
  %v644 = vpack.c.b16 %v548, %v544
  %v645 = vpack.c.b16 %v553, %v549
  %v646 = vpack.c.b16 %v554, %v550
  %v647 = vpack.c.b16 %v555, %v551
  %v648 = vpack.c.b16 %v556, %v552
  %v649 = vpack.c.b16 %v561, %v557
  %v650 = vpack.c.b16 %v562, %v558
  %v651 = vpack.c.b16 %v563, %v559
  %v652 = vpack.c.b16 %v564, %v560
  %v653 = vpack.c.b16 %v569, %v565
  %v654 = vpack.c.b16 %v570, %v566
  %v655 = vpack.c.b16 %v571, %v567
  %v656 = vpack.c.b16 %v572, %v568
  %v657 = vpack.c.b16 %v577, %v573
  %v658 = vpack.c.b16 %v578, %v574
  %v659 = vpack.c.b16 %v579, %v575
  %v660 = vpack.c.b16 %v580, %v576
  %v661 = vpack.c.b16 %v585, %v581
  %v662 = vpack.c.b16 %v586, %v582
  %v663 = vpack.c.b16 %v587, %v583
  %v664 = vpack.c.b16 %v588, %v584
  %v665 = vpack.c.b16 %v593, %v589
  %v666 = vpack.c.b16 %v594, %v590
  %v667 = vpack.c.b16 %v595, %v591
  %v668 = vpack.c.b16 %v596, %v592
  %v669 = vpack.c.b16 %v601, %v597
  %v670 = vpack.c.b16 %v602, %v598
  %v671 = vpack.c.b16 %v603, %v599
  %v672 = vpack.c.b16 %v604, %v600
  %v673 = vpack.c.b16 %v609, %v605
  %v674 = vpack.c.b16 %v610, %v606
  %v675 = vpack.c.b16 %v611, %v607
  %v676 = vpack.c.b16 %v612, %v608
  %741 = vmatpush.bf16.msra.mxu0 %v641
  %742 = vmatpush.bf16.msra.mxu0 %v637
  %743 = vmatpush.bf16.msra.mxu0 %v633
  %744 = vmatpush.bf16.msra.mxu0 %v629
  %745 = vmatpush.bf16.msra.mxu0 %v625
  %746 = vmatpush.bf16.msra.mxu0 %v621
  %747 = vmatpush.bf16.msra.mxu0 %v617
  %748 = vmatpush.bf16.msra.mxu0 %v613
  %749 = vmatmul.bf16.gmra.mxu0 %v345
  %v750 = vpop.f32.mrf.mxu0
  %v751 = vadd.f32 %v413, %v750
  %v752 = vpop.f32.mrf.mxu0
  %753 = vdwg.mxu0
  %754 = vmatpush.bf16.msra.mxu0 %v673
  %755 = vmatpush.bf16.msra.mxu0 %v669
  %756 = vmatpush.bf16.msra.mxu0 %v665
  %757 = vmatpush.bf16.msra.mxu0 %v661
  %758 = vmatpush.bf16.msra.mxu0 %v657
  %759 = vmatpush.bf16.msra.mxu0 %v653
  %760 = vmatpush.bf16.msra.mxu0 %v649
  %761 = vmatpush.bf16.msra.mxu0 %v645
  %762 = vmatmul.bf16.gmra.mxu0 %v346
  %v763 = vpop.f32.mrf.mxu0
  %v764 = vadd.f32 %v751, %v763
  %v765 = vpop.f32.mrf.mxu0
  %766 = vdwg.mxu0
  %767 = vmatpush.bf16.msra.mxu0 %v642
  %768 = vmatpush.bf16.msra.mxu0 %v638
  %769 = vmatpush.bf16.msra.mxu0 %v634
  %770 = vmatpush.bf16.msra.mxu0 %v630
  %771 = vmatpush.bf16.msra.mxu0 %v626
  %772 = vmatpush.bf16.msra.mxu0 %v622
  %773 = vmatpush.bf16.msra.mxu0 %v618
  %774 = vmatpush.bf16.msra.mxu0 %v614
  %775 = vmatmul.bf16.gmra.mxu0 %v345
  %v776 = vpop.f32.mrf.mxu0
  %v777 = vadd.f32 %v414, %v776
  %v778 = vpop.f32.mrf.mxu0
  %779 = vdwg.mxu0
  %780 = vmatpush.bf16.msra.mxu0 %v674
  %781 = vmatpush.bf16.msra.mxu0 %v670
  %782 = vmatpush.bf16.msra.mxu0 %v666
  %783 = vmatpush.bf16.msra.mxu0 %v662
  %784 = vmatpush.bf16.msra.mxu0 %v658
  %785 = vmatpush.bf16.msra.mxu0 %v654
  %786 = vmatpush.bf16.msra.mxu0 %v650
  %787 = vmatpush.bf16.msra.mxu0 %v646
  %788 = vmatmul.bf16.gmra.mxu0 %v346
  %v789 = vpop.f32.mrf.mxu0
  %v790 = vadd.f32 %v777, %v789
  %v791 = vpop.f32.mrf.mxu0
  %792 = vdwg.mxu0
  %793 = vmatpush.bf16.msra.mxu0 %v643
  %794 = vmatpush.bf16.msra.mxu0 %v639
  %795 = vmatpush.bf16.msra.mxu0 %v635
  %796 = vmatpush.bf16.msra.mxu0 %v631
  %797 = vmatpush.bf16.msra.mxu0 %v627
  %798 = vmatpush.bf16.msra.mxu0 %v623
  %799 = vmatpush.bf16.msra.mxu0 %v619
  %800 = vmatpush.bf16.msra.mxu0 %v615
  %801 = vmatmul.bf16.gmra.mxu0 %v345
  %v802 = vpop.f32.mrf.mxu0
  %v803 = vadd.f32 %v415, %v802
  %v804 = vpop.f32.mrf.mxu0
  %805 = vdwg.mxu0
  %806 = vmatpush.bf16.msra.mxu0 %v675
  %807 = vmatpush.bf16.msra.mxu0 %v671
  %808 = vmatpush.bf16.msra.mxu0 %v667
  %809 = vmatpush.bf16.msra.mxu0 %v663
  %810 = vmatpush.bf16.msra.mxu0 %v659
  %811 = vmatpush.bf16.msra.mxu0 %v655
  %812 = vmatpush.bf16.msra.mxu0 %v651
  %813 = vmatpush.bf16.msra.mxu0 %v647
  %814 = vmatmul.bf16.gmra.mxu0 %v346
  %v815 = vpop.f32.mrf.mxu0
  %v816 = vadd.f32 %v803, %v815
  %v817 = vpop.f32.mrf.mxu0
  %818 = vdwg.mxu0
  %819 = vmatpush.bf16.msra.mxu0 %v644
  %820 = vmatpush.bf16.msra.mxu0 %v640
  %821 = vmatpush.bf16.msra.mxu0 %v636
  %822 = vmatpush.bf16.msra.mxu0 %v632
  %823 = vmatpush.bf16.msra.mxu0 %v628
  %824 = vmatpush.bf16.msra.mxu0 %v624
  %825 = vmatpush.bf16.msra.mxu0 %v620
  %826 = vmatpush.bf16.msra.mxu0 %v616
  %827 = vmatmul.bf16.gmra.mxu0 %v345
  %v828 = vpop.f32.mrf.mxu0
  %v829 = vadd.f32 %v416, %v828
  %v830 = vpop.f32.mrf.mxu0
  %831 = vdwg.mxu0
  %832 = vmatpush.bf16.msra.mxu0 %v676
  %833 = vmatpush.bf16.msra.mxu0 %v672
  %834 = vmatpush.bf16.msra.mxu0 %v668
  %835 = vmatpush.bf16.msra.mxu0 %v664
  %836 = vmatpush.bf16.msra.mxu0 %v660
  %837 = vmatpush.bf16.msra.mxu0 %v656
  %838 = vmatpush.bf16.msra.mxu0 %v652
  %839 = vmatpush.bf16.msra.mxu0 %v648
  %840 = vmatmul.bf16.gmra.mxu0 %v346
  %v841 = vpop.f32.mrf.mxu0
  %v842 = vadd.f32 %v829, %v841
  %v843 = vpop.f32.mrf.mxu0
  %844 = vdwg.mxu0
  %v845 = vxor.u32 %v764, 2147483648
  %v846 = vmul.f32 %v845, 1.442695
  %v847 = vpow.pop %v846
  %v848 = vadd.f32 %v847, 1.0
  %v849 = vrcp.pop %v848
  %v850 = vmul.f32 %v848, %v849
  %v851 = vsub.f32 1.0, %v850
  %v852 = vmul.f32 %v849, %v851
  %v853 = vadd.f32 %v849, %v852
  %vm854 = vweird.f32 %v848
  %vm855 = vweird.f32 %v849
  %vm856 = vmor %vm854, %vm855
  %v857 = vsel %vm856, %v849, %v853
  %v858 = vand.u32 2147483647, %v848
  %vm859 = vcmp.eq.f32.partialorder %v858, 8.507059e+37
  %v860 = vand.u32 %v848, 2147483648
  %v861 = vor.u32 1.1754944e-38, %v860
  %v862 = vsel %vm859, %v861, %v857
  %v863 = vmul.f32 1.0, %v862
  %v864 = vxor.u32 %v790, 2147483648
  %v865 = vmul.f32 %v864, 1.442695
  %v866 = vpow.pop %v865
  %v867 = vadd.f32 %v866, 1.0
  %v868 = vrcp.pop %v867
  %v869 = vmul.f32 %v867, %v868
  %v870 = vsub.f32 1.0, %v869
  %v871 = vmul.f32 %v868, %v870
  %v872 = vadd.f32 %v868, %v871
  %vm873 = vweird.f32 %v867
  %vm874 = vweird.f32 %v868
  %vm875 = vmor %vm873, %vm874
  %v876 = vsel %vm875, %v868, %v872
  %v877 = vand.u32 2147483647, %v867
  %vm878 = vcmp.eq.f32.partialorder %v877, 8.507059e+37
  %v879 = vand.u32 %v867, 2147483648
  %v880 = vor.u32 1.1754944e-38, %v879
  %v881 = vsel %vm878, %v880, %v876
  %v882 = vmul.f32 1.0, %v881
  %v883 = vtanh.pop %v816
  %v884 = vxor.u32 %v842, 2147483648
  %v885 = vmul.f32 %v884, 1.442695
  %v886 = vpow.pop %v885
  %v887 = vadd.f32 %v886, 1.0
  %v888 = vrcp.pop %v887
  %v889 = vmul.f32 %v887, %v888
  %v890 = vsub.f32 1.0, %v889
  %v891 = vmul.f32 %v888, %v890
  %v892 = vadd.f32 %v888, %v891
  %vm893 = vweird.f32 %v887
  %vm894 = vweird.f32 %v888
  %vm895 = vmor %vm893, %vm894
  %v896 = vsel %vm895, %v888, %v892
  %v897 = vand.u32 2147483647, %v887
  %vm898 = vcmp.eq.f32.partialorder %v897, 8.507059e+37
  %v899 = vand.u32 %v887, 2147483648
  %v900 = vor.u32 1.1754944e-38, %v899
  %v901 = vsel %vm898, %v900, %v896
  %v902 = vmul.f32 1.0, %v901
  %v903 = vmul.f32 %v882, 0.0
  %v904 = vmul.f32 %v863, %v883
  %v905 = vadd.f32 %v903, %v904
  %v906 = vtanh.pop %v905
  %v907 = vmul.f32 %v902, %v906
  %v908 = vpack.c.bf16 %v907, %v907
  %v909 = vld [vmem:[%s4] sm:$0xff]
  %v910 = vld [vmem:[%s4 + $0x8] sm:$0xff]
  %v911 = vld [vmem:[%s4 + $0x10] sm:$0xff]
  %v912 = vld [vmem:[%s4 + $0x18] sm:$0xff]
  %v913 = vld [vmem:[%s4 + $0x20] sm:$0xff]
  %v914 = vld [vmem:[%s4 + $0x28] sm:$0xff]
  %v915 = vld [vmem:[%s4 + $0x30] sm:$0xff]
  %v916 = vld [vmem:[%s4 + $0x38] sm:$0xff]
  %v917 = vld [vmem:[%s4 + $0x40] sm:$0xff]
  %v918 = vld [vmem:[%s4 + $0x48] sm:$0xff]
  %v919 = vld [vmem:[%s4 + $0x50] sm:$0xff]
  %v920 = vld [vmem:[%s4 + $0x58] sm:$0xff]
  %v921 = vld [vmem:[%s4 + $0x60] sm:$0xff]
  %v922 = vld [vmem:[%s4 + $0x68] sm:$0xff]
  %v923 = vld [vmem:[%s4 + $0x70] sm:$0xff]
  %v924 = vld [vmem:[%s4 + $0x78] sm:$0xff]
  %v925 = vld [vmem:[%s4 + $0x80] sm:$0xff]
  %v926 = vld [vmem:[%s4 + $0x88] sm:$0xff]
  %v927 = vld [vmem:[%s4 + $0x90] sm:$0xff]
  %v928 = vld [vmem:[%s4 + $0x98] sm:$0xff]
  %v929 = vld [vmem:[%s4 + $0xa0] sm:$0xff]
  %v930 = vld [vmem:[%s4 + $0xa8] sm:$0xff]
  %v931 = vld [vmem:[%s4 + $0xb0] sm:$0xff]
  %v932 = vld [vmem:[%s4 + $0xb8] sm:$0xff]
  %v933 = vld [vmem:[%s4 + $0xc0] sm:$0xff]
  %v934 = vld [vmem:[%s4 + $0xc8] sm:$0xff]
  %v935 = vld [vmem:[%s4 + $0xd0] sm:$0xff]
  %v936 = vld [vmem:[%s4 + $0xd8] sm:$0xff]
  %v937 = vld [vmem:[%s4 + $0xe0] sm:$0xff]
  %v938 = vld [vmem:[%s4 + $0xe8] sm:$0xff]
  %v939 = vld [vmem:[%s4 + $0xf0] sm:$0xff]
  %v940 = vld [vmem:[%s4 + $0xf8] sm:$0xff]
  %v941 = vld [vmem:[%s4 + $0x100] sm:$0xff]
  %v942 = vld [vmem:[%s4 + $0x108] sm:$0xff]
  %v943 = vld [vmem:[%s4 + $0x110] sm:$0xff]
  %v944 = vld [vmem:[%s4 + $0x118] sm:$0xff]
  %v945 = vld [vmem:[%s4 + $0x120] sm:$0xff]
  %v946 = vld [vmem:[%s4 + $0x128] sm:$0xff]
  %v947 = vld [vmem:[%s4 + $0x130] sm:$0xff]
  %v948 = vld [vmem:[%s4 + $0x138] sm:$0xff]
  %v949 = vld [vmem:[%s4 + $0x140] sm:$0xff]
  %v950 = vld [vmem:[%s4 + $0x148] sm:$0xff]
  %v951 = vld [vmem:[%s4 + $0x150] sm:$0xff]
  %v952 = vld [vmem:[%s4 + $0x158] sm:$0xff]
  %v953 = vld [vmem:[%s4 + $0x160] sm:$0xff]
  %v954 = vld [vmem:[%s4 + $0x168] sm:$0xff]
  %v955 = vld [vmem:[%s4 + $0x170] sm:$0xff]
  %v956 = vld [vmem:[%s4 + $0x178] sm:$0xff]
  %v957 = vld [vmem:[%s4 + $0x180] sm:$0xff]
  %v958 = vld [vmem:[%s4 + $0x188] sm:$0xff]
  %v959 = vld [vmem:[%s4 + $0x190] sm:$0xff]
  %v960 = vld [vmem:[%s4 + $0x198] sm:$0xff]
  %v961 = vld [vmem:[%s4 + $0x1a0] sm:$0xff]
  %v962 = vld [vmem:[%s4 + $0x1a8] sm:$0xff]
  %v963 = vld [vmem:[%s4 + $0x1b0] sm:$0xff]
  %v964 = vld [vmem:[%s4 + $0x1b8] sm:$0xff]
  %v965 = vld [vmem:[%s4 + $0x1c0] sm:$0xff]
  %v966 = vld [vmem:[%s4 + $0x1c8] sm:$0xff]
  %v967 = vld [vmem:[%s4 + $0x1d0] sm:$0xff]
  %v968 = vld [vmem:[%s4 + $0x1d8] sm:$0xff]
  %v969 = vld [vmem:[%s4 + $0x1e0] sm:$0xff]
  %v970 = vld [vmem:[%s4 + $0x1e8] sm:$0xff]
  %v971 = vld [vmem:[%s4 + $0x1f0] sm:$0xff]
  %v972 = vld [vmem:[%s4 + $0x1f8] sm:$0xff]
  %v973 = vld [vmem:[%s5] sm:$0xf]
  %v975 = vperm.slane %v973, 0
  %v976 = vperm.slane %v973, 1
  %v977 = vperm.slane %v973, 2
  %v978 = vperm.slane %v973, 3
  %v1047 = vunpack.c.l.b16 %v909
  %v1048 = vunpack.c.h.b16 %v909
  %v1049 = vunpack.c.l.b16 %v910
  %v1050 = vunpack.c.h.b16 %v910
  %v1051 = vunpack.c.l.b16 %v911
  %v1052 = vunpack.c.h.b16 %v911
  %v1053 = vunpack.c.l.b16 %v912
  %v1054 = vunpack.c.h.b16 %v912
  %v1055 = vunpack.c.l.b16 %v913
  %v1056 = vunpack.c.h.b16 %v913
  %v1057 = vunpack.c.l.b16 %v914
  %v1058 = vunpack.c.h.b16 %v914
  %v1059 = vunpack.c.l.b16 %v915
  %v1060 = vunpack.c.h.b16 %v915
  %v1061 = vunpack.c.l.b16 %v916
  %v1062 = vunpack.c.h.b16 %v916
  %v1063 = vunpack.c.l.b16 %v917
  %v1064 = vunpack.c.h.b16 %v917
  %v1065 = vunpack.c.l.b16 %v918
  %v1066 = vunpack.c.h.b16 %v918
  %v1067 = vunpack.c.l.b16 %v919
  %v1068 = vunpack.c.h.b16 %v919
  %v1069 = vunpack.c.l.b16 %v920
  %v1070 = vunpack.c.h.b16 %v920
  %v1071 = vunpack.c.l.b16 %v921
  %v1072 = vunpack.c.h.b16 %v921
  %v1073 = vunpack.c.l.b16 %v922
  %v1074 = vunpack.c.h.b16 %v922
  %v1075 = vunpack.c.l.b16 %v923
  %v1076 = vunpack.c.h.b16 %v923
  %v1077 = vunpack.c.l.b16 %v924
  %v1078 = vunpack.c.h.b16 %v924
  %v1079 = vunpack.c.l.b16 %v925
  %v1080 = vunpack.c.h.b16 %v925
  %v1081 = vunpack.c.l.b16 %v926
  %v1082 = vunpack.c.h.b16 %v926
  %v1083 = vunpack.c.l.b16 %v927
  %v1084 = vunpack.c.h.b16 %v927
  %v1085 = vunpack.c.l.b16 %v928
  %v1086 = vunpack.c.h.b16 %v928
  %v1087 = vunpack.c.l.b16 %v929
  %v1088 = vunpack.c.h.b16 %v929
  %v1089 = vunpack.c.l.b16 %v930
  %v1090 = vunpack.c.h.b16 %v930
  %v1091 = vunpack.c.l.b16 %v931
  %v1092 = vunpack.c.h.b16 %v931
  %v1093 = vunpack.c.l.b16 %v932
  %v1094 = vunpack.c.h.b16 %v932
  %v1095 = vunpack.c.l.b16 %v933
  %v1096 = vunpack.c.h.b16 %v933
  %v1097 = vunpack.c.l.b16 %v934
  %v1098 = vunpack.c.h.b16 %v934
  %v1099 = vunpack.c.l.b16 %v935
  %v1100 = vunpack.c.h.b16 %v935
  %v1101 = vunpack.c.l.b16 %v936
  %v1102 = vunpack.c.h.b16 %v936
  %v1103 = vunpack.c.l.b16 %v937
  %v1104 = vunpack.c.h.b16 %v937
  %v1105 = vunpack.c.l.b16 %v938
  %v1106 = vunpack.c.h.b16 %v938
  %v1107 = vunpack.c.l.b16 %v939
  %v1108 = vunpack.c.h.b16 %v939
  %v1109 = vunpack.c.l.b16 %v940
  %v1110 = vunpack.c.h.b16 %v940
  %v1111 = vunpack.c.l.b16 %v941
  %v1112 = vunpack.c.h.b16 %v941
  %v1113 = vunpack.c.l.b16 %v942
  %v1114 = vunpack.c.h.b16 %v942
  %v1115 = vunpack.c.l.b16 %v943
  %v1116 = vunpack.c.h.b16 %v943
  %v1117 = vunpack.c.l.b16 %v944
  %v1118 = vunpack.c.h.b16 %v944
  %v1119 = vunpack.c.l.b16 %v945
  %v1120 = vunpack.c.h.b16 %v945
  %v1121 = vunpack.c.l.b16 %v946
  %v1122 = vunpack.c.h.b16 %v946
  %v1123 = vunpack.c.l.b16 %v947
  %v1124 = vunpack.c.h.b16 %v947
  %v1125 = vunpack.c.l.b16 %v948
  %v1126 = vunpack.c.h.b16 %v948
  %v1127 = vunpack.c.l.b16 %v949
  %v1128 = vunpack.c.h.b16 %v949
  %v1129 = vunpack.c.l.b16 %v950
  %v1130 = vunpack.c.h.b16 %v950
  %v1131 = vunpack.c.l.b16 %v951
  %v1132 = vunpack.c.h.b16 %v951
  %v1133 = vunpack.c.l.b16 %v952
  %v1134 = vunpack.c.h.b16 %v952
  %v1135 = vunpack.c.l.b16 %v953
  %v1136 = vunpack.c.h.b16 %v953
  %v1137 = vunpack.c.l.b16 %v954
  %v1138 = vunpack.c.h.b16 %v954
  %v1139 = vunpack.c.l.b16 %v955
  %v1140 = vunpack.c.h.b16 %v955
  %v1141 = vunpack.c.l.b16 %v956
  %v1142 = vunpack.c.h.b16 %v956
  %v1143 = vunpack.c.l.b16 %v957
  %v1144 = vunpack.c.h.b16 %v957
  %v1145 = vunpack.c.l.b16 %v958
  %v1146 = vunpack.c.h.b16 %v958
  %v1147 = vunpack.c.l.b16 %v959
  %v1148 = vunpack.c.h.b16 %v959
  %v1149 = vunpack.c.l.b16 %v960
  %v1150 = vunpack.c.h.b16 %v960
  %v1151 = vunpack.c.l.b16 %v961
  %v1152 = vunpack.c.h.b16 %v961
  %v1153 = vunpack.c.l.b16 %v962
  %v1154 = vunpack.c.h.b16 %v962
  %v1155 = vunpack.c.l.b16 %v963
  %v1156 = vunpack.c.h.b16 %v963
  %v1157 = vunpack.c.l.b16 %v964
  %v1158 = vunpack.c.h.b16 %v964
  %v1159 = vunpack.c.l.b16 %v965
  %v1160 = vunpack.c.h.b16 %v965
  %v1161 = vunpack.c.l.b16 %v966
  %v1162 = vunpack.c.h.b16 %v966
  %v1163 = vunpack.c.l.b16 %v967
  %v1164 = vunpack.c.h.b16 %v967
  %v1165 = vunpack.c.l.b16 %v968
  %v1166 = vunpack.c.h.b16 %v968
  %v1167 = vunpack.c.l.b16 %v969
  %v1168 = vunpack.c.h.b16 %v969
  %v1169 = vunpack.c.l.b16 %v970
  %v1170 = vunpack.c.h.b16 %v970
  %v1171 = vunpack.c.l.b16 %v971
  %v1172 = vunpack.c.h.b16 %v971
  %v1173 = vunpack.c.l.b16 %v972
  %v1174 = vunpack.c.h.b16 %v972
  %v1175 = vpack.c.b16 %v1051, %v1047
  %v1176 = vpack.c.b16 %v1052, %v1048
  %v1177 = vpack.c.b16 %v1053, %v1049
  %v1178 = vpack.c.b16 %v1054, %v1050
  %v1179 = vpack.c.b16 %v1059, %v1055
  %v1180 = vpack.c.b16 %v1060, %v1056
  %v1181 = vpack.c.b16 %v1061, %v1057
  %v1182 = vpack.c.b16 %v1062, %v1058
  %v1183 = vpack.c.b16 %v1067, %v1063
  %v1184 = vpack.c.b16 %v1068, %v1064
  %v1185 = vpack.c.b16 %v1069, %v1065
  %v1186 = vpack.c.b16 %v1070, %v1066
  %v1187 = vpack.c.b16 %v1075, %v1071
  %v1188 = vpack.c.b16 %v1076, %v1072
  %v1189 = vpack.c.b16 %v1077, %v1073
  %v1190 = vpack.c.b16 %v1078, %v1074
  %v1191 = vpack.c.b16 %v1083, %v1079
  %v1192 = vpack.c.b16 %v1084, %v1080
  %v1193 = vpack.c.b16 %v1085, %v1081
  %v1194 = vpack.c.b16 %v1086, %v1082
  %v1195 = vpack.c.b16 %v1091, %v1087
  %v1196 = vpack.c.b16 %v1092, %v1088
  %v1197 = vpack.c.b16 %v1093, %v1089
  %v1198 = vpack.c.b16 %v1094, %v1090
  %v1199 = vpack.c.b16 %v1099, %v1095
  %v1200 = vpack.c.b16 %v1100, %v1096
  %v1201 = vpack.c.b16 %v1101, %v1097
  %v1202 = vpack.c.b16 %v1102, %v1098
  %v1203 = vpack.c.b16 %v1107, %v1103
  %v1204 = vpack.c.b16 %v1108, %v1104
  %v1205 = vpack.c.b16 %v1109, %v1105
  %v1206 = vpack.c.b16 %v1110, %v1106
  %v1207 = vpack.c.b16 %v1115, %v1111
  %v1208 = vpack.c.b16 %v1116, %v1112
  %v1209 = vpack.c.b16 %v1117, %v1113
  %v1210 = vpack.c.b16 %v1118, %v1114
  %v1211 = vpack.c.b16 %v1123, %v1119
  %v1212 = vpack.c.b16 %v1124, %v1120
  %v1213 = vpack.c.b16 %v1125, %v1121
  %v1214 = vpack.c.b16 %v1126, %v1122
  %v1215 = vpack.c.b16 %v1131, %v1127
  %v1216 = vpack.c.b16 %v1132, %v1128
  %v1217 = vpack.c.b16 %v1133, %v1129
  %v1218 = vpack.c.b16 %v1134, %v1130
  %v1219 = vpack.c.b16 %v1139, %v1135
  %v1220 = vpack.c.b16 %v1140, %v1136
  %v1221 = vpack.c.b16 %v1141, %v1137
  %v1222 = vpack.c.b16 %v1142, %v1138
  %v1223 = vpack.c.b16 %v1147, %v1143
  %v1224 = vpack.c.b16 %v1148, %v1144
  %v1225 = vpack.c.b16 %v1149, %v1145
  %v1226 = vpack.c.b16 %v1150, %v1146
  %v1227 = vpack.c.b16 %v1155, %v1151
  %v1228 = vpack.c.b16 %v1156, %v1152
  %v1229 = vpack.c.b16 %v1157, %v1153
  %v1230 = vpack.c.b16 %v1158, %v1154
  %v1231 = vpack.c.b16 %v1163, %v1159
  %v1232 = vpack.c.b16 %v1164, %v1160
  %v1233 = vpack.c.b16 %v1165, %v1161
  %v1234 = vpack.c.b16 %v1166, %v1162
  %v1235 = vpack.c.b16 %v1171, %v1167
  %v1236 = vpack.c.b16 %v1172, %v1168
  %v1237 = vpack.c.b16 %v1173, %v1169
  %v1238 = vpack.c.b16 %v1174, %v1170
  %1303 = vmatpush.bf16.msra.mxu0 %v1203
  %1304 = vmatpush.bf16.msra.mxu0 %v1199
  %1305 = vmatpush.bf16.msra.mxu0 %v1195
  %1306 = vmatpush.bf16.msra.mxu0 %v1191
  %1307 = vmatpush.bf16.msra.mxu0 %v1187
  %1308 = vmatpush.bf16.msra.mxu0 %v1183
  %1309 = vmatpush.bf16.msra.mxu0 %v1179
  %1310 = vmatpush.bf16.msra.mxu0 %v1175
  %1311 = vmatmul.bf16.gmra.mxu0 %v908
  %v1312 = vpop.f32.mrf.mxu0
  %v1313 = vadd.f32 %v975, %v1312
  %v1314 = vpop.f32.mrf.mxu0
  %1315 = vdwg.mxu0
  %1316 = vmatpush.bf16.msra.mxu0 %v1235
  %1317 = vmatpush.bf16.msra.mxu0 %v1231
  %1318 = vmatpush.bf16.msra.mxu0 %v1227
  %1319 = vmatpush.bf16.msra.mxu0 %v1223
  %1320 = vmatpush.bf16.msra.mxu0 %v1219
  %1321 = vmatpush.bf16.msra.mxu0 %v1215
  %1322 = vmatpush.bf16.msra.mxu0 %v1211
  %1323 = vmatpush.bf16.msra.mxu0 %v1207
  %1324 = vmatmul.bf16.gmra.mxu0 %v346
  %v1325 = vpop.f32.mrf.mxu0
  %v1326 = vadd.f32 %v1313, %v1325
  %v1327 = vpop.f32.mrf.mxu0
  %1328 = vdwg.mxu0
  %1329 = vmatpush.bf16.msra.mxu0 %v1204
  %1330 = vmatpush.bf16.msra.mxu0 %v1200
  %1331 = vmatpush.bf16.msra.mxu0 %v1196
  %1332 = vmatpush.bf16.msra.mxu0 %v1192
  %1333 = vmatpush.bf16.msra.mxu0 %v1188
  %1334 = vmatpush.bf16.msra.mxu0 %v1184
  %1335 = vmatpush.bf16.msra.mxu0 %v1180
  %1336 = vmatpush.bf16.msra.mxu0 %v1176
  %1337 = vmatmul.bf16.gmra.mxu0 %v908
  %v1338 = vpop.f32.mrf.mxu0
  %v1339 = vadd.f32 %v976, %v1338
  %v1340 = vpop.f32.mrf.mxu0
  %1341 = vdwg.mxu0
  %1342 = vmatpush.bf16.msra.mxu0 %v1236
  %1343 = vmatpush.bf16.msra.mxu0 %v1232
  %1344 = vmatpush.bf16.msra.mxu0 %v1228
  %1345 = vmatpush.bf16.msra.mxu0 %v1224
  %1346 = vmatpush.bf16.msra.mxu0 %v1220
  %1347 = vmatpush.bf16.msra.mxu0 %v1216
  %1348 = vmatpush.bf16.msra.mxu0 %v1212
  %1349 = vmatpush.bf16.msra.mxu0 %v1208
  %1350 = vmatmul.bf16.gmra.mxu0 %v346
  %v1351 = vpop.f32.mrf.mxu0
  %v1352 = vadd.f32 %v1339, %v1351
  %v1353 = vpop.f32.mrf.mxu0
  %1354 = vdwg.mxu0
  %1355 = vmatpush.bf16.msra.mxu0 %v1205
  %1356 = vmatpush.bf16.msra.mxu0 %v1201
  %1357 = vmatpush.bf16.msra.mxu0 %v1197
  %1358 = vmatpush.bf16.msra.mxu0 %v1193
  %1359 = vmatpush.bf16.msra.mxu0 %v1189
  %1360 = vmatpush.bf16.msra.mxu0 %v1185
  %1361 = vmatpush.bf16.msra.mxu0 %v1181
  %1362 = vmatpush.bf16.msra.mxu0 %v1177
  %1363 = vmatmul.bf16.gmra.mxu0 %v908
  %v1364 = vpop.f32.mrf.mxu0
  %v1365 = vadd.f32 %v977, %v1364
  %v1366 = vpop.f32.mrf.mxu0
  %1367 = vdwg.mxu0
  %1368 = vmatpush.bf16.msra.mxu0 %v1237
  %1369 = vmatpush.bf16.msra.mxu0 %v1233
  %1370 = vmatpush.bf16.msra.mxu0 %v1229
  %1371 = vmatpush.bf16.msra.mxu0 %v1225
  %1372 = vmatpush.bf16.msra.mxu0 %v1221
  %1373 = vmatpush.bf16.msra.mxu0 %v1217
  %1374 = vmatpush.bf16.msra.mxu0 %v1213
  %1375 = vmatpush.bf16.msra.mxu0 %v1209
  %1376 = vmatmul.bf16.gmra.mxu0 %v346
  %v1377 = vpop.f32.mrf.mxu0
  %v1378 = vadd.f32 %v1365, %v1377
  %v1379 = vpop.f32.mrf.mxu0
  %1380 = vdwg.mxu0
  %1381 = vmatpush.bf16.msra.mxu0 %v1206
  %1382 = vmatpush.bf16.msra.mxu0 %v1202
  %1383 = vmatpush.bf16.msra.mxu0 %v1198
  %1384 = vmatpush.bf16.msra.mxu0 %v1194
  %1385 = vmatpush.bf16.msra.mxu0 %v1190
  %1386 = vmatpush.bf16.msra.mxu0 %v1186
  %1387 = vmatpush.bf16.msra.mxu0 %v1182
  %1388 = vmatpush.bf16.msra.mxu0 %v1178
  %1389 = vmatmul.bf16.gmra.mxu0 %v908
  %v1390 = vpop.f32.mrf.mxu0
  %v1391 = vadd.f32 %v978, %v1390
  %v1392 = vpop.f32.mrf.mxu0
  %1393 = vdwg.mxu0
  %1394 = vmatpush.bf16.msra.mxu0 %v1238
  %1395 = vmatpush.bf16.msra.mxu0 %v1234
  %1396 = vmatpush.bf16.msra.mxu0 %v1230
  %1397 = vmatpush.bf16.msra.mxu0 %v1226
  %1398 = vmatpush.bf16.msra.mxu0 %v1222
  %1399 = vmatpush.bf16.msra.mxu0 %v1218
  %1400 = vmatpush.bf16.msra.mxu0 %v1214
  %1401 = vmatpush.bf16.msra.mxu0 %v1210
  %1402 = vmatmul.bf16.gmra.mxu0 %v346
  %v1403 = vpop.f32.mrf.mxu0
  %v1404 = vadd.f32 %v1391, %v1403
  %v1405 = vpop.f32.mrf.mxu0
  %1406 = vdwg.mxu0
  %v1407 = vxor.u32 %v1326, 2147483648
  %v1408 = vmul.f32 %v1407, 1.442695
  %v1409 = vpow.pop %v1408
  %v1410 = vadd.f32 %v1409, 1.0
  %v1411 = vrcp.pop %v1410
  %v1412 = vmul.f32 %v1410, %v1411
  %v1413 = vsub.f32 1.0, %v1412
  %v1414 = vmul.f32 %v1411, %v1413
  %v1415 = vadd.f32 %v1411, %v1414
  %vm1416 = vweird.f32 %v1410
  %vm1417 = vweird.f32 %v1411
  %vm1418 = vmor %vm1416, %vm1417
  %v1419 = vsel %vm1418, %v1411, %v1415
  %v1420 = vand.u32 2147483647, %v1410
  %vm1421 = vcmp.eq.f32.partialorder %v1420, 8.507059e+37
  %v1422 = vand.u32 %v1410, 2147483648
  %v1423 = vor.u32 1.1754944e-38, %v1422
  %v1424 = vsel %vm1421, %v1423, %v1419
  %v1425 = vmul.f32 1.0, %v1424
  %v1426 = vxor.u32 %v1352, 2147483648
  %v1427 = vmul.f32 %v1426, 1.442695
  %v1428 = vpow.pop %v1427
  %v1429 = vadd.f32 %v1428, 1.0
  %v1430 = vrcp.pop %v1429
  %v1431 = vmul.f32 %v1429, %v1430
  %v1432 = vsub.f32 1.0, %v1431
  %v1433 = vmul.f32 %v1430, %v1432
  %v1434 = vadd.f32 %v1430, %v1433
  %vm1435 = vweird.f32 %v1429
  %vm1436 = vweird.f32 %v1430
  %vm1437 = vmor %vm1435, %vm1436
  %v1438 = vsel %vm1437, %v1430, %v1434
  %v1439 = vand.u32 2147483647, %v1429
  %vm1440 = vcmp.eq.f32.partialorder %v1439, 8.507059e+37
  %v1441 = vand.u32 %v1429, 2147483648
  %v1442 = vor.u32 1.1754944e-38, %v1441
  %v1443 = vsel %vm1440, %v1442, %v1438
  %v1444 = vmul.f32 1.0, %v1443
  %v1445 = vtanh.pop %v1378
  %v1446 = vxor.u32 %v1404, 2147483648
  %v1447 = vmul.f32 %v1446, 1.442695
  %v1448 = vpow.pop %v1447
  %v1449 = vadd.f32 %v1448, 1.0
  %v1450 = vrcp.pop %v1449
  %v1451 = vmul.f32 %v1449, %v1450
  %v1452 = vsub.f32 1.0, %v1451
  %v1453 = vmul.f32 %v1450, %v1452
  %v1454 = vadd.f32 %v1450, %v1453
  %vm1455 = vweird.f32 %v1449
  %vm1456 = vweird.f32 %v1450
  %vm1457 = vmor %vm1455, %vm1456
  %v1458 = vsel %vm1457, %v1450, %v1454
  %v1459 = vand.u32 2147483647, %v1449
  %vm1460 = vcmp.eq.f32.partialorder %v1459, 8.507059e+37
  %v1461 = vand.u32 %v1449, 2147483648
  %v1462 = vor.u32 1.1754944e-38, %v1461
  %v1463 = vsel %vm1460, %v1462, %v1458
  %v1464 = vmul.f32 1.0, %v1463
  %v1465 = vmul.f32 %v1444, 0.0
  %v1466 = vmul.f32 %v1425, %v1445
  %v1467 = vadd.f32 %v1465, %v1466
  %v1468 = vtanh.pop %v1467
  %v1469 = vmul.f32 %v1464, %v1468
  %s1470 = scalar_lea.vmem %s0, 32
  %v1471 = vld [vmem:[%s1470] sm:$0xff]
  %v1472 = vld [vmem:[%s1470 + $0x8] sm:$0xff]
  %v1473 = vld [vmem:[%s1470 + $0x10] sm:$0xff]
  %v1474 = vld [vmem:[%s1470 + $0x18] sm:$0xff]
  %1475 = vmatpush.bf16.msra.mxu0 %v190
  %1476 = vmatpush.bf16.msra.mxu0 %v186
  %1477 = vmatpush.bf16.msra.mxu0 %v182
  %1478 = vmatpush.bf16.msra.mxu0 %v178
  %1479 = vmatpush.bf16.msra.mxu0 %v174
  %1480 = vmatpush.bf16.msra.mxu0 %v170
  %1481 = vmatpush.bf16.msra.mxu0 %v166
  %1482 = vmatpush.bf16.msra.mxu0 %v162
  %1483 = vmatmul.bf16.gmra.mxu0 %v345
  %v1484 = vpop.f32.mrf.mxu0
  %v1485 = vadd.f32 0.0, %v1484
  %v1486 = vpop.f32.mrf.mxu0
  %1487 = vdwg.mxu0
  %1488 = vmatpush.bf16.msra.mxu0 %v191
  %1489 = vmatpush.bf16.msra.mxu0 %v187
  %1490 = vmatpush.bf16.msra.mxu0 %v183
  %1491 = vmatpush.bf16.msra.mxu0 %v179
  %1492 = vmatpush.bf16.msra.mxu0 %v175
  %1493 = vmatpush.bf16.msra.mxu0 %v171
  %1494 = vmatpush.bf16.msra.mxu0 %v167
  %1495 = vmatpush.bf16.msra.mxu0 %v163
  %1496 = vmatmul.bf16.gmra.mxu0 %v345
  %v1497 = vpop.f32.mrf.mxu0
  %v1498 = vadd.f32 0.0, %v1497
  %v1499 = vpop.f32.mrf.mxu0
  %1500 = vdwg.mxu0
  %1501 = vmatpush.bf16.msra.mxu0 %v192
  %1502 = vmatpush.bf16.msra.mxu0 %v188
  %1503 = vmatpush.bf16.msra.mxu0 %v184
  %1504 = vmatpush.bf16.msra.mxu0 %v180
  %1505 = vmatpush.bf16.msra.mxu0 %v176
  %1506 = vmatpush.bf16.msra.mxu0 %v172
  %1507 = vmatpush.bf16.msra.mxu0 %v168
  %1508 = vmatpush.bf16.msra.mxu0 %v164
  %1509 = vmatmul.bf16.gmra.mxu0 %v345
  %v1510 = vpop.f32.mrf.mxu0
  %v1511 = vadd.f32 0.0, %v1510
  %v1512 = vpop.f32.mrf.mxu0
  %1513 = vdwg.mxu0
  %1514 = vmatpush.bf16.msra.mxu0 %v193
  %1515 = vmatpush.bf16.msra.mxu0 %v189
  %1516 = vmatpush.bf16.msra.mxu0 %v185
  %1517 = vmatpush.bf16.msra.mxu0 %v181
  %1518 = vmatpush.bf16.msra.mxu0 %v177
  %1519 = vmatpush.bf16.msra.mxu0 %v173
  %1520 = vmatpush.bf16.msra.mxu0 %v169
  %1521 = vmatpush.bf16.msra.mxu0 %v165
  %1522 = vmatmul.bf16.gmra.mxu0 %v345
  %v1523 = vpop.f32.mrf.mxu0
  %v1524 = vadd.f32 0.0, %v1523
  %v1525 = vpop.f32.mrf.mxu0
  %1526 = vdwg.mxu0
  %v1527 = vadd.f32 %v1471, %v1485
  %v1528 = vadd.f32 %v1472, %v1498
  %v1529 = vadd.f32 %v1473, %v1511
  %v1530 = vadd.f32 %v1474, %v1524
  %v1531 = vxor.u32 %v1527, 2147483648
  %v1532 = vmul.f32 %v1531, 1.442695
  %v1533 = vpow.pop %v1532
  %v1534 = vadd.f32 %v1533, 1.0
  %v1535 = vrcp.pop %v1534
  %v1536 = vmul.f32 %v1534, %v1535
  %v1537 = vsub.f32 1.0, %v1536
  %v1538 = vmul.f32 %v1535, %v1537
  %v1539 = vadd.f32 %v1535, %v1538
  %vm1540 = vweird.f32 %v1534
  %vm1541 = vweird.f32 %v1535
  %vm1542 = vmor %vm1540, %vm1541
  %v1543 = vsel %vm1542, %v1535, %v1539
  %v1544 = vand.u32 2147483647, %v1534
  %vm1545 = vcmp.eq.f32.partialorder %v1544, 8.507059e+37
  %v1546 = vand.u32 %v1534, 2147483648
  %v1547 = vor.u32 1.1754944e-38, %v1546
  %v1548 = vsel %vm1545, %v1547, %v1543
  %v1549 = vmul.f32 1.0, %v1548
  %v1550 = vxor.u32 %v1528, 2147483648
  %v1551 = vmul.f32 %v1550, 1.442695
  %v1552 = vpow.pop %v1551
  %v1553 = vadd.f32 %v1552, 1.0
  %v1554 = vrcp.pop %v1553
  %v1555 = vmul.f32 %v1553, %v1554
  %v1556 = vsub.f32 1.0, %v1555
  %v1557 = vmul.f32 %v1554, %v1556
  %v1558 = vadd.f32 %v1554, %v1557
  %vm1559 = vweird.f32 %v1553
  %vm1560 = vweird.f32 %v1554
  %vm1561 = vmor %vm1559, %vm1560
  %v1562 = vsel %vm1561, %v1554, %v1558
  %v1563 = vand.u32 2147483647, %v1553
  %vm1564 = vcmp.eq.f32.partialorder %v1563, 8.507059e+37
  %v1565 = vand.u32 %v1553, 2147483648
  %v1566 = vor.u32 1.1754944e-38, %v1565
  %v1567 = vsel %vm1564, %v1566, %v1562
  %v1568 = vmul.f32 1.0, %v1567
  %v1569 = vtanh.pop %v1529
  %v1570 = vxor.u32 %v1530, 2147483648
  %v1571 = vmul.f32 %v1570, 1.442695
  %v1572 = vpow.pop %v1571
  %v1573 = vadd.f32 %v1572, 1.0
  %v1574 = vrcp.pop %v1573
  %v1575 = vmul.f32 %v1573, %v1574
  %v1576 = vsub.f32 1.0, %v1575
  %v1577 = vmul.f32 %v1574, %v1576
  %v1578 = vadd.f32 %v1574, %v1577
  %vm1579 = vweird.f32 %v1573
  %vm1580 = vweird.f32 %v1574
  %vm1581 = vmor %vm1579, %vm1580
  %v1582 = vsel %vm1581, %v1574, %v1578
  %v1583 = vand.u32 2147483647, %v1573
  %vm1584 = vcmp.eq.f32.partialorder %v1583, 8.507059e+37
  %v1585 = vand.u32 %v1573, 2147483648
  %v1586 = vor.u32 1.1754944e-38, %v1585
  %v1587 = vsel %vm1584, %v1586, %v1582
  %v1588 = vmul.f32 1.0, %v1587
  %v1589 = vmul.f32 %v1568, %v342
  %v1590 = vmul.f32 %v1549, %v1569
  %v1591 = vadd.f32 %v1589, %v1590
  %v1592 = vtanh.pop %v1591
  %v1593 = vmul.f32 %v1588, %v1592
  %v1594 = vpack.c.bf16 %v1593, %v1593
  %1595 = vmatpush.bf16.msra.mxu0 %v641
  %1596 = vmatpush.bf16.msra.mxu0 %v637
  %1597 = vmatpush.bf16.msra.mxu0 %v633
  %1598 = vmatpush.bf16.msra.mxu0 %v629
  %1599 = vmatpush.bf16.msra.mxu0 %v625
  %1600 = vmatpush.bf16.msra.mxu0 %v621
  %1601 = vmatpush.bf16.msra.mxu0 %v617
  %1602 = vmatpush.bf16.msra.mxu0 %v613
  %1603 = vmatmul.bf16.gmra.mxu0 %v1594
  %v1604 = vpop.f32.mrf.mxu0
  %v1605 = vadd.f32 %v413, %v1604
  %v1606 = vpop.f32.mrf.mxu0
  %1607 = vdwg.mxu0
  %1608 = vmatpush.bf16.msra.mxu0 %v673
  %1609 = vmatpush.bf16.msra.mxu0 %v669
  %1610 = vmatpush.bf16.msra.mxu0 %v665
  %1611 = vmatpush.bf16.msra.mxu0 %v661
  %1612 = vmatpush.bf16.msra.mxu0 %v657
  %1613 = vmatpush.bf16.msra.mxu0 %v653
  %1614 = vmatpush.bf16.msra.mxu0 %v649
  %1615 = vmatpush.bf16.msra.mxu0 %v645
  %1616 = vmatmul.bf16.gmra.mxu0 %v908
  %v1617 = vpop.f32.mrf.mxu0
  %v1618 = vadd.f32 %v1605, %v1617
  %v1619 = vpop.f32.mrf.mxu0
  %1620 = vdwg.mxu0
  %1621 = vmatpush.bf16.msra.mxu0 %v642
  %1622 = vmatpush.bf16.msra.mxu0 %v638
  %1623 = vmatpush.bf16.msra.mxu0 %v634
  %1624 = vmatpush.bf16.msra.mxu0 %v630
  %1625 = vmatpush.bf16.msra.mxu0 %v626
  %1626 = vmatpush.bf16.msra.mxu0 %v622
  %1627 = vmatpush.bf16.msra.mxu0 %v618
  %1628 = vmatpush.bf16.msra.mxu0 %v614
  %1629 = vmatmul.bf16.gmra.mxu0 %v1594
  %v1630 = vpop.f32.mrf.mxu0
  %v1631 = vadd.f32 %v414, %v1630
  %v1632 = vpop.f32.mrf.mxu0
  %1633 = vdwg.mxu0
  %1634 = vmatpush.bf16.msra.mxu0 %v674
  %1635 = vmatpush.bf16.msra.mxu0 %v670
  %1636 = vmatpush.bf16.msra.mxu0 %v666
  %1637 = vmatpush.bf16.msra.mxu0 %v662
  %1638 = vmatpush.bf16.msra.mxu0 %v658
  %1639 = vmatpush.bf16.msra.mxu0 %v654
  %1640 = vmatpush.bf16.msra.mxu0 %v650
  %1641 = vmatpush.bf16.msra.mxu0 %v646
  %1642 = vmatmul.bf16.gmra.mxu0 %v908
  %v1643 = vpop.f32.mrf.mxu0
  %v1644 = vadd.f32 %v1631, %v1643
  %v1645 = vpop.f32.mrf.mxu0
  %1646 = vdwg.mxu0
  %1647 = vmatpush.bf16.msra.mxu0 %v643
  %1648 = vmatpush.bf16.msra.mxu0 %v639
  %1649 = vmatpush.bf16.msra.mxu0 %v635
  %1650 = vmatpush.bf16.msra.mxu0 %v631
  %1651 = vmatpush.bf16.msra.mxu0 %v627
  %1652 = vmatpush.bf16.msra.mxu0 %v623
  %1653 = vmatpush.bf16.msra.mxu0 %v619
  %1654 = vmatpush.bf16.msra.mxu0 %v615
  %1655 = vmatmul.bf16.gmra.mxu0 %v1594
  %v1656 = vpop.f32.mrf.mxu0
  %v1657 = vadd.f32 %v415, %v1656
  %v1658 = vpop.f32.mrf.mxu0
  %1659 = vdwg.mxu0
  %1660 = vmatpush.bf16.msra.mxu0 %v675
  %1661 = vmatpush.bf16.msra.mxu0 %v671
  %1662 = vmatpush.bf16.msra.mxu0 %v667
  %1663 = vmatpush.bf16.msra.mxu0 %v663
  %1664 = vmatpush.bf16.msra.mxu0 %v659
  %1665 = vmatpush.bf16.msra.mxu0 %v655
  %1666 = vmatpush.bf16.msra.mxu0 %v651
  %1667 = vmatpush.bf16.msra.mxu0 %v647
  %1668 = vmatmul.bf16.gmra.mxu0 %v908
  %v1669 = vpop.f32.mrf.mxu0
  %v1670 = vadd.f32 %v1657, %v1669
  %v1671 = vpop.f32.mrf.mxu0
  %1672 = vdwg.mxu0
  %1673 = vmatpush.bf16.msra.mxu0 %v644
  %1674 = vmatpush.bf16.msra.mxu0 %v640
  %1675 = vmatpush.bf16.msra.mxu0 %v636
  %1676 = vmatpush.bf16.msra.mxu0 %v632
  %1677 = vmatpush.bf16.msra.mxu0 %v628
  %1678 = vmatpush.bf16.msra.mxu0 %v624
  %1679 = vmatpush.bf16.msra.mxu0 %v620
  %1680 = vmatpush.bf16.msra.mxu0 %v616
  %1681 = vmatmul.bf16.gmra.mxu0 %v1594
  %v1682 = vpop.f32.mrf.mxu0
  %v1683 = vadd.f32 %v416, %v1682
  %v1684 = vpop.f32.mrf.mxu0
  %1685 = vdwg.mxu0
  %1686 = vmatpush.bf16.msra.mxu0 %v676
  %1687 = vmatpush.bf16.msra.mxu0 %v672
  %1688 = vmatpush.bf16.msra.mxu0 %v668
  %1689 = vmatpush.bf16.msra.mxu0 %v664
  %1690 = vmatpush.bf16.msra.mxu0 %v660
  %1691 = vmatpush.bf16.msra.mxu0 %v656
  %1692 = vmatpush.bf16.msra.mxu0 %v652
  %1693 = vmatpush.bf16.msra.mxu0 %v648
  %1694 = vmatmul.bf16.gmra.mxu0 %v908
  %v1695 = vpop.f32.mrf.mxu0
  %v1696 = vadd.f32 %v1683, %v1695
  %v1697 = vpop.f32.mrf.mxu0
  %1698 = vdwg.mxu0
  %v1699 = vxor.u32 %v1618, 2147483648
  %v1700 = vmul.f32 %v1699, 1.442695
  %v1701 = vpow.pop %v1700
  %v1702 = vadd.f32 %v1701, 1.0
  %v1703 = vrcp.pop %v1702
  %v1704 = vmul.f32 %v1702, %v1703
  %v1705 = vsub.f32 1.0, %v1704
  %v1706 = vmul.f32 %v1703, %v1705
  %v1707 = vadd.f32 %v1703, %v1706
  %vm1708 = vweird.f32 %v1702
  %vm1709 = vweird.f32 %v1703
  %vm1710 = vmor %vm1708, %vm1709
  %v1711 = vsel %vm1710, %v1703, %v1707
  %v1712 = vand.u32 2147483647, %v1702
  %vm1713 = vcmp.eq.f32.partialorder %v1712, 8.507059e+37
  %v1714 = vand.u32 %v1702, 2147483648
  %v1715 = vor.u32 1.1754944e-38, %v1714
  %v1716 = vsel %vm1713, %v1715, %v1711
  %v1717 = vmul.f32 1.0, %v1716
  %v1718 = vxor.u32 %v1644, 2147483648
  %v1719 = vmul.f32 %v1718, 1.442695
  %v1720 = vpow.pop %v1719
  %v1721 = vadd.f32 %v1720, 1.0
  %v1722 = vrcp.pop %v1721
  %v1723 = vmul.f32 %v1721, %v1722
  %v1724 = vsub.f32 1.0, %v1723
  %v1725 = vmul.f32 %v1722, %v1724
  %v1726 = vadd.f32 %v1722, %v1725
  %vm1727 = vweird.f32 %v1721
  %vm1728 = vweird.f32 %v1722
  %vm1729 = vmor %vm1727, %vm1728
  %v1730 = vsel %vm1729, %v1722, %v1726
  %v1731 = vand.u32 2147483647, %v1721
  %vm1732 = vcmp.eq.f32.partialorder %v1731, 8.507059e+37
  %v1733 = vand.u32 %v1721, 2147483648
  %v1734 = vor.u32 1.1754944e-38, %v1733
  %v1735 = vsel %vm1732, %v1734, %v1730
  %v1736 = vmul.f32 1.0, %v1735
  %v1737 = vtanh.pop %v1670
  %v1738 = vxor.u32 %v1696, 2147483648
  %v1739 = vmul.f32 %v1738, 1.442695
  %v1740 = vpow.pop %v1739
  %v1741 = vadd.f32 %v1740, 1.0
  %v1742 = vrcp.pop %v1741
  %v1743 = vmul.f32 %v1741, %v1742
  %v1744 = vsub.f32 1.0, %v1743
  %v1745 = vmul.f32 %v1742, %v1744
  %v1746 = vadd.f32 %v1742, %v1745
  %vm1747 = vweird.f32 %v1741
  %vm1748 = vweird.f32 %v1742
  %vm1749 = vmor %vm1747, %vm1748
  %v1750 = vsel %vm1749, %v1742, %v1746
  %v1751 = vand.u32 2147483647, %v1741
  %vm1752 = vcmp.eq.f32.partialorder %v1751, 8.507059e+37
  %v1753 = vand.u32 %v1741, 2147483648
  %v1754 = vor.u32 1.1754944e-38, %v1753
  %v1755 = vsel %vm1752, %v1754, %v1750
  %v1756 = vmul.f32 1.0, %v1755
  %v1757 = vmul.f32 %v1736, %v905
  %v1758 = vmul.f32 %v1717, %v1737
  %v1759 = vadd.f32 %v1757, %v1758
  %v1760 = vtanh.pop %v1759
  %v1761 = vmul.f32 %v1756, %v1760
  %v1762 = vpack.c.bf16 %v1761, %v1761
  %v1763 = vpack.c.bf16 %v1469, %v1469
  %1764 = vmatpush.bf16.msra.mxu0 %v1203
  %1765 = vmatpush.bf16.msra.mxu0 %v1199
  %1766 = vmatpush.bf16.msra.mxu0 %v1195
  %1767 = vmatpush.bf16.msra.mxu0 %v1191
  %1768 = vmatpush.bf16.msra.mxu0 %v1187
  %1769 = vmatpush.bf16.msra.mxu0 %v1183
  %1770 = vmatpush.bf16.msra.mxu0 %v1179
  %1771 = vmatpush.bf16.msra.mxu0 %v1175
  %1772 = vmatmul.bf16.gmra.mxu0 %v1762
  %v1773 = vpop.f32.mrf.mxu0
  %v1774 = vadd.f32 %v975, %v1773
  %v1775 = vpop.f32.mrf.mxu0
  %1776 = vdwg.mxu0
  %1777 = vmatpush.bf16.msra.mxu0 %v1235
  %1778 = vmatpush.bf16.msra.mxu0 %v1231
  %1779 = vmatpush.bf16.msra.mxu0 %v1227
  %1780 = vmatpush.bf16.msra.mxu0 %v1223
  %1781 = vmatpush.bf16.msra.mxu0 %v1219
  %1782 = vmatpush.bf16.msra.mxu0 %v1215
  %1783 = vmatpush.bf16.msra.mxu0 %v1211
  %1784 = vmatpush.bf16.msra.mxu0 %v1207
  %1785 = vmatmul.bf16.gmra.mxu0 %v1763
  %v1786 = vpop.f32.mrf.mxu0
  %v1787 = vadd.f32 %v1774, %v1786
  %v1788 = vpop.f32.mrf.mxu0
  %1789 = vdwg.mxu0
  %1790 = vmatpush.bf16.msra.mxu0 %v1204
  %1791 = vmatpush.bf16.msra.mxu0 %v1200
  %1792 = vmatpush.bf16.msra.mxu0 %v1196
  %1793 = vmatpush.bf16.msra.mxu0 %v1192
  %1794 = vmatpush.bf16.msra.mxu0 %v1188
  %1795 = vmatpush.bf16.msra.mxu0 %v1184
  %1796 = vmatpush.bf16.msra.mxu0 %v1180
  %1797 = vmatpush.bf16.msra.mxu0 %v1176
  %1798 = vmatmul.bf16.gmra.mxu0 %v1762
  %v1799 = vpop.f32.mrf.mxu0
  %v1800 = vadd.f32 %v976, %v1799
  %v1801 = vpop.f32.mrf.mxu0
  %1802 = vdwg.mxu0
  %1803 = vmatpush.bf16.msra.mxu0 %v1236
  %1804 = vmatpush.bf16.msra.mxu0 %v1232
  %1805 = vmatpush.bf16.msra.mxu0 %v1228
  %1806 = vmatpush.bf16.msra.mxu0 %v1224
  %1807 = vmatpush.bf16.msra.mxu0 %v1220
  %1808 = vmatpush.bf16.msra.mxu0 %v1216
  %1809 = vmatpush.bf16.msra.mxu0 %v1212
  %1810 = vmatpush.bf16.msra.mxu0 %v1208
  %1811 = vmatmul.bf16.gmra.mxu0 %v1763
  %v1812 = vpop.f32.mrf.mxu0
  %v1813 = vadd.f32 %v1800, %v1812
  %v1814 = vpop.f32.mrf.mxu0
  %1815 = vdwg.mxu0
  %1816 = vmatpush.bf16.msra.mxu0 %v1205
  %1817 = vmatpush.bf16.msra.mxu0 %v1201
  %1818 = vmatpush.bf16.msra.mxu0 %v1197
  %1819 = vmatpush.bf16.msra.mxu0 %v1193
  %1820 = vmatpush.bf16.msra.mxu0 %v1189
  %1821 = vmatpush.bf16.msra.mxu0 %v1185
  %1822 = vmatpush.bf16.msra.mxu0 %v1181
  %1823 = vmatpush.bf16.msra.mxu0 %v1177
  %1824 = vmatmul.bf16.gmra.mxu0 %v1762
  %v1825 = vpop.f32.mrf.mxu0
  %v1826 = vadd.f32 %v977, %v1825
  %v1827 = vpop.f32.mrf.mxu0
  %1828 = vdwg.mxu0
  %1829 = vmatpush.bf16.msra.mxu0 %v1237
  %1830 = vmatpush.bf16.msra.mxu0 %v1233
  %1831 = vmatpush.bf16.msra.mxu0 %v1229
  %1832 = vmatpush.bf16.msra.mxu0 %v1225
  %1833 = vmatpush.bf16.msra.mxu0 %v1221
  %1834 = vmatpush.bf16.msra.mxu0 %v1217
  %1835 = vmatpush.bf16.msra.mxu0 %v1213
  %1836 = vmatpush.bf16.msra.mxu0 %v1209
  %1837 = vmatmul.bf16.gmra.mxu0 %v1763
  %v1838 = vpop.f32.mrf.mxu0
  %v1839 = vadd.f32 %v1826, %v1838
  %v1840 = vpop.f32.mrf.mxu0
  %1841 = vdwg.mxu0
  %1842 = vmatpush.bf16.msra.mxu0 %v1206
  %1843 = vmatpush.bf16.msra.mxu0 %v1202
  %1844 = vmatpush.bf16.msra.mxu0 %v1198
  %1845 = vmatpush.bf16.msra.mxu0 %v1194
  %1846 = vmatpush.bf16.msra.mxu0 %v1190
  %1847 = vmatpush.bf16.msra.mxu0 %v1186
  %1848 = vmatpush.bf16.msra.mxu0 %v1182
  %1849 = vmatpush.bf16.msra.mxu0 %v1178
  %1850 = vmatmul.bf16.gmra.mxu0 %v1762
  %v1851 = vpop.f32.mrf.mxu0
  %v1852 = vadd.f32 %v978, %v1851
  %v1853 = vpop.f32.mrf.mxu0
  %1854 = vdwg.mxu0
  %1855 = vmatpush.bf16.msra.mxu0 %v1238
  %1856 = vmatpush.bf16.msra.mxu0 %v1234
  %1857 = vmatpush.bf16.msra.mxu0 %v1230
  %1858 = vmatpush.bf16.msra.mxu0 %v1226
  %1859 = vmatpush.bf16.msra.mxu0 %v1222
  %1860 = vmatpush.bf16.msra.mxu0 %v1218
  %1861 = vmatpush.bf16.msra.mxu0 %v1214
  %1862 = vmatpush.bf16.msra.mxu0 %v1210
  %1863 = vmatmul.bf16.gmra.mxu0 %v1763
  %v1864 = vpop.f32.mrf.mxu0
  %v1865 = vadd.f32 %v1852, %v1864
  %v1866 = vpop.f32.mrf.mxu0
  %1867 = vdwg.mxu0
  %v1868 = vxor.u32 %v1787, 2147483648
  %v1869 = vmul.f32 %v1868, 1.442695
  %v1870 = vpow.pop %v1869
  %v1871 = vadd.f32 %v1870, 1.0
  %v1872 = vrcp.pop %v1871
  %v1873 = vmul.f32 %v1871, %v1872
  %v1874 = vsub.f32 1.0, %v1873
  %v1875 = vmul.f32 %v1872, %v1874
  %v1876 = vadd.f32 %v1872, %v1875
  %vm1877 = vweird.f32 %v1871
  %vm1878 = vweird.f32 %v1872
  %vm1879 = vmor %vm1877, %vm1878
  %v1880 = vsel %vm1879, %v1872, %v1876
  %v1881 = vand.u32 2147483647, %v1871
  %vm1882 = vcmp.eq.f32.partialorder %v1881, 8.507059e+37
  %v1883 = vand.u32 %v1871, 2147483648
  %v1884 = vor.u32 1.1754944e-38, %v1883
  %v1885 = vsel %vm1882, %v1884, %v1880
  %v1886 = vmul.f32 1.0, %v1885
  %v1887 = vxor.u32 %v1813, 2147483648
  %v1888 = vmul.f32 %v1887, 1.442695
  %v1889 = vpow.pop %v1888
  %v1890 = vadd.f32 %v1889, 1.0
  %v1891 = vrcp.pop %v1890
  %v1892 = vmul.f32 %v1890, %v1891
  %v1893 = vsub.f32 1.0, %v1892
  %v1894 = vmul.f32 %v1891, %v1893
  %v1895 = vadd.f32 %v1891, %v1894
  %vm1896 = vweird.f32 %v1890
  %vm1897 = vweird.f32 %v1891
  %vm1898 = vmor %vm1896, %vm1897
  %v1899 = vsel %vm1898, %v1891, %v1895
  %v1900 = vand.u32 2147483647, %v1890
  %vm1901 = vcmp.eq.f32.partialorder %v1900, 8.507059e+37
  %v1902 = vand.u32 %v1890, 2147483648
  %v1903 = vor.u32 1.1754944e-38, %v1902
  %v1904 = vsel %vm1901, %v1903, %v1899
  %v1905 = vmul.f32 1.0, %v1904
  %v1906 = vtanh.pop %v1839
  %v1907 = vxor.u32 %v1865, 2147483648
  %v1908 = vmul.f32 %v1907, 1.442695
  %v1909 = vpow.pop %v1908
  %v1910 = vadd.f32 %v1909, 1.0
  %v1911 = vrcp.pop %v1910
  %v1912 = vmul.f32 %v1910, %v1911
  %v1913 = vsub.f32 1.0, %v1912
  %v1914 = vmul.f32 %v1911, %v1913
  %v1915 = vadd.f32 %v1911, %v1914
  %vm1916 = vweird.f32 %v1910
  %vm1917 = vweird.f32 %v1911
  %vm1918 = vmor %vm1916, %vm1917
  %v1919 = vsel %vm1918, %v1911, %v1915
  %v1920 = vand.u32 2147483647, %v1910
  %vm1921 = vcmp.eq.f32.partialorder %v1920, 8.507059e+37
  %v1922 = vand.u32 %v1910, 2147483648
  %v1923 = vor.u32 1.1754944e-38, %v1922
  %v1924 = vsel %vm1921, %v1923, %v1919
  %v1925 = vmul.f32 1.0, %v1924
  %v1926 = vmul.f32 %v1905, %v1467
  %v1927 = vmul.f32 %v1886, %v1906
  %v1928 = vadd.f32 %v1926, %v1927
  %v1929 = vtanh.pop %v1928
  %v1930 = vmul.f32 %v1925, %v1929
  %s1931 = scalar_lea.vmem %s0, 64
  %v1932 = vld [vmem:[%s1931] sm:$0xff]
  %v1933 = vld [vmem:[%s1931 + $0x8] sm:$0xff]
  %v1934 = vld [vmem:[%s1931 + $0x10] sm:$0xff]
  %v1935 = vld [vmem:[%s1931 + $0x18] sm:$0xff]
  %1936 = vmatpush.bf16.msra.mxu0 %v190
  %1937 = vmatpush.bf16.msra.mxu0 %v186
  %1938 = vmatpush.bf16.msra.mxu0 %v182
  %1939 = vmatpush.bf16.msra.mxu0 %v178
  %1940 = vmatpush.bf16.msra.mxu0 %v174
  %1941 = vmatpush.bf16.msra.mxu0 %v170
  %1942 = vmatpush.bf16.msra.mxu0 %v166
  %1943 = vmatpush.bf16.msra.mxu0 %v162
  %1944 = vmatmul.bf16.gmra.mxu0 %v1594
  %v1945 = vpop.f32.mrf.mxu0
  %v1946 = vadd.f32 0.0, %v1945
  %v1947 = vpop.f32.mrf.mxu0
  %1948 = vdwg.mxu0
  %1949 = vmatpush.bf16.msra.mxu0 %v191
  %1950 = vmatpush.bf16.msra.mxu0 %v187
  %1951 = vmatpush.bf16.msra.mxu0 %v183
  %1952 = vmatpush.bf16.msra.mxu0 %v179
  %1953 = vmatpush.bf16.msra.mxu0 %v175
  %1954 = vmatpush.bf16.msra.mxu0 %v171
  %1955 = vmatpush.bf16.msra.mxu0 %v167
  %1956 = vmatpush.bf16.msra.mxu0 %v163
  %1957 = vmatmul.bf16.gmra.mxu0 %v1594
  %v1958 = vpop.f32.mrf.mxu0
  %v1959 = vadd.f32 0.0, %v1958
  %v1960 = vpop.f32.mrf.mxu0
  %1961 = vdwg.mxu0
  %1962 = vmatpush.bf16.msra.mxu0 %v192
  %1963 = vmatpush.bf16.msra.mxu0 %v188
  %1964 = vmatpush.bf16.msra.mxu0 %v184
  %1965 = vmatpush.bf16.msra.mxu0 %v180
  %1966 = vmatpush.bf16.msra.mxu0 %v176
  %1967 = vmatpush.bf16.msra.mxu0 %v172
  %1968 = vmatpush.bf16.msra.mxu0 %v168
  %1969 = vmatpush.bf16.msra.mxu0 %v164
  %1970 = vmatmul.bf16.gmra.mxu0 %v1594
  %v1971 = vpop.f32.mrf.mxu0
  %v1972 = vadd.f32 0.0, %v1971
  %v1973 = vpop.f32.mrf.mxu0
  %1974 = vdwg.mxu0
  %1975 = vmatpush.bf16.msra.mxu0 %v193
  %1976 = vmatpush.bf16.msra.mxu0 %v189
  %1977 = vmatpush.bf16.msra.mxu0 %v185
  %1978 = vmatpush.bf16.msra.mxu0 %v181
  %1979 = vmatpush.bf16.msra.mxu0 %v177
  %1980 = vmatpush.bf16.msra.mxu0 %v173
  %1981 = vmatpush.bf16.msra.mxu0 %v169
  %1982 = vmatpush.bf16.msra.mxu0 %v165
  %1983 = vmatmul.bf16.gmra.mxu0 %v1594
  %v1984 = vpop.f32.mrf.mxu0
  %v1985 = vadd.f32 0.0, %v1984
  %v1986 = vpop.f32.mrf.mxu0
  %1987 = vdwg.mxu0
  %v1988 = vadd.f32 %v1932, %v1946
  %v1989 = vadd.f32 %v1933, %v1959
  %v1990 = vadd.f32 %v1934, %v1972
  %v1991 = vadd.f32 %v1935, %v1985
  %v1992 = vxor.u32 %v1988, 2147483648
  %v1993 = vmul.f32 %v1992, 1.442695
  %v1994 = vpow.pop %v1993
  %v1995 = vadd.f32 %v1994, 1.0
  %v1996 = vrcp.pop %v1995
  %v1997 = vmul.f32 %v1995, %v1996
  %v1998 = vsub.f32 1.0, %v1997
  %v1999 = vmul.f32 %v1996, %v1998
  %v2000 = vadd.f32 %v1996, %v1999
  %vm2001 = vweird.f32 %v1995
  %vm2002 = vweird.f32 %v1996
  %vm2003 = vmor %vm2001, %vm2002
  %v2004 = vsel %vm2003, %v1996, %v2000
  %v2005 = vand.u32 2147483647, %v1995
  %vm2006 = vcmp.eq.f32.partialorder %v2005, 8.507059e+37
  %v2007 = vand.u32 %v1995, 2147483648
  %v2008 = vor.u32 1.1754944e-38, %v2007
  %v2009 = vsel %vm2006, %v2008, %v2004
  %v2010 = vmul.f32 1.0, %v2009
  %v2011 = vxor.u32 %v1989, 2147483648
  %v2012 = vmul.f32 %v2011, 1.442695
  %v2013 = vpow.pop %v2012
  %v2014 = vadd.f32 %v2013, 1.0
  %v2015 = vrcp.pop %v2014
  %v2016 = vmul.f32 %v2014, %v2015
  %v2017 = vsub.f32 1.0, %v2016
  %v2018 = vmul.f32 %v2015, %v2017
  %v2019 = vadd.f32 %v2015, %v2018
  %vm2020 = vweird.f32 %v2014
  %vm2021 = vweird.f32 %v2015
  %vm2022 = vmor %vm2020, %vm2021
  %v2023 = vsel %vm2022, %v2015, %v2019
  %v2024 = vand.u32 2147483647, %v2014
  %vm2025 = vcmp.eq.f32.partialorder %v2024, 8.507059e+37
  %v2026 = vand.u32 %v2014, 2147483648
  %v2027 = vor.u32 1.1754944e-38, %v2026
  %v2028 = vsel %vm2025, %v2027, %v2023
  %v2029 = vmul.f32 1.0, %v2028
  %v2030 = vtanh.pop %v1990
  %v2031 = vxor.u32 %v1991, 2147483648
  %v2032 = vmul.f32 %v2031, 1.442695
  %v2033 = vpow.pop %v2032
  %v2034 = vadd.f32 %v2033, 1.0
  %v2035 = vrcp.pop %v2034
  %v2036 = vmul.f32 %v2034, %v2035
  %v2037 = vsub.f32 1.0, %v2036
  %v2038 = vmul.f32 %v2035, %v2037
  %v2039 = vadd.f32 %v2035, %v2038
  %vm2040 = vweird.f32 %v2034
  %vm2041 = vweird.f32 %v2035
  %vm2042 = vmor %vm2040, %vm2041
  %v2043 = vsel %vm2042, %v2035, %v2039
  %v2044 = vand.u32 2147483647, %v2034
  %vm2045 = vcmp.eq.f32.partialorder %v2044, 8.507059e+37
  %v2046 = vand.u32 %v2034, 2147483648
  %v2047 = vor.u32 1.1754944e-38, %v2046
  %v2048 = vsel %vm2045, %v2047, %v2043
  %v2049 = vmul.f32 1.0, %v2048
  %v2050 = vmul.f32 %v2029, %v1591
  %v2051 = vmul.f32 %v2010, %v2030
  %v2052 = vadd.f32 %v2050, %v2051
  %v2053 = vtanh.pop %v2052
  %v2054 = vmul.f32 %v2049, %v2053
  %v2055 = vpack.c.bf16 %v2054, %v2054
  %2056 = vmatpush.bf16.msra.mxu0 %v641
  %2057 = vmatpush.bf16.msra.mxu0 %v637
  %2058 = vmatpush.bf16.msra.mxu0 %v633
  %2059 = vmatpush.bf16.msra.mxu0 %v629
  %2060 = vmatpush.bf16.msra.mxu0 %v625
  %2061 = vmatpush.bf16.msra.mxu0 %v621
  %2062 = vmatpush.bf16.msra.mxu0 %v617
  %2063 = vmatpush.bf16.msra.mxu0 %v613
  %2064 = vmatmul.bf16.gmra.mxu0 %v2055
  %v2065 = vpop.f32.mrf.mxu0
  %v2066 = vadd.f32 %v413, %v2065
  %v2067 = vpop.f32.mrf.mxu0
  %2068 = vdwg.mxu0
  %2069 = vmatpush.bf16.msra.mxu0 %v673
  %2070 = vmatpush.bf16.msra.mxu0 %v669
  %2071 = vmatpush.bf16.msra.mxu0 %v665
  %2072 = vmatpush.bf16.msra.mxu0 %v661
  %2073 = vmatpush.bf16.msra.mxu0 %v657
  %2074 = vmatpush.bf16.msra.mxu0 %v653
  %2075 = vmatpush.bf16.msra.mxu0 %v649
  %2076 = vmatpush.bf16.msra.mxu0 %v645
  %2077 = vmatmul.bf16.gmra.mxu0 %v1762
  %v2078 = vpop.f32.mrf.mxu0
  %v2079 = vadd.f32 %v2066, %v2078
  %v2080 = vpop.f32.mrf.mxu0
  %2081 = vdwg.mxu0
  %2082 = vmatpush.bf16.msra.mxu0 %v642
  %2083 = vmatpush.bf16.msra.mxu0 %v638
  %2084 = vmatpush.bf16.msra.mxu0 %v634
  %2085 = vmatpush.bf16.msra.mxu0 %v630
  %2086 = vmatpush.bf16.msra.mxu0 %v626
  %2087 = vmatpush.bf16.msra.mxu0 %v622
  %2088 = vmatpush.bf16.msra.mxu0 %v618
  %2089 = vmatpush.bf16.msra.mxu0 %v614
  %2090 = vmatmul.bf16.gmra.mxu0 %v2055
  %v2091 = vpop.f32.mrf.mxu0
  %v2092 = vadd.f32 %v414, %v2091
  %v2093 = vpop.f32.mrf.mxu0
  %2094 = vdwg.mxu0
  %2095 = vmatpush.bf16.msra.mxu0 %v674
  %2096 = vmatpush.bf16.msra.mxu0 %v670
  %2097 = vmatpush.bf16.msra.mxu0 %v666
  %2098 = vmatpush.bf16.msra.mxu0 %v662
  %2099 = vmatpush.bf16.msra.mxu0 %v658
  %2100 = vmatpush.bf16.msra.mxu0 %v654
  %2101 = vmatpush.bf16.msra.mxu0 %v650
  %2102 = vmatpush.bf16.msra.mxu0 %v646
  %2103 = vmatmul.bf16.gmra.mxu0 %v1762
  %v2104 = vpop.f32.mrf.mxu0
  %v2105 = vadd.f32 %v2092, %v2104
  %v2106 = vpop.f32.mrf.mxu0
  %2107 = vdwg.mxu0
  %2108 = vmatpush.bf16.msra.mxu0 %v643
  %2109 = vmatpush.bf16.msra.mxu0 %v639
  %2110 = vmatpush.bf16.msra.mxu0 %v635
  %2111 = vmatpush.bf16.msra.mxu0 %v631
  %2112 = vmatpush.bf16.msra.mxu0 %v627
  %2113 = vmatpush.bf16.msra.mxu0 %v623
  %2114 = vmatpush.bf16.msra.mxu0 %v619
  %2115 = vmatpush.bf16.msra.mxu0 %v615
  %2116 = vmatmul.bf16.gmra.mxu0 %v2055
  %v2117 = vpop.f32.mrf.mxu0
  %v2118 = vadd.f32 %v415, %v2117
  %v2119 = vpop.f32.mrf.mxu0
  %2120 = vdwg.mxu0
  %2121 = vmatpush.bf16.msra.mxu0 %v675
  %2122 = vmatpush.bf16.msra.mxu0 %v671
  %2123 = vmatpush.bf16.msra.mxu0 %v667
  %2124 = vmatpush.bf16.msra.mxu0 %v663
  %2125 = vmatpush.bf16.msra.mxu0 %v659
  %2126 = vmatpush.bf16.msra.mxu0 %v655
  %2127 = vmatpush.bf16.msra.mxu0 %v651
  %2128 = vmatpush.bf16.msra.mxu0 %v647
  %2129 = vmatmul.bf16.gmra.mxu0 %v1762
  %v2130 = vpop.f32.mrf.mxu0
  %v2131 = vadd.f32 %v2118, %v2130
  %v2132 = vpop.f32.mrf.mxu0
  %2133 = vdwg.mxu0
  %2134 = vmatpush.bf16.msra.mxu0 %v644
  %2135 = vmatpush.bf16.msra.mxu0 %v640
  %2136 = vmatpush.bf16.msra.mxu0 %v636
  %2137 = vmatpush.bf16.msra.mxu0 %v632
  %2138 = vmatpush.bf16.msra.mxu0 %v628
  %2139 = vmatpush.bf16.msra.mxu0 %v624
  %2140 = vmatpush.bf16.msra.mxu0 %v620
  %2141 = vmatpush.bf16.msra.mxu0 %v616
  %2142 = vmatmul.bf16.gmra.mxu0 %v2055
  %v2143 = vpop.f32.mrf.mxu0
  %v2144 = vadd.f32 %v416, %v2143
  %v2145 = vpop.f32.mrf.mxu0
  %2146 = vdwg.mxu0
  %2147 = vmatpush.bf16.msra.mxu0 %v676
  %2148 = vmatpush.bf16.msra.mxu0 %v672
  %2149 = vmatpush.bf16.msra.mxu0 %v668
  %2150 = vmatpush.bf16.msra.mxu0 %v664
  %2151 = vmatpush.bf16.msra.mxu0 %v660
  %2152 = vmatpush.bf16.msra.mxu0 %v656
  %2153 = vmatpush.bf16.msra.mxu0 %v652
  %2154 = vmatpush.bf16.msra.mxu0 %v648
  %2155 = vmatmul.bf16.gmra.mxu0 %v1762
  %v2156 = vpop.f32.mrf.mxu0
  %v2157 = vadd.f32 %v2144, %v2156
  %v2158 = vpop.f32.mrf.mxu0
  %2159 = vdwg.mxu0
  %v2160 = vxor.u32 %v2079, 2147483648
  %v2161 = vmul.f32 %v2160, 1.442695
  %v2162 = vpow.pop %v2161
  %v2163 = vadd.f32 %v2162, 1.0
  %v2164 = vrcp.pop %v2163
  %v2165 = vmul.f32 %v2163, %v2164
  %v2166 = vsub.f32 1.0, %v2165
  %v2167 = vmul.f32 %v2164, %v2166
  %v2168 = vadd.f32 %v2164, %v2167
  %vm2169 = vweird.f32 %v2163
  %vm2170 = vweird.f32 %v2164
  %vm2171 = vmor %vm2169, %vm2170
  %v2172 = vsel %vm2171, %v2164, %v2168
  %v2173 = vand.u32 2147483647, %v2163
  %vm2174 = vcmp.eq.f32.partialorder %v2173, 8.507059e+37
  %v2175 = vand.u32 %v2163, 2147483648
  %v2176 = vor.u32 1.1754944e-38, %v2175
  %v2177 = vsel %vm2174, %v2176, %v2172
  %v2178 = vmul.f32 1.0, %v2177
  %v2179 = vxor.u32 %v2105, 2147483648
  %v2180 = vmul.f32 %v2179, 1.442695
  %v2181 = vpow.pop %v2180
  %v2182 = vadd.f32 %v2181, 1.0
  %v2183 = vrcp.pop %v2182
  %v2184 = vmul.f32 %v2182, %v2183
  %v2185 = vsub.f32 1.0, %v2184
  %v2186 = vmul.f32 %v2183, %v2185
  %v2187 = vadd.f32 %v2183, %v2186
  %vm2188 = vweird.f32 %v2182
  %vm2189 = vweird.f32 %v2183
  %vm2190 = vmor %vm2188, %vm2189
  %v2191 = vsel %vm2190, %v2183, %v2187
  %v2192 = vand.u32 2147483647, %v2182
  %vm2193 = vcmp.eq.f32.partialorder %v2192, 8.507059e+37
  %v2194 = vand.u32 %v2182, 2147483648
  %v2195 = vor.u32 1.1754944e-38, %v2194
  %v2196 = vsel %vm2193, %v2195, %v2191
  %v2197 = vmul.f32 1.0, %v2196
  %v2198 = vtanh.pop %v2131
  %v2199 = vxor.u32 %v2157, 2147483648
  %v2200 = vmul.f32 %v2199, 1.442695
  %v2201 = vpow.pop %v2200
  %v2202 = vadd.f32 %v2201, 1.0
  %v2203 = vrcp.pop %v2202
  %v2204 = vmul.f32 %v2202, %v2203
  %v2205 = vsub.f32 1.0, %v2204
  %v2206 = vmul.f32 %v2203, %v2205
  %v2207 = vadd.f32 %v2203, %v2206
  %vm2208 = vweird.f32 %v2202
  %vm2209 = vweird.f32 %v2203
  %vm2210 = vmor %vm2208, %vm2209
  %v2211 = vsel %vm2210, %v2203, %v2207
  %v2212 = vand.u32 2147483647, %v2202
  %vm2213 = vcmp.eq.f32.partialorder %v2212, 8.507059e+37
  %v2214 = vand.u32 %v2202, 2147483648
  %v2215 = vor.u32 1.1754944e-38, %v2214
  %v2216 = vsel %vm2213, %v2215, %v2211
  %v2217 = vmul.f32 1.0, %v2216
  %v2218 = vmul.f32 %v2197, %v1759
  %v2219 = vmul.f32 %v2178, %v2198
  %v2220 = vadd.f32 %v2218, %v2219
  %v2221 = vtanh.pop %v2220
  %v2222 = vmul.f32 %v2217, %v2221
  %v2223 = vpack.c.bf16 %v2222, %v2222
  %v2224 = vpack.c.bf16 %v1930, %v1930
  %2225 = vmatpush.bf16.msra.mxu0 %v1203
  %2226 = vmatpush.bf16.msra.mxu0 %v1199
  %2227 = vmatpush.bf16.msra.mxu0 %v1195
  %2228 = vmatpush.bf16.msra.mxu0 %v1191
  %2229 = vmatpush.bf16.msra.mxu0 %v1187
  %2230 = vmatpush.bf16.msra.mxu0 %v1183
  %2231 = vmatpush.bf16.msra.mxu0 %v1179
  %2232 = vmatpush.bf16.msra.mxu0 %v1175
  %2233 = vmatmul.bf16.gmra.mxu0 %v2223
  %v2234 = vpop.f32.mrf.mxu0
  %v2235 = vadd.f32 %v975, %v2234
  %v2236 = vpop.f32.mrf.mxu0
  %2237 = vdwg.mxu0
  %2238 = vmatpush.bf16.msra.mxu0 %v1235
  %2239 = vmatpush.bf16.msra.mxu0 %v1231
  %2240 = vmatpush.bf16.msra.mxu0 %v1227
  %2241 = vmatpush.bf16.msra.mxu0 %v1223
  %2242 = vmatpush.bf16.msra.mxu0 %v1219
  %2243 = vmatpush.bf16.msra.mxu0 %v1215
  %2244 = vmatpush.bf16.msra.mxu0 %v1211
  %2245 = vmatpush.bf16.msra.mxu0 %v1207
  %2246 = vmatmul.bf16.gmra.mxu0 %v2224
  %v2247 = vpop.f32.mrf.mxu0
  %v2248 = vadd.f32 %v2235, %v2247
  %v2249 = vpop.f32.mrf.mxu0
  %2250 = vdwg.mxu0
  %2251 = vmatpush.bf16.msra.mxu0 %v1204
  %2252 = vmatpush.bf16.msra.mxu0 %v1200
  %2253 = vmatpush.bf16.msra.mxu0 %v1196
  %2254 = vmatpush.bf16.msra.mxu0 %v1192
  %2255 = vmatpush.bf16.msra.mxu0 %v1188
  %2256 = vmatpush.bf16.msra.mxu0 %v1184
  %2257 = vmatpush.bf16.msra.mxu0 %v1180
  %2258 = vmatpush.bf16.msra.mxu0 %v1176
  %2259 = vmatmul.bf16.gmra.mxu0 %v2223
  %v2260 = vpop.f32.mrf.mxu0
  %v2261 = vadd.f32 %v976, %v2260
  %v2262 = vpop.f32.mrf.mxu0
  %2263 = vdwg.mxu0
  %2264 = vmatpush.bf16.msra.mxu0 %v1236
  %2265 = vmatpush.bf16.msra.mxu0 %v1232
  %2266 = vmatpush.bf16.msra.mxu0 %v1228
  %2267 = vmatpush.bf16.msra.mxu0 %v1224
  %2268 = vmatpush.bf16.msra.mxu0 %v1220
  %2269 = vmatpush.bf16.msra.mxu0 %v1216
  %2270 = vmatpush.bf16.msra.mxu0 %v1212
  %2271 = vmatpush.bf16.msra.mxu0 %v1208
  %2272 = vmatmul.bf16.gmra.mxu0 %v2224
  %v2273 = vpop.f32.mrf.mxu0
  %v2274 = vadd.f32 %v2261, %v2273
  %v2275 = vpop.f32.mrf.mxu0
  %2276 = vdwg.mxu0
  %2277 = vmatpush.bf16.msra.mxu0 %v1205
  %2278 = vmatpush.bf16.msra.mxu0 %v1201
  %2279 = vmatpush.bf16.msra.mxu0 %v1197
  %2280 = vmatpush.bf16.msra.mxu0 %v1193
  %2281 = vmatpush.bf16.msra.mxu0 %v1189
  %2282 = vmatpush.bf16.msra.mxu0 %v1185
  %2283 = vmatpush.bf16.msra.mxu0 %v1181
  %2284 = vmatpush.bf16.msra.mxu0 %v1177
  %2285 = vmatmul.bf16.gmra.mxu0 %v2223
  %v2286 = vpop.f32.mrf.mxu0
  %v2287 = vadd.f32 %v977, %v2286
  %v2288 = vpop.f32.mrf.mxu0
  %2289 = vdwg.mxu0
  %2290 = vmatpush.bf16.msra.mxu0 %v1237
  %2291 = vmatpush.bf16.msra.mxu0 %v1233
  %2292 = vmatpush.bf16.msra.mxu0 %v1229
  %2293 = vmatpush.bf16.msra.mxu0 %v1225
  %2294 = vmatpush.bf16.msra.mxu0 %v1221
  %2295 = vmatpush.bf16.msra.mxu0 %v1217
  %2296 = vmatpush.bf16.msra.mxu0 %v1213
  %2297 = vmatpush.bf16.msra.mxu0 %v1209
  %2298 = vmatmul.bf16.gmra.mxu0 %v2224
  %v2299 = vpop.f32.mrf.mxu0
  %v2300 = vadd.f32 %v2287, %v2299
  %v2301 = vpop.f32.mrf.mxu0
  %2302 = vdwg.mxu0
  %2303 = vmatpush.bf16.msra.mxu0 %v1206
  %2304 = vmatpush.bf16.msra.mxu0 %v1202
  %2305 = vmatpush.bf16.msra.mxu0 %v1198
  %2306 = vmatpush.bf16.msra.mxu0 %v1194
  %2307 = vmatpush.bf16.msra.mxu0 %v1190
  %2308 = vmatpush.bf16.msra.mxu0 %v1186
  %2309 = vmatpush.bf16.msra.mxu0 %v1182
  %2310 = vmatpush.bf16.msra.mxu0 %v1178
  %2311 = vmatmul.bf16.gmra.mxu0 %v2223
  %v2312 = vpop.f32.mrf.mxu0
  %v2313 = vadd.f32 %v978, %v2312
  %v2314 = vpop.f32.mrf.mxu0
  %2315 = vdwg.mxu0
  %2316 = vmatpush.bf16.msra.mxu0 %v1238
  %2317 = vmatpush.bf16.msra.mxu0 %v1234
  %2318 = vmatpush.bf16.msra.mxu0 %v1230
  %2319 = vmatpush.bf16.msra.mxu0 %v1226
  %2320 = vmatpush.bf16.msra.mxu0 %v1222
  %2321 = vmatpush.bf16.msra.mxu0 %v1218
  %2322 = vmatpush.bf16.msra.mxu0 %v1214
  %2323 = vmatpush.bf16.msra.mxu0 %v1210
  %2324 = vmatmul.bf16.gmra.mxu0 %v2224
  %v2325 = vpop.f32.mrf.mxu0
  %v2326 = vadd.f32 %v2313, %v2325
  %v2327 = vpop.f32.mrf.mxu0
  %2328 = vdwg.mxu0
  %v2329 = vxor.u32 %v2248, 2147483648
  %v2330 = vmul.f32 %v2329, 1.442695
  %v2331 = vpow.pop %v2330
  %v2332 = vadd.f32 %v2331, 1.0
  %v2333 = vrcp.pop %v2332
  %v2334 = vmul.f32 %v2332, %v2333
  %v2335 = vsub.f32 1.0, %v2334
  %v2336 = vmul.f32 %v2333, %v2335
  %v2337 = vadd.f32 %v2333, %v2336
  %vm2338 = vweird.f32 %v2332
  %vm2339 = vweird.f32 %v2333
  %vm2340 = vmor %vm2338, %vm2339
  %v2341 = vsel %vm2340, %v2333, %v2337
  %v2342 = vand.u32 2147483647, %v2332
  %vm2343 = vcmp.eq.f32.partialorder %v2342, 8.507059e+37
  %v2344 = vand.u32 %v2332, 2147483648
  %v2345 = vor.u32 1.1754944e-38, %v2344
  %v2346 = vsel %vm2343, %v2345, %v2341
  %v2347 = vmul.f32 1.0, %v2346
  %v2348 = vxor.u32 %v2274, 2147483648
  %v2349 = vmul.f32 %v2348, 1.442695
  %v2350 = vpow.pop %v2349
  %v2351 = vadd.f32 %v2350, 1.0
  %v2352 = vrcp.pop %v2351
  %v2353 = vmul.f32 %v2351, %v2352
  %v2354 = vsub.f32 1.0, %v2353
  %v2355 = vmul.f32 %v2352, %v2354
  %v2356 = vadd.f32 %v2352, %v2355
  %vm2357 = vweird.f32 %v2351
  %vm2358 = vweird.f32 %v2352
  %vm2359 = vmor %vm2357, %vm2358
  %v2360 = vsel %vm2359, %v2352, %v2356
  %v2361 = vand.u32 2147483647, %v2351
  %vm2362 = vcmp.eq.f32.partialorder %v2361, 8.507059e+37
  %v2363 = vand.u32 %v2351, 2147483648
  %v2364 = vor.u32 1.1754944e-38, %v2363
  %v2365 = vsel %vm2362, %v2364, %v2360
  %v2366 = vmul.f32 1.0, %v2365
  %v2367 = vtanh.pop %v2300
  %v2368 = vxor.u32 %v2326, 2147483648
  %v2369 = vmul.f32 %v2368, 1.442695
  %v2370 = vpow.pop %v2369
  %v2371 = vadd.f32 %v2370, 1.0
  %v2372 = vrcp.pop %v2371
  %v2373 = vmul.f32 %v2371, %v2372
  %v2374 = vsub.f32 1.0, %v2373
  %v2375 = vmul.f32 %v2372, %v2374
  %v2376 = vadd.f32 %v2372, %v2375
  %vm2377 = vweird.f32 %v2371
  %vm2378 = vweird.f32 %v2372
  %vm2379 = vmor %vm2377, %vm2378
  %v2380 = vsel %vm2379, %v2372, %v2376
  %v2381 = vand.u32 2147483647, %v2371
  %vm2382 = vcmp.eq.f32.partialorder %v2381, 8.507059e+37
  %v2383 = vand.u32 %v2371, 2147483648
  %v2384 = vor.u32 1.1754944e-38, %v2383
  %v2385 = vsel %vm2382, %v2384, %v2380
  %v2386 = vmul.f32 1.0, %v2385
  %v2387 = vmul.f32 %v2366, %v1928
  %v2388 = vmul.f32 %v2347, %v2367
  %v2389 = vadd.f32 %v2387, %v2388
  %v2390 = vtanh.pop %v2389
  %v2391 = vmul.f32 %v2386, %v2390
  %s2392 = scalar_lea.vmem %s0, 96
  %v2393 = vld [vmem:[%s2392] sm:$0xff]
  %v2394 = vld [vmem:[%s2392 + $0x8] sm:$0xff]
  %v2395 = vld [vmem:[%s2392 + $0x10] sm:$0xff]
  %v2396 = vld [vmem:[%s2392 + $0x18] sm:$0xff]
  %2397 = vmatpush.bf16.msra.mxu0 %v190
  %2398 = vmatpush.bf16.msra.mxu0 %v186
  %2399 = vmatpush.bf16.msra.mxu0 %v182
  %2400 = vmatpush.bf16.msra.mxu0 %v178
  %2401 = vmatpush.bf16.msra.mxu0 %v174
  %2402 = vmatpush.bf16.msra.mxu0 %v170
  %2403 = vmatpush.bf16.msra.mxu0 %v166
  %2404 = vmatpush.bf16.msra.mxu0 %v162
  %2405 = vmatmul.bf16.gmra.mxu0 %v2055
  %v2406 = vpop.f32.mrf.mxu0
  %v2407 = vadd.f32 0.0, %v2406
  %v2408 = vpop.f32.mrf.mxu0
  %2409 = vdwg.mxu0
  %2410 = vmatpush.bf16.msra.mxu0 %v191
  %2411 = vmatpush.bf16.msra.mxu0 %v187
  %2412 = vmatpush.bf16.msra.mxu0 %v183
  %2413 = vmatpush.bf16.msra.mxu0 %v179
  %2414 = vmatpush.bf16.msra.mxu0 %v175
  %2415 = vmatpush.bf16.msra.mxu0 %v171
  %2416 = vmatpush.bf16.msra.mxu0 %v167
  %2417 = vmatpush.bf16.msra.mxu0 %v163
  %2418 = vmatmul.bf16.gmra.mxu0 %v2055
  %v2419 = vpop.f32.mrf.mxu0
  %v2420 = vadd.f32 0.0, %v2419
  %v2421 = vpop.f32.mrf.mxu0
  %2422 = vdwg.mxu0
  %2423 = vmatpush.bf16.msra.mxu0 %v192
  %2424 = vmatpush.bf16.msra.mxu0 %v188
  %2425 = vmatpush.bf16.msra.mxu0 %v184
  %2426 = vmatpush.bf16.msra.mxu0 %v180
  %2427 = vmatpush.bf16.msra.mxu0 %v176
  %2428 = vmatpush.bf16.msra.mxu0 %v172
  %2429 = vmatpush.bf16.msra.mxu0 %v168
  %2430 = vmatpush.bf16.msra.mxu0 %v164
  %2431 = vmatmul.bf16.gmra.mxu0 %v2055
  %v2432 = vpop.f32.mrf.mxu0
  %v2433 = vadd.f32 0.0, %v2432
  %v2434 = vpop.f32.mrf.mxu0
  %2435 = vdwg.mxu0
  %2436 = vmatpush.bf16.msra.mxu0 %v193
  %2437 = vmatpush.bf16.msra.mxu0 %v189
  %2438 = vmatpush.bf16.msra.mxu0 %v185
  %2439 = vmatpush.bf16.msra.mxu0 %v181
  %2440 = vmatpush.bf16.msra.mxu0 %v177
  %2441 = vmatpush.bf16.msra.mxu0 %v173
  %2442 = vmatpush.bf16.msra.mxu0 %v169
  %2443 = vmatpush.bf16.msra.mxu0 %v165
  %2444 = vmatmul.bf16.gmra.mxu0 %v2055
  %v2445 = vpop.f32.mrf.mxu0
  %v2446 = vadd.f32 0.0, %v2445
  %v2447 = vpop.f32.mrf.mxu0
  %2448 = vdwg.mxu0
  %v2449 = vadd.f32 %v2393, %v2407
  %v2450 = vadd.f32 %v2394, %v2420
  %v2451 = vadd.f32 %v2395, %v2433
  %v2452 = vadd.f32 %v2396, %v2446
  %v2453 = vxor.u32 %v2449, 2147483648
  %v2454 = vmul.f32 %v2453, 1.442695
  %v2455 = vpow.pop %v2454
  %v2456 = vadd.f32 %v2455, 1.0
  %v2457 = vrcp.pop %v2456
  %v2458 = vmul.f32 %v2456, %v2457
  %v2459 = vsub.f32 1.0, %v2458
  %v2460 = vmul.f32 %v2457, %v2459
  %v2461 = vadd.f32 %v2457, %v2460
  %vm2462 = vweird.f32 %v2456
  %vm2463 = vweird.f32 %v2457
  %vm2464 = vmor %vm2462, %vm2463
  %v2465 = vsel %vm2464, %v2457, %v2461
  %v2466 = vand.u32 2147483647, %v2456
  %vm2467 = vcmp.eq.f32.partialorder %v2466, 8.507059e+37
  %v2468 = vand.u32 %v2456, 2147483648
  %v2469 = vor.u32 1.1754944e-38, %v2468
  %v2470 = vsel %vm2467, %v2469, %v2465
  %v2471 = vmul.f32 1.0, %v2470
  %v2472 = vxor.u32 %v2450, 2147483648
  %v2473 = vmul.f32 %v2472, 1.442695
  %v2474 = vpow.pop %v2473
  %v2475 = vadd.f32 %v2474, 1.0
  %v2476 = vrcp.pop %v2475
  %v2477 = vmul.f32 %v2475, %v2476
  %v2478 = vsub.f32 1.0, %v2477
  %v2479 = vmul.f32 %v2476, %v2478
  %v2480 = vadd.f32 %v2476, %v2479
  %vm2481 = vweird.f32 %v2475
  %vm2482 = vweird.f32 %v2476
  %vm2483 = vmor %vm2481, %vm2482
  %v2484 = vsel %vm2483, %v2476, %v2480
  %v2485 = vand.u32 2147483647, %v2475
  %vm2486 = vcmp.eq.f32.partialorder %v2485, 8.507059e+37
  %v2487 = vand.u32 %v2475, 2147483648
  %v2488 = vor.u32 1.1754944e-38, %v2487
  %v2489 = vsel %vm2486, %v2488, %v2484
  %v2490 = vmul.f32 1.0, %v2489
  %v2491 = vtanh.pop %v2451
  %v2492 = vxor.u32 %v2452, 2147483648
  %v2493 = vmul.f32 %v2492, 1.442695
  %v2494 = vpow.pop %v2493
  %v2495 = vadd.f32 %v2494, 1.0
  %v2496 = vrcp.pop %v2495
  %v2497 = vmul.f32 %v2495, %v2496
  %v2498 = vsub.f32 1.0, %v2497
  %v2499 = vmul.f32 %v2496, %v2498
  %v2500 = vadd.f32 %v2496, %v2499
  %vm2501 = vweird.f32 %v2495
  %vm2502 = vweird.f32 %v2496
  %vm2503 = vmor %vm2501, %vm2502
  %v2504 = vsel %vm2503, %v2496, %v2500
  %v2505 = vand.u32 2147483647, %v2495
  %vm2506 = vcmp.eq.f32.partialorder %v2505, 8.507059e+37
  %v2507 = vand.u32 %v2495, 2147483648
  %v2508 = vor.u32 1.1754944e-38, %v2507
  %v2509 = vsel %vm2506, %v2508, %v2504
  %v2510 = vmul.f32 1.0, %v2509
  %v2511 = vmul.f32 %v2490, %v2052
  %v2512 = vmul.f32 %v2471, %v2491
  %v2513 = vadd.f32 %v2511, %v2512
  %v2514 = vtanh.pop %v2513
  %v2515 = vmul.f32 %v2510, %v2514
  %v2516 = vpack.c.bf16 %v2515, %v2515
  %2517 = vmatpush.bf16.msra.mxu0 %v641
  %2518 = vmatpush.bf16.msra.mxu0 %v637
  %2519 = vmatpush.bf16.msra.mxu0 %v633
  %2520 = vmatpush.bf16.msra.mxu0 %v629
  %2521 = vmatpush.bf16.msra.mxu0 %v625
  %2522 = vmatpush.bf16.msra.mxu0 %v621
  %2523 = vmatpush.bf16.msra.mxu0 %v617
  %2524 = vmatpush.bf16.msra.mxu0 %v613
  %2525 = vmatmul.bf16.gmra.mxu0 %v2516
  %v2526 = vpop.f32.mrf.mxu0
  %v2527 = vadd.f32 %v413, %v2526
  %v2528 = vpop.f32.mrf.mxu0
  %2529 = vdwg.mxu0
  %2530 = vmatpush.bf16.msra.mxu0 %v673
  %2531 = vmatpush.bf16.msra.mxu0 %v669
  %2532 = vmatpush.bf16.msra.mxu0 %v665
  %2533 = vmatpush.bf16.msra.mxu0 %v661
  %2534 = vmatpush.bf16.msra.mxu0 %v657
  %2535 = vmatpush.bf16.msra.mxu0 %v653
  %2536 = vmatpush.bf16.msra.mxu0 %v649
  %2537 = vmatpush.bf16.msra.mxu0 %v645
  %2538 = vmatmul.bf16.gmra.mxu0 %v2223
  %v2539 = vpop.f32.mrf.mxu0
  %v2540 = vadd.f32 %v2527, %v2539
  %v2541 = vpop.f32.mrf.mxu0
  %2542 = vdwg.mxu0
  %2543 = vmatpush.bf16.msra.mxu0 %v642
  %2544 = vmatpush.bf16.msra.mxu0 %v638
  %2545 = vmatpush.bf16.msra.mxu0 %v634
  %2546 = vmatpush.bf16.msra.mxu0 %v630
  %2547 = vmatpush.bf16.msra.mxu0 %v626
  %2548 = vmatpush.bf16.msra.mxu0 %v622
  %2549 = vmatpush.bf16.msra.mxu0 %v618
  %2550 = vmatpush.bf16.msra.mxu0 %v614
  %2551 = vmatmul.bf16.gmra.mxu0 %v2516
  %v2552 = vpop.f32.mrf.mxu0
  %v2553 = vadd.f32 %v414, %v2552
  %v2554 = vpop.f32.mrf.mxu0
  %2555 = vdwg.mxu0
  %2556 = vmatpush.bf16.msra.mxu0 %v674
  %2557 = vmatpush.bf16.msra.mxu0 %v670
  %2558 = vmatpush.bf16.msra.mxu0 %v666
  %2559 = vmatpush.bf16.msra.mxu0 %v662
  %2560 = vmatpush.bf16.msra.mxu0 %v658
  %2561 = vmatpush.bf16.msra.mxu0 %v654
  %2562 = vmatpush.bf16.msra.mxu0 %v650
  %2563 = vmatpush.bf16.msra.mxu0 %v646
  %2564 = vmatmul.bf16.gmra.mxu0 %v2223
  %v2565 = vpop.f32.mrf.mxu0
  %v2566 = vadd.f32 %v2553, %v2565
  %v2567 = vpop.f32.mrf.mxu0
  %2568 = vdwg.mxu0
  %2569 = vmatpush.bf16.msra.mxu0 %v643
  %2570 = vmatpush.bf16.msra.mxu0 %v639
  %2571 = vmatpush.bf16.msra.mxu0 %v635
  %2572 = vmatpush.bf16.msra.mxu0 %v631
  %2573 = vmatpush.bf16.msra.mxu0 %v627
  %2574 = vmatpush.bf16.msra.mxu0 %v623
  %2575 = vmatpush.bf16.msra.mxu0 %v619
  %2576 = vmatpush.bf16.msra.mxu0 %v615
  %2577 = vmatmul.bf16.gmra.mxu0 %v2516
  %v2578 = vpop.f32.mrf.mxu0
  %v2579 = vadd.f32 %v415, %v2578
  %v2580 = vpop.f32.mrf.mxu0
  %2581 = vdwg.mxu0
  %2582 = vmatpush.bf16.msra.mxu0 %v675
  %2583 = vmatpush.bf16.msra.mxu0 %v671
  %2584 = vmatpush.bf16.msra.mxu0 %v667
  %2585 = vmatpush.bf16.msra.mxu0 %v663
  %2586 = vmatpush.bf16.msra.mxu0 %v659
  %2587 = vmatpush.bf16.msra.mxu0 %v655
  %2588 = vmatpush.bf16.msra.mxu0 %v651
  %2589 = vmatpush.bf16.msra.mxu0 %v647
  %2590 = vmatmul.bf16.gmra.mxu0 %v2223
  %v2591 = vpop.f32.mrf.mxu0
  %v2592 = vadd.f32 %v2579, %v2591
  %v2593 = vpop.f32.mrf.mxu0
  %2594 = vdwg.mxu0
  %2595 = vmatpush.bf16.msra.mxu0 %v644
  %2596 = vmatpush.bf16.msra.mxu0 %v640
  %2597 = vmatpush.bf16.msra.mxu0 %v636
  %2598 = vmatpush.bf16.msra.mxu0 %v632
  %2599 = vmatpush.bf16.msra.mxu0 %v628
  %2600 = vmatpush.bf16.msra.mxu0 %v624
  %2601 = vmatpush.bf16.msra.mxu0 %v620
  %2602 = vmatpush.bf16.msra.mxu0 %v616
  %2603 = vmatmul.bf16.gmra.mxu0 %v2516
  %v2604 = vpop.f32.mrf.mxu0
  %v2605 = vadd.f32 %v416, %v2604
  %v2606 = vpop.f32.mrf.mxu0
  %2607 = vdwg.mxu0
  %2608 = vmatpush.bf16.msra.mxu0 %v676
  %2609 = vmatpush.bf16.msra.mxu0 %v672
  %2610 = vmatpush.bf16.msra.mxu0 %v668
  %2611 = vmatpush.bf16.msra.mxu0 %v664
  %2612 = vmatpush.bf16.msra.mxu0 %v660
  %2613 = vmatpush.bf16.msra.mxu0 %v656
  %2614 = vmatpush.bf16.msra.mxu0 %v652
  %2615 = vmatpush.bf16.msra.mxu0 %v648
  %2616 = vmatmul.bf16.gmra.mxu0 %v2223
  %v2617 = vpop.f32.mrf.mxu0
  %v2618 = vadd.f32 %v2605, %v2617
  %v2619 = vpop.f32.mrf.mxu0
  %2620 = vdwg.mxu0
  %v2621 = vxor.u32 %v2540, 2147483648
  %v2622 = vmul.f32 %v2621, 1.442695
  %v2623 = vpow.pop %v2622
  %v2624 = vadd.f32 %v2623, 1.0
  %v2625 = vrcp.pop %v2624
  %v2626 = vmul.f32 %v2624, %v2625
  %v2627 = vsub.f32 1.0, %v2626
  %v2628 = vmul.f32 %v2625, %v2627
  %v2629 = vadd.f32 %v2625, %v2628
  %vm2630 = vweird.f32 %v2624
  %vm2631 = vweird.f32 %v2625
  %vm2632 = vmor %vm2630, %vm2631
  %v2633 = vsel %vm2632, %v2625, %v2629
  %v2634 = vand.u32 2147483647, %v2624
  %vm2635 = vcmp.eq.f32.partialorder %v2634, 8.507059e+37
  %v2636 = vand.u32 %v2624, 2147483648
  %v2637 = vor.u32 1.1754944e-38, %v2636
  %v2638 = vsel %vm2635, %v2637, %v2633
  %v2639 = vmul.f32 1.0, %v2638
  %v2640 = vxor.u32 %v2566, 2147483648
  %v2641 = vmul.f32 %v2640, 1.442695
  %v2642 = vpow.pop %v2641
  %v2643 = vadd.f32 %v2642, 1.0
  %v2644 = vrcp.pop %v2643
  %v2645 = vmul.f32 %v2643, %v2644
  %v2646 = vsub.f32 1.0, %v2645
  %v2647 = vmul.f32 %v2644, %v2646
  %v2648 = vadd.f32 %v2644, %v2647
  %vm2649 = vweird.f32 %v2643
  %vm2650 = vweird.f32 %v2644
  %vm2651 = vmor %vm2649, %vm2650
  %v2652 = vsel %vm2651, %v2644, %v2648
  %v2653 = vand.u32 2147483647, %v2643
  %vm2654 = vcmp.eq.f32.partialorder %v2653, 8.507059e+37
  %v2655 = vand.u32 %v2643, 2147483648
  %v2656 = vor.u32 1.1754944e-38, %v2655
  %v2657 = vsel %vm2654, %v2656, %v2652
  %v2658 = vmul.f32 1.0, %v2657
  %v2659 = vtanh.pop %v2592
  %v2660 = vxor.u32 %v2618, 2147483648
  %v2661 = vmul.f32 %v2660, 1.442695
  %v2662 = vpow.pop %v2661
  %v2663 = vadd.f32 %v2662, 1.0
  %v2664 = vrcp.pop %v2663
  %v2665 = vmul.f32 %v2663, %v2664
  %v2666 = vsub.f32 1.0, %v2665
  %v2667 = vmul.f32 %v2664, %v2666
  %v2668 = vadd.f32 %v2664, %v2667
  %vm2669 = vweird.f32 %v2663
  %vm2670 = vweird.f32 %v2664
  %vm2671 = vmor %vm2669, %vm2670
  %v2672 = vsel %vm2671, %v2664, %v2668
  %v2673 = vand.u32 2147483647, %v2663
  %vm2674 = vcmp.eq.f32.partialorder %v2673, 8.507059e+37
  %v2675 = vand.u32 %v2663, 2147483648
  %v2676 = vor.u32 1.1754944e-38, %v2675
  %v2677 = vsel %vm2674, %v2676, %v2672
  %v2678 = vmul.f32 1.0, %v2677
  %v2679 = vmul.f32 %v2658, %v2220
  %v2680 = vmul.f32 %v2639, %v2659
  %v2681 = vadd.f32 %v2679, %v2680
  %v2682 = vtanh.pop %v2681
  %v2683 = vmul.f32 %v2678, %v2682
  %v2684 = vpack.c.bf16 %v2683, %v2683
  %v2685 = vpack.c.bf16 %v2391, %v2391
  %2686 = vmatpush.bf16.msra.mxu0 %v1203
  %2687 = vmatpush.bf16.msra.mxu0 %v1199
  %2688 = vmatpush.bf16.msra.mxu0 %v1195
  %2689 = vmatpush.bf16.msra.mxu0 %v1191
  %2690 = vmatpush.bf16.msra.mxu0 %v1187
  %2691 = vmatpush.bf16.msra.mxu0 %v1183
  %2692 = vmatpush.bf16.msra.mxu0 %v1179
  %2693 = vmatpush.bf16.msra.mxu0 %v1175
  %2694 = vmatmul.bf16.gmra.mxu0 %v2684
  %v2695 = vpop.f32.mrf.mxu0
  %v2696 = vadd.f32 %v975, %v2695
  %v2697 = vpop.f32.mrf.mxu0
  %2698 = vdwg.mxu0
  %2699 = vmatpush.bf16.msra.mxu0 %v1235
  %2700 = vmatpush.bf16.msra.mxu0 %v1231
  %2701 = vmatpush.bf16.msra.mxu0 %v1227
  %2702 = vmatpush.bf16.msra.mxu0 %v1223
  %2703 = vmatpush.bf16.msra.mxu0 %v1219
  %2704 = vmatpush.bf16.msra.mxu0 %v1215
  %2705 = vmatpush.bf16.msra.mxu0 %v1211
  %2706 = vmatpush.bf16.msra.mxu0 %v1207
  %2707 = vmatmul.bf16.gmra.mxu0 %v2685
  %v2708 = vpop.f32.mrf.mxu0
  %v2709 = vadd.f32 %v2696, %v2708
  %v2710 = vpop.f32.mrf.mxu0
  %2711 = vdwg.mxu0
  %2712 = vmatpush.bf16.msra.mxu0 %v1204
  %2713 = vmatpush.bf16.msra.mxu0 %v1200
  %2714 = vmatpush.bf16.msra.mxu0 %v1196
  %2715 = vmatpush.bf16.msra.mxu0 %v1192
  %2716 = vmatpush.bf16.msra.mxu0 %v1188
  %2717 = vmatpush.bf16.msra.mxu0 %v1184
  %2718 = vmatpush.bf16.msra.mxu0 %v1180
  %2719 = vmatpush.bf16.msra.mxu0 %v1176
  %2720 = vmatmul.bf16.gmra.mxu0 %v2684
  %v2721 = vpop.f32.mrf.mxu0
  %v2722 = vadd.f32 %v976, %v2721
  %v2723 = vpop.f32.mrf.mxu0
  %2724 = vdwg.mxu0
  %2725 = vmatpush.bf16.msra.mxu0 %v1236
  %2726 = vmatpush.bf16.msra.mxu0 %v1232
  %2727 = vmatpush.bf16.msra.mxu0 %v1228
  %2728 = vmatpush.bf16.msra.mxu0 %v1224
  %2729 = vmatpush.bf16.msra.mxu0 %v1220
  %2730 = vmatpush.bf16.msra.mxu0 %v1216
  %2731 = vmatpush.bf16.msra.mxu0 %v1212
  %2732 = vmatpush.bf16.msra.mxu0 %v1208
  %2733 = vmatmul.bf16.gmra.mxu0 %v2685
  %v2734 = vpop.f32.mrf.mxu0
  %v2735 = vadd.f32 %v2722, %v2734
  %v2736 = vpop.f32.mrf.mxu0
  %2737 = vdwg.mxu0
  %2738 = vmatpush.bf16.msra.mxu0 %v1205
  %2739 = vmatpush.bf16.msra.mxu0 %v1201
  %2740 = vmatpush.bf16.msra.mxu0 %v1197
  %2741 = vmatpush.bf16.msra.mxu0 %v1193
  %2742 = vmatpush.bf16.msra.mxu0 %v1189
  %2743 = vmatpush.bf16.msra.mxu0 %v1185
  %2744 = vmatpush.bf16.msra.mxu0 %v1181
  %2745 = vmatpush.bf16.msra.mxu0 %v1177
  %2746 = vmatmul.bf16.gmra.mxu0 %v2684
  %v2747 = vpop.f32.mrf.mxu0
  %v2748 = vadd.f32 %v977, %v2747
  %v2749 = vpop.f32.mrf.mxu0
  %2750 = vdwg.mxu0
  %2751 = vmatpush.bf16.msra.mxu0 %v1237
  %2752 = vmatpush.bf16.msra.mxu0 %v1233
  %2753 = vmatpush.bf16.msra.mxu0 %v1229
  %2754 = vmatpush.bf16.msra.mxu0 %v1225
  %2755 = vmatpush.bf16.msra.mxu0 %v1221
  %2756 = vmatpush.bf16.msra.mxu0 %v1217
  %2757 = vmatpush.bf16.msra.mxu0 %v1213
  %2758 = vmatpush.bf16.msra.mxu0 %v1209
  %2759 = vmatmul.bf16.gmra.mxu0 %v2685
  %v2760 = vpop.f32.mrf.mxu0
  %v2761 = vadd.f32 %v2748, %v2760
  %v2762 = vpop.f32.mrf.mxu0
  %2763 = vdwg.mxu0
  %2764 = vmatpush.bf16.msra.mxu0 %v1206
  %2765 = vmatpush.bf16.msra.mxu0 %v1202
  %2766 = vmatpush.bf16.msra.mxu0 %v1198
  %2767 = vmatpush.bf16.msra.mxu0 %v1194
  %2768 = vmatpush.bf16.msra.mxu0 %v1190
  %2769 = vmatpush.bf16.msra.mxu0 %v1186
  %2770 = vmatpush.bf16.msra.mxu0 %v1182
  %2771 = vmatpush.bf16.msra.mxu0 %v1178
  %2772 = vmatmul.bf16.gmra.mxu0 %v2684
  %v2773 = vpop.f32.mrf.mxu0
  %v2774 = vadd.f32 %v978, %v2773
  %v2775 = vpop.f32.mrf.mxu0
  %2776 = vdwg.mxu0
  %2777 = vmatpush.bf16.msra.mxu0 %v1238
  %2778 = vmatpush.bf16.msra.mxu0 %v1234
  %2779 = vmatpush.bf16.msra.mxu0 %v1230
  %2780 = vmatpush.bf16.msra.mxu0 %v1226
  %2781 = vmatpush.bf16.msra.mxu0 %v1222
  %2782 = vmatpush.bf16.msra.mxu0 %v1218
  %2783 = vmatpush.bf16.msra.mxu0 %v1214
  %2784 = vmatpush.bf16.msra.mxu0 %v1210
  %2785 = vmatmul.bf16.gmra.mxu0 %v2685
  %v2786 = vpop.f32.mrf.mxu0
  %v2787 = vadd.f32 %v2774, %v2786
  %v2788 = vpop.f32.mrf.mxu0
  %2789 = vdwg.mxu0
  %v2790 = vxor.u32 %v2709, 2147483648
  %v2791 = vmul.f32 %v2790, 1.442695
  %v2792 = vpow.pop %v2791
  %v2793 = vadd.f32 %v2792, 1.0
  %v2794 = vrcp.pop %v2793
  %v2795 = vmul.f32 %v2793, %v2794
  %v2796 = vsub.f32 1.0, %v2795
  %v2797 = vmul.f32 %v2794, %v2796
  %v2798 = vadd.f32 %v2794, %v2797
  %vm2799 = vweird.f32 %v2793
  %vm2800 = vweird.f32 %v2794
  %vm2801 = vmor %vm2799, %vm2800
  %v2802 = vsel %vm2801, %v2794, %v2798
  %v2803 = vand.u32 2147483647, %v2793
  %vm2804 = vcmp.eq.f32.partialorder %v2803, 8.507059e+37
  %v2805 = vand.u32 %v2793, 2147483648
  %v2806 = vor.u32 1.1754944e-38, %v2805
  %v2807 = vsel %vm2804, %v2806, %v2802
  %v2808 = vmul.f32 1.0, %v2807
  %v2809 = vxor.u32 %v2735, 2147483648
  %v2810 = vmul.f32 %v2809, 1.442695
  %v2811 = vpow.pop %v2810
  %v2812 = vadd.f32 %v2811, 1.0
  %v2813 = vrcp.pop %v2812
  %v2814 = vmul.f32 %v2812, %v2813
  %v2815 = vsub.f32 1.0, %v2814
  %v2816 = vmul.f32 %v2813, %v2815
  %v2817 = vadd.f32 %v2813, %v2816
  %vm2818 = vweird.f32 %v2812
  %vm2819 = vweird.f32 %v2813
  %vm2820 = vmor %vm2818, %vm2819
  %v2821 = vsel %vm2820, %v2813, %v2817
  %v2822 = vand.u32 2147483647, %v2812
  %vm2823 = vcmp.eq.f32.partialorder %v2822, 8.507059e+37
  %v2824 = vand.u32 %v2812, 2147483648
  %v2825 = vor.u32 1.1754944e-38, %v2824
  %v2826 = vsel %vm2823, %v2825, %v2821
  %v2827 = vmul.f32 1.0, %v2826
  %v2828 = vtanh.pop %v2761
  %v2829 = vxor.u32 %v2787, 2147483648
  %v2830 = vmul.f32 %v2829, 1.442695
  %v2831 = vpow.pop %v2830
  %v2832 = vadd.f32 %v2831, 1.0
  %v2833 = vrcp.pop %v2832
  %v2834 = vmul.f32 %v2832, %v2833
  %v2835 = vsub.f32 1.0, %v2834
  %v2836 = vmul.f32 %v2833, %v2835
  %v2837 = vadd.f32 %v2833, %v2836
  %vm2838 = vweird.f32 %v2832
  %vm2839 = vweird.f32 %v2833
  %vm2840 = vmor %vm2838, %vm2839
  %v2841 = vsel %vm2840, %v2833, %v2837
  %v2842 = vand.u32 2147483647, %v2832
  %vm2843 = vcmp.eq.f32.partialorder %v2842, 8.507059e+37
  %v2844 = vand.u32 %v2832, 2147483648
  %v2845 = vor.u32 1.1754944e-38, %v2844
  %v2846 = vsel %vm2843, %v2845, %v2841
  %v2847 = vmul.f32 1.0, %v2846
  %v2848 = vmul.f32 %v2827, %v2389
  %v2849 = vmul.f32 %v2808, %v2828
  %v2850 = vadd.f32 %v2848, %v2849
  %v2851 = vtanh.pop %v2850
  %v2852 = vmul.f32 %v2847, %v2851
  %v2853 = vpack.c.bf16 %v2852, %v2852
  %v2854 = vld [vmem:[%s6] sm:$0xf]
  %v2855 = vld [vmem:[%s6 + $0x4] sm:$0xf]
  %v2856 = vld [vmem:[%s6 + $0x8] sm:$0xf]
  %v2857 = vld [vmem:[%s6 + $0xc] sm:$0xf]
  %v2858 = vld [vmem:[%s6 + $0x10] sm:$0xf]
  %v2859 = vld [vmem:[%s6 + $0x14] sm:$0xf]
  %v2860 = vld [vmem:[%s6 + $0x18] sm:$0xf]
  %v2861 = vld [vmem:[%s6 + $0x1c] sm:$0xf]
  %v2862 = vld [vmem:[%s6 + $0x20] sm:$0xf]
  %v2863 = vld [vmem:[%s6 + $0x24] sm:$0xf]
  %v2864 = vld [vmem:[%s6 + $0x28] sm:$0xf]
  %v2865 = vld [vmem:[%s6 + $0x2c] sm:$0xf]
  %v2866 = vld [vmem:[%s6 + $0x30] sm:$0xf]
  %v2867 = vld [vmem:[%s6 + $0x34] sm:$0xf]
  %v2868 = vld [vmem:[%s6 + $0x38] sm:$0xf]
  %v2869 = vld [vmem:[%s6 + $0x3c] sm:$0xf]
  %v2870 = vld [vmem:[%s7] sm:$0x1]
  %v2872 = vperm.slane %v2870, 0
  %v2890 = vunpack.c.l.b16 %v2854
  %v2891 = vunpack.c.l.b16 %v2855
  %v2892 = vunpack.c.l.b16 %v2856
  %v2893 = vunpack.c.l.b16 %v2857
  %v2894 = vunpack.c.l.b16 %v2858
  %v2895 = vunpack.c.l.b16 %v2859
  %v2896 = vunpack.c.l.b16 %v2860
  %v2897 = vunpack.c.l.b16 %v2861
  %v2898 = vunpack.c.l.b16 %v2862
  %v2899 = vunpack.c.l.b16 %v2863
  %v2900 = vunpack.c.l.b16 %v2864
  %v2901 = vunpack.c.l.b16 %v2865
  %v2902 = vunpack.c.l.b16 %v2866
  %v2903 = vunpack.c.l.b16 %v2867
  %v2904 = vunpack.c.l.b16 %v2868
  %v2905 = vunpack.c.l.b16 %v2869
  %v2906 = vpack.c.b16 %v2891, %v2890
  %v2907 = vpack.c.b16 %v2893, %v2892
  %v2908 = vpack.c.b16 %v2895, %v2894
  %v2909 = vpack.c.b16 %v2897, %v2896
  %v2910 = vpack.c.b16 %v2899, %v2898
  %v2911 = vpack.c.b16 %v2901, %v2900
  %v2912 = vpack.c.b16 %v2903, %v2902
  %v2913 = vpack.c.b16 %v2905, %v2904
  %2922 = vmatpush.bf16.msra.mxu0 %v2913
  %2923 = vmatpush.bf16.msra.mxu0 %v2912
  %2924 = vmatpush.bf16.msra.mxu0 %v2911
  %2925 = vmatpush.bf16.msra.mxu0 %v2910
  %2926 = vmatpush.bf16.msra.mxu0 %v2909
  %2927 = vmatpush.bf16.msra.mxu0 %v2908
  %2928 = vmatpush.bf16.msra.mxu0 %v2907
  %2929 = vmatpush.bf16.msra.mxu0 %v2906
  %2930 = vmatmul.bf16.gmra.mxu0 %v2853
  %v2931 = vpop.f32.mrf.mxu0
  %v2932 = vadd.f32 %v2872, %v2931
  %v2933 = vpop.f32.mrf.mxu0
  %2934 = vdwg.mxu0
  %2935 = vst [vmem:[%s8] sm:$0xff] %v2932
  // Predicated region
  $region34: #{vinet_forward.1} parent=0 // pred_check
    _
  $region35: #{vinet_forward.1} parent=0 // pred_check_branch
    %2937 = sbr.rel (0) target = $region37
  $region36: #{vinet_forward.1} parent=0 // pred_region
    _
  $region37: #{vinet_forward.1} parent=0 // pred_fallthru
    _
  // Predicated region
  $region38: #{vinet_forward.1} parent=0 // pred_check
    _
  $region39: #{vinet_forward.1} parent=0 // pred_check_branch
    %2939 = sbr.rel (0) target = $region41
  $region40: #{vinet_forward.1} parent=0 // pred_region
    _
  $region41: #{vinet_forward.1} parent=0 // pred_fallthru
    _

</llo_original>
